<compile_context>
chip_gen: v7x
topology: tpu7x:2x2x1
jax: 0.10.0
libtpu: 0.0.40
codegen_flags: <defaults>
</compile_context>

<pallas_src>
import functools

import jax
import jax.numpy as jnp
from jax.experimental import pallas as pl
from jax.experimental.pallas import tpu as pltpu


_ERF_A = (0.254829592, -0.284496736, 1.421413741, -1.453152027, 1.061405429)
_ERF_P = 0.3275911


def _erf(x, recip):
    # Abramowitz & Stegun 7.1.26 (|err| < 1.5e-7); matches PyTorch's exact-erf
    # GELU to float32 noise using only ops guaranteed to lower in Mosaic.
    a1, a2, a3, a4, a5 = _ERF_A
    s = jnp.where(x >= 0.0, 1.0, -1.0)
    ax = jnp.abs(x)
    t = recip(1.0 + _ERF_P * ax)
    poly = ((((a5 * t + a4) * t + a3) * t + a2) * t + a1) * t
    return s * (1.0 - poly * jnp.exp(-ax * ax))


def _gelu(x, recip=lambda v: 1.0 / v):
    return 0.5 * x * (1.0 + _erf(x * 0.7071067811865476, recip))


def _layer_norm_per_sample(y, gamma, beta, eps=1e-5):
    # nn.LayerNorm((C, H, W)) on NCHW: normalize over the whole per-sample slab.
    # y: (Bt, P, C); gamma/beta: (P, C) with gamma[p, c] = w[c, h, w].
    mu = jnp.mean(jnp.mean(y, axis=2, keepdims=True), axis=1, keepdims=True)
    d = y - mu
    var = jnp.mean(jnp.mean(d * d, axis=2, keepdims=True), axis=1, keepdims=True)
    return d * jax.lax.rsqrt(var + eps) * gamma + beta


def _dense(x, w, b):
    # 1x1 conv == channel contraction.  x: (Bt, P, K), w: (K, N), b: (1, N).
    # Tiny K: VPU broadcast-MAC (avoids <4%-utilized MXU push/pop latency).
    K, Nc = w.shape
    if K <= 32:
        acc = jnp.zeros(x.shape[:-1] + (Nc,), jnp.float32)
        for c in range(K):
            acc = acc + x[..., c:c + 1] * w[c:c + 1, :]
        return acc + b
    bt, p, _ = x.shape
    y = jnp.dot(x.reshape(bt * p, K), w, preferred_element_type=jnp.float32)
    return y.reshape(bt, p, Nc) + b


def mlp_dwbn_kernel(x_ref, w1_ref, w2_ref, bias_h_ref, b2_ref, dwk_ref,
                    mask_ref, aff_h_ref, aff_o_ref, out_ref, *, W):
    recip = lambda v: pl.reciprocal(v, approx=False)
    gelu = lambda v: _gelu(v, recip)

    bt, P, _ = x_ref.shape
    hid = w1_ref.shape[1]
    M = bt * P

    x = x_ref[...]                                            # (Bt, P, Cin)

    # ---- fc1 (1x1 conv) -> LayerNorm -> GELU --------------------------------
    y = _dense(x, w1_ref[...], bias_h_ref[0])                 # (Bt, P, hid)
    y = gelu(_layer_norm_per_sample(y, aff_h_ref[0], aff_h_ref[1]))

    # ---- depthwise 3x3, padding=1: 9 rolled taps on the flat slab -----------
    # Rolling the flat (Bt*P, hid) slab is safe: every row that would pick up a
    # wrapped or cross-sample neighbor is zeroed by the precomputed mask.
    y_flat = y.reshape(M, hid)                                # free: P % 8 == 0
    acc = jnp.zeros((bt, P, hid), jnp.float32)
    t = 0
    for di in (-1, 0, 1):
        for dj in (-1, 0, 1):
            s = di * W + dj
            rolled = pltpu.roll(y_flat, (-s) % M, axis=0) if s != 0 else y_flat
            acc = acc + rolled.reshape(bt, P, hid) * mask_ref[t] * dwk_ref[t]
            t += 1
    z = acc + bias_h_ref[1]
    z = gelu(_layer_norm_per_sample(z, aff_h_ref[2], aff_h_ref[3]))
    # Dropout(p=0.0) -> identity.

    # ---- fc2 (1x1 conv) -> LayerNorm -> GELU --------------------------------
    o = _dense(z, w2_ref[...], b2_ref[...])                   # (Bt, P, Cout)
    o = gelu(_layer_norm_per_sample(o, aff_o_ref[0], aff_o_ref[1]))
    # Dropout(p=0.0) -> identity.

    out_ref[...] = o.astype(out_ref.dtype)


def _pick_bt(B, P, cmax, budget_bytes=24 << 20):
    # ~10 live f32 slabs of (P, Cmax) per sample; keep well under the 32 MiB
    # scoped-VMEM request below (halved physical VMEM on v7x).
    per_sample = 4 * P * 10 * max(cmax, 1)
    bt = max(1, budget_bytes // per_sample)
    if B > 1:
        bt = min(bt, (B + 1) // 2)        # keep >= 2 grid steps (v7x: 2 TCs)
    return int(min(bt, B))


def mlp_dwbn_forward(x, params, bt=None):
    """x: (N, T, H, W, Cin) -> (N, T, H, W, Cout). Params in PyTorch shapes."""
    N, T, H, W, Cin = x.shape
    P = H * W
    hid = params["fc1_w"].shape[0]
    Cout = params["fc2_w"].shape[0]
    B = N * T
    f32 = jnp.float32

    if bt is None:
        bt = _pick_bt(B, P, max(Cin, hid, Cout))
    steps = -(-B // bt)
    Bpad = steps * bt

    xb = x.reshape(B, P, Cin).astype(f32)
    if Bpad != B:
        xb = jnp.concatenate([xb, jnp.zeros((Bpad - B, P, Cin), f32)], axis=0)

    # ---- parameters, converted to kernel (channel-last, fused) layout -------
    w1 = params["fc1_w"][:, :, 0, 0].T.astype(f32)                         # (Cin, hid)
    w2 = params["fc2_w"][:, :, 0, 0].T.astype(f32)                         # (hid, Cout)
    bias_h = jnp.stack([params["fc1_b"], params["dw_b"]]).astype(f32)[:, None, :]  # (2,1,hid)
    b2 = params["fc2_b"].astype(f32)[None, :]                              # (1, Cout)
    dwk = params["dw_w"][:, 0].transpose(1, 2, 0).reshape(9, 1, hid).astype(f32)   # (9,1,hid)
    aff_h = jnp.stack([params["ln1_w"], params["ln1_b"],
                       params["ln2_w"], params["ln2_b"]])
    aff_h = aff_h.transpose(0, 2, 3, 1).reshape(4, P, hid).astype(f32)     # (4,P,hid)
    aff_o = jnp.stack([params["ln3_w"], params["ln3_b"]])
    aff_o = aff_o.transpose(0, 2, 3, 1).reshape(2, P, Cout).astype(f32)    # (2,P,Cout)

    # 3x3 boundary masks (one per tap), hoisted out of the kernel.
    hh = jnp.arange(P, dtype=jnp.int32) // W
    ww = jnp.arange(P, dtype=jnp.int32) % W
    mrows = []
    for di in (-1, 0, 1):
        for dj in (-1, 0, 1):
            mrows.append(((hh + di >= 0) & (hh + di < H) &
                          (ww + dj >= 0) & (ww + dj < W)).astype(f32))
    mask = jnp.stack(mrows).reshape(9, P, 1)                               # (9,P,1)

    kern = functools.partial(mlp_dwbn_kernel, W=W)
    c2 = lambda b: (0, 0)
    c3 = lambda b: (0, 0, 0)

    out = pl.pallas_call(
        kern,
        out_shape=jax.ShapeDtypeStruct((Bpad, P, Cout), f32),
        grid=(steps,),
        in_specs=[
            pl.BlockSpec((bt, P, Cin), lambda b: (b, 0, 0)),
            pl.BlockSpec((Cin, hid), c2),
            pl.BlockSpec((hid, Cout), c2),
            pl.BlockSpec((2, 1, hid), c3),
            pl.BlockSpec((1, Cout), c2),
            pl.BlockSpec((9, 1, hid), c3),
            pl.BlockSpec((9, P, 1), c3),
            pl.BlockSpec((4, P, hid), c3),
            pl.BlockSpec((2, P, Cout), c3),
        ],
        out_specs=pl.BlockSpec((bt, P, Cout), lambda b: (b, 0, 0)),
        compiler_params=pltpu.CompilerParams(
            dimension_semantics=("parallel",),
            vmem_limit_bytes=32 * 1024 * 1024),
    )(xb, w1, w2, bias_h, b2, dwk, mask, aff_h, aff_o)

    return out[:B].reshape(N, T, H, W, Cout)


def mlp_dwbn_reference(x, params):
    """Pure-JAX reference mirroring the PyTorch forward (NHWC internally)."""
    N, T, H, W, Cin = x.shape
    hid = params["fc1_w"].shape[0]
    Cout = params["fc2_w"].shape[0]
    xb = x.reshape(N * T, H, W, Cin)
    hp = jax.lax.Precision.HIGHEST

    def ln(y, w_chw, b_chw, eps=1e-5):
        mu = y.mean(axis=(1, 2, 3), keepdims=True)
        var = jnp.square(y - mu).mean(axis=(1, 2, 3), keepdims=True)
        return ((y - mu) / jnp.sqrt(var + eps)) * w_chw.transpose(1, 2, 0) + b_chw.transpose(1, 2, 0)

    y = jnp.einsum("bhwc,oc->bhwo", xb, params["fc1_w"][:, :, 0, 0], precision=hp) + params["fc1_b"]
    y = _gelu(ln(y, params["ln1_w"], params["ln1_b"]))

    dwk = params["dw_w"].transpose(2, 3, 1, 0)                       # (3, 3, 1, hid)
    z = jax.lax.conv_general_dilated(
        y, dwk, window_strides=(1, 1), padding=((1, 1), (1, 1)),
        dimension_numbers=("NHWC", "HWIO", "NHWC"),
        feature_group_count=hid, precision=hp) + params["dw_b"]
    z = _gelu(ln(z, params["ln2_w"], params["ln2_b"]))

    o = jnp.einsum("bhwc,oc->bhwo", z, params["fc2_w"][:, :, 0, 0], precision=hp) + params["fc2_b"]
    o = _gelu(ln(o, params["ln3_w"], params["ln3_b"]))
    return o.reshape(N, T, H, W, Cout)


if __name__ == "__main__":
    # Small shapes consistent with the module: x is (N, T, H, W, C).
    N, T, H, W = 2, 2, 8, 8
    Cin, hid, Cout = 4, 8, 4

    key = jax.random.PRNGKey(0)
    ks = jax.random.split(key, 13)
    params = {
        "fc1_w": 0.2 * jax.random.normal(ks[0], (hid, Cin, 1, 1), jnp.float32),
        "fc1_b": 0.1 * jax.random.normal(ks[1], (hid,), jnp.float32),
        "ln1_w": 1.0 + 0.1 * jax.random.normal(ks[2], (hid, H, W), jnp.float32),
        "ln1_b": 0.1 * jax.random.normal(ks[3], (hid, H, W), jnp.float32),
        "dw_w": 0.2 * jax.random.normal(ks[4], (hid, 1, 3, 3), jnp.float32),
        "dw_b": 0.1 * jax.random.normal(ks[5], (hid,), jnp.float32),
        "ln2_w": 1.0 + 0.1 * jax.random.normal(ks[6], (hid, H, W), jnp.float32),
        "ln2_b": 0.1 * jax.random.normal(ks[7], (hid, H, W), jnp.float32),
        "fc2_w": 0.2 * jax.random.normal(ks[8], (Cout, hid, 1, 1), jnp.float32),
        "fc2_b": 0.1 * jax.random.normal(ks[9], (Cout,), jnp.float32),
        "ln3_w": 1.0 + 0.1 * jax.random.normal(ks[10], (Cout, H, W), jnp.float32),
        "ln3_b": 0.1 * jax.random.normal(ks[11], (Cout, H, W), jnp.float32),
    }
    x = jax.random.normal(ks[12], (N, T, H, W, Cin), jnp.float32)

    out = mlp_dwbn_forward(x, params)
    out = jax.block_until_ready(out)

    ref = mlp_dwbn_reference(x, params)
    err = float(jnp.max(jnp.abs(out - ref)))
    assert out.shape == (N, T, H, W, Cout), out.shape
    assert err < 5e-3, f"max abs err vs reference: {err}"
    print("KERNEL_OK")
</pallas_src>

<mosaic_0001>
module attributes {stable_mosaic.version = 11 : i64} {
  func.func @mlp_dwbn_kernel(%arg0: i32, %arg1: memref<2x64x4xf32, #tpu.memory_space<vmem>>, %arg2: memref<4x8xf32, #tpu.memory_space<vmem>>, %arg3: memref<8x4xf32, #tpu.memory_space<vmem>>, %arg4: memref<2x1x8xf32, #tpu.memory_space<vmem>>, %arg5: memref<1x4xf32, #tpu.memory_space<vmem>>, %arg6: memref<9x1x8xf32, #tpu.memory_space<vmem>>, %arg7: memref<9x64x1xf32, #tpu.memory_space<vmem>>, %arg8: memref<4x64x8xf32, #tpu.memory_space<vmem>>, %arg9: memref<2x64x4xf32, #tpu.memory_space<vmem>>, %arg10: memref<2x64x4xf32, #tpu.memory_space<vmem>>) attributes {dimension_semantics = [#tpu.dimension_semantics<parallel>], iteration_bounds = array<i64: 2>, scalar_prefetch = 0 : i64, scratch_operands = 0 : i64, tpu.core_type = #tpu.core_type<tc>, window_params = [{transform_indices = @transform_0, window_bounds = array<i64: 2, 64, 4>}, {pipeline_mode = #tpu.pipeline_mode<synchronous>, transform_indices = @transform_1, window_bounds = array<i64: 4, 8>}, {pipeline_mode = #tpu.pipeline_mode<synchronous>, transform_indices = @transform_2, window_bounds = array<i64: 8, 4>}, {pipeline_mode = #tpu.pipeline_mode<synchronous>, transform_indices = @transform_3, window_bounds = array<i64: 2, 1, 8>}, {pipeline_mode = #tpu.pipeline_mode<synchronous>, transform_indices = @transform_4, window_bounds = array<i64: 1, 4>}, {pipeline_mode = #tpu.pipeline_mode<synchronous>, transform_indices = @transform_5, window_bounds = array<i64: 9, 1, 8>}, {pipeline_mode = #tpu.pipeline_mode<synchronous>, transform_indices = @transform_6, window_bounds = array<i64: 9, 64, 1>}, {pipeline_mode = #tpu.pipeline_mode<synchronous>, transform_indices = @transform_7, window_bounds = array<i64: 4, 64, 8>}, {pipeline_mode = #tpu.pipeline_mode<synchronous>, transform_indices = @transform_8, window_bounds = array<i64: 2, 64, 4>}, {transform_indices = @transform_9, window_bounds = array<i64: 2, 64, 4>}]} {
    %c0 = arith.constant 0 : index
    %c0_0 = arith.constant 0 : index
    %c0_1 = arith.constant 0 : index
    %0 = vector.load %arg1[%c0, %c0_0, %c0_1] : memref<2x64x4xf32, #tpu.memory_space<vmem>>, vector<2x64x4xf32>
    %c0_2 = arith.constant 0 : index
    %c0_3 = arith.constant 0 : index
    %1 = vector.load %arg2[%c0_2, %c0_3] : memref<4x8xf32, #tpu.memory_space<vmem>>, vector<4x8xf32>
    %c0_4 = arith.constant 0 : index
    %c0_5 = arith.constant 0 : index
    %c0_6 = arith.constant 0 : index
    %2 = vector.load %arg4[%c0_4, %c0_5, %c0_6] : memref<2x1x8xf32, #tpu.memory_space<vmem>>, vector<1x1x8xf32>
    %3 = vector.shape_cast %2 : vector<1x1x8xf32> to vector<1x8xf32>
    %cst = arith.constant 0.000000e+00 : f32
    %4 = vector.broadcast %cst : f32 to vector<2x64x8xf32>
    %5 = vector.extract_strided_slice %0 {offsets = [0, 0, 0], sizes = [2, 64, 1], strides = [1, 1, 1]} : vector<2x64x4xf32> to vector<2x64x1xf32>
    %6 = vector.extract_strided_slice %1 {offsets = [0, 0], sizes = [1, 8], strides = [1, 1]} : vector<4x8xf32> to vector<1x8xf32>
    %7 = vector.shape_cast %6 : vector<1x8xf32> to vector<1x1x8xf32>
    %8 = vector.broadcast %5 : vector<2x64x1xf32> to vector<2x64x8xf32>
    %9 = vector.broadcast %7 : vector<1x1x8xf32> to vector<2x64x8xf32>
    %10 = arith.mulf %8, %9 : vector<2x64x8xf32>
    %11 = arith.addf %4, %10 : vector<2x64x8xf32>
    %12 = vector.extract_strided_slice %0 {offsets = [0, 0, 1], sizes = [2, 64, 1], strides = [1, 1, 1]} : vector<2x64x4xf32> to vector<2x64x1xf32>
    %13 = vector.extract_strided_slice %1 {offsets = [1, 0], sizes = [1, 8], strides = [1, 1]} : vector<4x8xf32> to vector<1x8xf32>
    %14 = vector.shape_cast %13 : vector<1x8xf32> to vector<1x1x8xf32>
    %15 = vector.broadcast %12 : vector<2x64x1xf32> to vector<2x64x8xf32>
    %16 = vector.broadcast %14 : vector<1x1x8xf32> to vector<2x64x8xf32>
    %17 = arith.mulf %15, %16 : vector<2x64x8xf32>
    %18 = arith.addf %11, %17 : vector<2x64x8xf32>
    %19 = vector.extract_strided_slice %0 {offsets = [0, 0, 2], sizes = [2, 64, 1], strides = [1, 1, 1]} : vector<2x64x4xf32> to vector<2x64x1xf32>
    %20 = vector.extract_strided_slice %1 {offsets = [2, 0], sizes = [1, 8], strides = [1, 1]} : vector<4x8xf32> to vector<1x8xf32>
    %21 = vector.shape_cast %20 : vector<1x8xf32> to vector<1x1x8xf32>
    %22 = vector.broadcast %19 : vector<2x64x1xf32> to vector<2x64x8xf32>
    %23 = vector.broadcast %21 : vector<1x1x8xf32> to vector<2x64x8xf32>
    %24 = arith.mulf %22, %23 : vector<2x64x8xf32>
    %25 = arith.addf %18, %24 : vector<2x64x8xf32>
    %26 = vector.extract_strided_slice %0 {offsets = [0, 0, 3], sizes = [2, 64, 1], strides = [1, 1, 1]} : vector<2x64x4xf32> to vector<2x64x1xf32>
    %27 = vector.extract_strided_slice %1 {offsets = [3, 0], sizes = [1, 8], strides = [1, 1]} : vector<4x8xf32> to vector<1x8xf32>
    %28 = vector.shape_cast %27 : vector<1x8xf32> to vector<1x1x8xf32>
    %29 = vector.broadcast %26 : vector<2x64x1xf32> to vector<2x64x8xf32>
    %30 = vector.broadcast %28 : vector<1x1x8xf32> to vector<2x64x8xf32>
    %31 = arith.mulf %29, %30 : vector<2x64x8xf32>
    %32 = arith.addf %25, %31 : vector<2x64x8xf32>
    %33 = vector.shape_cast %3 : vector<1x8xf32> to vector<1x1x8xf32>
    %34 = vector.broadcast %33 : vector<1x1x8xf32> to vector<2x64x8xf32>
    %35 = arith.addf %32, %34 : vector<2x64x8xf32>
    %c0_7 = arith.constant 0 : index
    %c0_8 = arith.constant 0 : index
    %c0_9 = arith.constant 0 : index
    %36 = vector.load %arg8[%c0_7, %c0_8, %c0_9] : memref<4x64x8xf32, #tpu.memory_space<vmem>>, vector<1x64x8xf32>
    %37 = vector.shape_cast %36 : vector<1x64x8xf32> to vector<64x8xf32>
    %c1 = arith.constant 1 : index
    %c0_10 = arith.constant 0 : index
    %c0_11 = arith.constant 0 : index
    %38 = vector.load %arg8[%c1, %c0_10, %c0_11] : memref<4x64x8xf32, #tpu.memory_space<vmem>>, vector<1x64x8xf32>
    %39 = vector.shape_cast %38 : vector<1x64x8xf32> to vector<64x8xf32>
    %cst_12 = arith.constant dense<0.000000e+00> : vector<2x64xf32>
    %40 = vector.multi_reduction <add>, %35, %cst_12 [2] : vector<2x64x8xf32> to vector<2x64xf32>
    %41 = vector.shape_cast %40 : vector<2x64xf32> to vector<2x64x1xf32>
    %cst_13 = arith.constant 8.000000e+00 : f32
    %42 = vector.broadcast %cst_13 : f32 to vector<2x64x1xf32>
    %43 = arith.divf %41, %42 : vector<2x64x1xf32>
    %cst_14 = arith.constant dense<0.000000e+00> : vector<2x1xf32>
    %44 = vector.multi_reduction <add>, %43, %cst_14 [1] : vector<2x64x1xf32> to vector<2x1xf32>
    %45 = vector.shape_cast %44 : vector<2x1xf32> to vector<2x1x1xf32>
    %cst_15 = arith.constant 6.400000e+01 : f32
    %46 = vector.broadcast %cst_15 : f32 to vector<2x1x1xf32>
    %47 = arith.divf %45, %46 : vector<2x1x1xf32>
    %48 = vector.broadcast %47 : vector<2x1x1xf32> to vector<2x64x8xf32>
    %49 = arith.subf %35, %48 : vector<2x64x8xf32>
    %50 = arith.mulf %49, %49 : vector<2x64x8xf32>
    %cst_16 = arith.constant dense<0.000000e+00> : vector<2x64xf32>
    %51 = vector.multi_reduction <add>, %50, %cst_16 [2] : vector<2x64x8xf32> to vector<2x64xf32>
    %52 = vector.shape_cast %51 : vector<2x64xf32> to vector<2x64x1xf32>
    %cst_17 = arith.constant 8.000000e+00 : f32
    %53 = vector.broadcast %cst_17 : f32 to vector<2x64x1xf32>
    %54 = arith.divf %52, %53 : vector<2x64x1xf32>
    %cst_18 = arith.constant dense<0.000000e+00> : vector<2x1xf32>
    %55 = vector.multi_reduction <add>, %54, %cst_18 [1] : vector<2x64x1xf32> to vector<2x1xf32>
    %56 = vector.shape_cast %55 : vector<2x1xf32> to vector<2x1x1xf32>
    %cst_19 = arith.constant 6.400000e+01 : f32
    %57 = vector.broadcast %cst_19 : f32 to vector<2x1x1xf32>
    %58 = arith.divf %56, %57 : vector<2x1x1xf32>
    %cst_20 = arith.constant 9.99999974E-6 : f32
    %59 = vector.broadcast %cst_20 : f32 to vector<2x1x1xf32>
    %60 = arith.addf %58, %59 : vector<2x1x1xf32>
    %61 = math.rsqrt %60 : vector<2x1x1xf32>
    %62 = vector.broadcast %61 : vector<2x1x1xf32> to vector<2x64x8xf32>
    %63 = arith.mulf %49, %62 : vector<2x64x8xf32>
    %64 = vector.shape_cast %37 : vector<64x8xf32> to vector<1x64x8xf32>
    %65 = vector.broadcast %64 : vector<1x64x8xf32> to vector<2x64x8xf32>
    %66 = arith.mulf %63, %65 : vector<2x64x8xf32>
    %67 = vector.shape_cast %39 : vector<64x8xf32> to vector<1x64x8xf32>
    %68 = vector.broadcast %67 : vector<1x64x8xf32> to vector<2x64x8xf32>
    %69 = arith.addf %66, %68 : vector<2x64x8xf32>
    %cst_21 = arith.constant 5.000000e-01 : f32
    %70 = vector.broadcast %cst_21 : f32 to vector<2x64x8xf32>
    %71 = arith.mulf %70, %69 : vector<2x64x8xf32>
    %cst_22 = arith.constant 0.707106769 : f32
    %72 = vector.broadcast %cst_22 : f32 to vector<2x64x8xf32>
    %73 = arith.mulf %69, %72 : vector<2x64x8xf32>
    %cst_23 = arith.constant 0.000000e+00 : f32
    %74 = vector.broadcast %cst_23 : f32 to vector<2x64x8xf32>
    %75 = arith.cmpf oge, %73, %74 : vector<2x64x8xf32>
    %cst_24 = arith.constant 1.000000e+00 : f32
    %cst_25 = arith.constant -1.000000e+00 : f32
    %76 = vector.broadcast %cst_24 : f32 to vector<2x64x8xf32>
    %77 = vector.broadcast %cst_25 : f32 to vector<2x64x8xf32>
    %78 = arith.select %75, %76, %77 : vector<2x64x8xi1>, vector<2x64x8xf32>
    %79 = math.absf %73 : vector<2x64x8xf32>
    %cst_26 = arith.constant 0.327591091 : f32
    %80 = vector.broadcast %cst_26 : f32 to vector<2x64x8xf32>
    %81 = arith.mulf %80, %79 : vector<2x64x8xf32>
    %cst_27 = arith.constant 1.000000e+00 : f32
    %82 = vector.broadcast %cst_27 : f32 to vector<2x64x8xf32>
    %83 = arith.addf %82, %81 : vector<2x64x8xf32>
    %84 = tpu.reciprocal %83 : vector<2x64x8xf32> -> vector<2x64x8xf32>
    %cst_28 = arith.constant 1.06140542 : f32
    %85 = vector.broadcast %cst_28 : f32 to vector<2x64x8xf32>
    %86 = arith.mulf %85, %84 : vector<2x64x8xf32>
    %cst_29 = arith.constant -1.45315206 : f32
    %87 = vector.broadcast %cst_29 : f32 to vector<2x64x8xf32>
    %88 = arith.addf %86, %87 : vector<2x64x8xf32>
    %89 = arith.mulf %88, %84 : vector<2x64x8xf32>
    %cst_30 = arith.constant 1.42141378 : f32
    %90 = vector.broadcast %cst_30 : f32 to vector<2x64x8xf32>
    %91 = arith.addf %89, %90 : vector<2x64x8xf32>
    %92 = arith.mulf %91, %84 : vector<2x64x8xf32>
    %cst_31 = arith.constant -0.284496725 : f32
    %93 = vector.broadcast %cst_31 : f32 to vector<2x64x8xf32>
    %94 = arith.addf %92, %93 : vector<2x64x8xf32>
    %95 = arith.mulf %94, %84 : vector<2x64x8xf32>
    %cst_32 = arith.constant 0.254829586 : f32
    %96 = vector.broadcast %cst_32 : f32 to vector<2x64x8xf32>
    %97 = arith.addf %95, %96 : vector<2x64x8xf32>
    %98 = arith.mulf %97, %84 : vector<2x64x8xf32>
    %cst_33 = arith.constant 0.000000e+00 : f32
    %99 = vector.broadcast %cst_33 : f32 to vector<2x64x8xf32>
    %100 = arith.subf %99, %79 : vector<2x64x8xf32>
    %101 = arith.mulf %100, %79 : vector<2x64x8xf32>
    %102 = math.exp %101 : vector<2x64x8xf32>
    %103 = arith.mulf %98, %102 : vector<2x64x8xf32>
    %cst_34 = arith.constant 1.000000e+00 : f32
    %104 = vector.broadcast %cst_34 : f32 to vector<2x64x8xf32>
    %105 = arith.subf %104, %103 : vector<2x64x8xf32>
    %106 = arith.mulf %78, %105 : vector<2x64x8xf32>
    %cst_35 = arith.constant 1.000000e+00 : f32
    %107 = vector.broadcast %cst_35 : f32 to vector<2x64x8xf32>
    %108 = arith.addf %107, %106 : vector<2x64x8xf32>
    %109 = arith.mulf %71, %108 : vector<2x64x8xf32>
    %110 = vector.shape_cast %109 : vector<2x64x8xf32> to vector<128x8xf32>
    %cst_36 = arith.constant 0.000000e+00 : f32
    %111 = vector.broadcast %cst_36 : f32 to vector<2x64x8xf32>
    %c9_i32 = arith.constant 9 : i32
    %112 = tpu.dynamic_rotate %110 by %c9_i32 dim 0 : vector<128x8xf32>, i32 -> vector<128x8xf32>
    %113 = vector.shape_cast %112 : vector<128x8xf32> to vector<2x64x8xf32>
    %c0_37 = arith.constant 0 : index
    %c0_38 = arith.constant 0 : index
    %c0_39 = arith.constant 0 : index
    %114 = vector.load %arg7[%c0_37, %c0_38, %c0_39] : memref<9x64x1xf32, #tpu.memory_space<vmem>>, vector<1x64x1xf32>
    %115 = vector.shape_cast %114 : vector<1x64x1xf32> to vector<64x1xf32>
    %116 = vector.shape_cast %115 : vector<64x1xf32> to vector<1x64x1xf32>
    %117 = vector.broadcast %116 : vector<1x64x1xf32> to vector<2x64x8xf32>
    %118 = arith.mulf %113, %117 : vector<2x64x8xf32>
    %c0_40 = arith.constant 0 : index
    %c0_41 = arith.constant 0 : index
    %c0_42 = arith.constant 0 : index
    %119 = vector.load %arg6[%c0_40, %c0_41, %c0_42] : memref<9x1x8xf32, #tpu.memory_space<vmem>>, vector<1x1x8xf32>
    %120 = vector.shape_cast %119 : vector<1x1x8xf32> to vector<1x8xf32>
    %121 = vector.shape_cast %120 : vector<1x8xf32> to vector<1x1x8xf32>
    %122 = vector.broadcast %121 : vector<1x1x8xf32> to vector<2x64x8xf32>
    %123 = arith.mulf %118, %122 : vector<2x64x8xf32>
    %124 = arith.addf %111, %123 : vector<2x64x8xf32>
    %c8_i32 = arith.constant 8 : i32
    %125 = tpu.dynamic_rotate %110 by %c8_i32 dim 0 : vector<128x8xf32>, i32 -> vector<128x8xf32>
    %126 = vector.shape_cast %125 : vector<128x8xf32> to vector<2x64x8xf32>
    %c1_43 = arith.constant 1 : index
    %c0_44 = arith.constant 0 : index
    %c0_45 = arith.constant 0 : index
    %127 = vector.load %arg7[%c1_43, %c0_44, %c0_45] : memref<9x64x1xf32, #tpu.memory_space<vmem>>, vector<1x64x1xf32>
    %128 = vector.shape_cast %127 : vector<1x64x1xf32> to vector<64x1xf32>
    %129 = vector.shape_cast %128 : vector<64x1xf32> to vector<1x64x1xf32>
    %130 = vector.broadcast %129 : vector<1x64x1xf32> to vector<2x64x8xf32>
    %131 = arith.mulf %126, %130 : vector<2x64x8xf32>
    %c1_46 = arith.constant 1 : index
    %c0_47 = arith.constant 0 : index
    %c0_48 = arith.constant 0 : index
    %132 = vector.load %arg6[%c1_46, %c0_47, %c0_48] : memref<9x1x8xf32, #tpu.memory_space<vmem>>, vector<1x1x8xf32>
    %133 = vector.shape_cast %132 : vector<1x1x8xf32> to vector<1x8xf32>
    %134 = vector.shape_cast %133 : vector<1x8xf32> to vector<1x1x8xf32>
    %135 = vector.broadcast %134 : vector<1x1x8xf32> to vector<2x64x8xf32>
    %136 = arith.mulf %131, %135 : vector<2x64x8xf32>
    %137 = arith.addf %124, %136 : vector<2x64x8xf32>
    %c7_i32 = arith.constant 7 : i32
    %138 = tpu.dynamic_rotate %110 by %c7_i32 dim 0 : vector<128x8xf32>, i32 -> vector<128x8xf32>
    %139 = vector.shape_cast %138 : vector<128x8xf32> to vector<2x64x8xf32>
    %c2 = arith.constant 2 : index
    %c0_49 = arith.constant 0 : index
    %c0_50 = arith.constant 0 : index
    %140 = vector.load %arg7[%c2, %c0_49, %c0_50] : memref<9x64x1xf32, #tpu.memory_space<vmem>>, vector<1x64x1xf32>
    %141 = vector.shape_cast %140 : vector<1x64x1xf32> to vector<64x1xf32>
    %142 = vector.shape_cast %141 : vector<64x1xf32> to vector<1x64x1xf32>
    %143 = vector.broadcast %142 : vector<1x64x1xf32> to vector<2x64x8xf32>
    %144 = arith.mulf %139, %143 : vector<2x64x8xf32>
    %c2_51 = arith.constant 2 : index
    %c0_52 = arith.constant 0 : index
    %c0_53 = arith.constant 0 : index
    %145 = vector.load %arg6[%c2_51, %c0_52, %c0_53] : memref<9x1x8xf32, #tpu.memory_space<vmem>>, vector<1x1x8xf32>
    %146 = vector.shape_cast %145 : vector<1x1x8xf32> to vector<1x8xf32>
    %147 = vector.shape_cast %146 : vector<1x8xf32> to vector<1x1x8xf32>
    %148 = vector.broadcast %147 : vector<1x1x8xf32> to vector<2x64x8xf32>
    %149 = arith.mulf %144, %148 : vector<2x64x8xf32>
    %150 = arith.addf %137, %149 : vector<2x64x8xf32>
    %c1_i32 = arith.constant 1 : i32
    %151 = tpu.dynamic_rotate %110 by %c1_i32 dim 0 : vector<128x8xf32>, i32 -> vector<128x8xf32>
    %152 = vector.shape_cast %151 : vector<128x8xf32> to vector<2x64x8xf32>
    %c3 = arith.constant 3 : index
    %c0_54 = arith.constant 0 : index
    %c0_55 = arith.constant 0 : index
    %153 = vector.load %arg7[%c3, %c0_54, %c0_55] : memref<9x64x1xf32, #tpu.memory_space<vmem>>, vector<1x64x1xf32>
    %154 = vector.shape_cast %153 : vector<1x64x1xf32> to vector<64x1xf32>
    %155 = vector.shape_cast %154 : vector<64x1xf32> to vector<1x64x1xf32>
    %156 = vector.broadcast %155 : vector<1x64x1xf32> to vector<2x64x8xf32>
    %157 = arith.mulf %152, %156 : vector<2x64x8xf32>
    %c3_56 = arith.constant 3 : index
    %c0_57 = arith.constant 0 : index
    %c0_58 = arith.constant 0 : index
    %158 = vector.load %arg6[%c3_56, %c0_57, %c0_58] : memref<9x1x8xf32, #tpu.memory_space<vmem>>, vector<1x1x8xf32>
    %159 = vector.shape_cast %158 : vector<1x1x8xf32> to vector<1x8xf32>
    %160 = vector.shape_cast %159 : vector<1x8xf32> to vector<1x1x8xf32>
    %161 = vector.broadcast %160 : vector<1x1x8xf32> to vector<2x64x8xf32>
    %162 = arith.mulf %157, %161 : vector<2x64x8xf32>
    %163 = arith.addf %150, %162 : vector<2x64x8xf32>
    %164 = vector.shape_cast %110 : vector<128x8xf32> to vector<2x64x8xf32>
    %c4 = arith.constant 4 : index
    %c0_59 = arith.constant 0 : index
    %c0_60 = arith.constant 0 : index
    %165 = vector.load %arg7[%c4, %c0_59, %c0_60] : memref<9x64x1xf32, #tpu.memory_space<vmem>>, vector<1x64x1xf32>
    %166 = vector.shape_cast %165 : vector<1x64x1xf32> to vector<64x1xf32>
    %167 = vector.shape_cast %166 : vector<64x1xf32> to vector<1x64x1xf32>
    %168 = vector.broadcast %167 : vector<1x64x1xf32> to vector<2x64x8xf32>
    %169 = arith.mulf %164, %168 : vector<2x64x8xf32>
    %c4_61 = arith.constant 4 : index
    %c0_62 = arith.constant 0 : index
    %c0_63 = arith.constant 0 : index
    %170 = vector.load %arg6[%c4_61, %c0_62, %c0_63] : memref<9x1x8xf32, #tpu.memory_space<vmem>>, vector<1x1x8xf32>
    %171 = vector.shape_cast %170 : vector<1x1x8xf32> to vector<1x8xf32>
    %172 = vector.shape_cast %171 : vector<1x8xf32> to vector<1x1x8xf32>
    %173 = vector.broadcast %172 : vector<1x1x8xf32> to vector<2x64x8xf32>
    %174 = arith.mulf %169, %173 : vector<2x64x8xf32>
    %175 = arith.addf %163, %174 : vector<2x64x8xf32>
    %c127_i32 = arith.constant 127 : i32
    %176 = tpu.dynamic_rotate %110 by %c127_i32 dim 0 : vector<128x8xf32>, i32 -> vector<128x8xf32>
    %177 = vector.shape_cast %176 : vector<128x8xf32> to vector<2x64x8xf32>
    %c5 = arith.constant 5 : index
    %c0_64 = arith.constant 0 : index
    %c0_65 = arith.constant 0 : index
    %178 = vector.load %arg7[%c5, %c0_64, %c0_65] : memref<9x64x1xf32, #tpu.memory_space<vmem>>, vector<1x64x1xf32>
    %179 = vector.shape_cast %178 : vector<1x64x1xf32> to vector<64x1xf32>
    %180 = vector.shape_cast %179 : vector<64x1xf32> to vector<1x64x1xf32>
    %181 = vector.broadcast %180 : vector<1x64x1xf32> to vector<2x64x8xf32>
    %182 = arith.mulf %177, %181 : vector<2x64x8xf32>
    %c5_66 = arith.constant 5 : index
    %c0_67 = arith.constant 0 : index
    %c0_68 = arith.constant 0 : index
    %183 = vector.load %arg6[%c5_66, %c0_67, %c0_68] : memref<9x1x8xf32, #tpu.memory_space<vmem>>, vector<1x1x8xf32>
    %184 = vector.shape_cast %183 : vector<1x1x8xf32> to vector<1x8xf32>
    %185 = vector.shape_cast %184 : vector<1x8xf32> to vector<1x1x8xf32>
    %186 = vector.broadcast %185 : vector<1x1x8xf32> to vector<2x64x8xf32>
    %187 = arith.mulf %182, %186 : vector<2x64x8xf32>
    %188 = arith.addf %175, %187 : vector<2x64x8xf32>
    %c121_i32 = arith.constant 121 : i32
    %189 = tpu.dynamic_rotate %110 by %c121_i32 dim 0 : vector<128x8xf32>, i32 -> vector<128x8xf32>
    %190 = vector.shape_cast %189 : vector<128x8xf32> to vector<2x64x8xf32>
    %c6 = arith.constant 6 : index
    %c0_69 = arith.constant 0 : index
    %c0_70 = arith.constant 0 : index
    %191 = vector.load %arg7[%c6, %c0_69, %c0_70] : memref<9x64x1xf32, #tpu.memory_space<vmem>>, vector<1x64x1xf32>
    %192 = vector.shape_cast %191 : vector<1x64x1xf32> to vector<64x1xf32>
    %193 = vector.shape_cast %192 : vector<64x1xf32> to vector<1x64x1xf32>
    %194 = vector.broadcast %193 : vector<1x64x1xf32> to vector<2x64x8xf32>
    %195 = arith.mulf %190, %194 : vector<2x64x8xf32>
    %c6_71 = arith.constant 6 : index
    %c0_72 = arith.constant 0 : index
    %c0_73 = arith.constant 0 : index
    %196 = vector.load %arg6[%c6_71, %c0_72, %c0_73] : memref<9x1x8xf32, #tpu.memory_space<vmem>>, vector<1x1x8xf32>
    %197 = vector.shape_cast %196 : vector<1x1x8xf32> to vector<1x8xf32>
    %198 = vector.shape_cast %197 : vector<1x8xf32> to vector<1x1x8xf32>
    %199 = vector.broadcast %198 : vector<1x1x8xf32> to vector<2x64x8xf32>
    %200 = arith.mulf %195, %199 : vector<2x64x8xf32>
    %201 = arith.addf %188, %200 : vector<2x64x8xf32>
    %c120_i32 = arith.constant 120 : i32
    %202 = tpu.dynamic_rotate %110 by %c120_i32 dim 0 : vector<128x8xf32>, i32 -> vector<128x8xf32>
    %203 = vector.shape_cast %202 : vector<128x8xf32> to vector<2x64x8xf32>
    %c7 = arith.constant 7 : index
    %c0_74 = arith.constant 0 : index
    %c0_75 = arith.constant 0 : index
    %204 = vector.load %arg7[%c7, %c0_74, %c0_75] : memref<9x64x1xf32, #tpu.memory_space<vmem>>, vector<1x64x1xf32>
    %205 = vector.shape_cast %204 : vector<1x64x1xf32> to vector<64x1xf32>
    %206 = vector.shape_cast %205 : vector<64x1xf32> to vector<1x64x1xf32>
    %207 = vector.broadcast %206 : vector<1x64x1xf32> to vector<2x64x8xf32>
    %208 = arith.mulf %203, %207 : vector<2x64x8xf32>
    %c7_76 = arith.constant 7 : index
    %c0_77 = arith.constant 0 : index
    %c0_78 = arith.constant 0 : index
    %209 = vector.load %arg6[%c7_76, %c0_77, %c0_78] : memref<9x1x8xf32, #tpu.memory_space<vmem>>, vector<1x1x8xf32>
    %210 = vector.shape_cast %209 : vector<1x1x8xf32> to vector<1x8xf32>
    %211 = vector.shape_cast %210 : vector<1x8xf32> to vector<1x1x8xf32>
    %212 = vector.broadcast %211 : vector<1x1x8xf32> to vector<2x64x8xf32>
    %213 = arith.mulf %208, %212 : vector<2x64x8xf32>
    %214 = arith.addf %201, %213 : vector<2x64x8xf32>
    %c119_i32 = arith.constant 119 : i32
    %215 = tpu.dynamic_rotate %110 by %c119_i32 dim 0 : vector<128x8xf32>, i32 -> vector<128x8xf32>
    %216 = vector.shape_cast %215 : vector<128x8xf32> to vector<2x64x8xf32>
    %c8 = arith.constant 8 : index
    %c0_79 = arith.constant 0 : index
    %c0_80 = arith.constant 0 : index
    %217 = vector.load %arg7[%c8, %c0_79, %c0_80] : memref<9x64x1xf32, #tpu.memory_space<vmem>>, vector<1x64x1xf32>
    %218 = vector.shape_cast %217 : vector<1x64x1xf32> to vector<64x1xf32>
    %219 = vector.shape_cast %218 : vector<64x1xf32> to vector<1x64x1xf32>
    %220 = vector.broadcast %219 : vector<1x64x1xf32> to vector<2x64x8xf32>
    %221 = arith.mulf %216, %220 : vector<2x64x8xf32>
    %c8_81 = arith.constant 8 : index
    %c0_82 = arith.constant 0 : index
    %c0_83 = arith.constant 0 : index
    %222 = vector.load %arg6[%c8_81, %c0_82, %c0_83] : memref<9x1x8xf32, #tpu.memory_space<vmem>>, vector<1x1x8xf32>
    %223 = vector.shape_cast %222 : vector<1x1x8xf32> to vector<1x8xf32>
    %224 = vector.shape_cast %223 : vector<1x8xf32> to vector<1x1x8xf32>
    %225 = vector.broadcast %224 : vector<1x1x8xf32> to vector<2x64x8xf32>
    %226 = arith.mulf %221, %225 : vector<2x64x8xf32>
    %227 = arith.addf %214, %226 : vector<2x64x8xf32>
    %c1_84 = arith.constant 1 : index
    %c0_85 = arith.constant 0 : index
    %c0_86 = arith.constant 0 : index
    %228 = vector.load %arg4[%c1_84, %c0_85, %c0_86] : memref<2x1x8xf32, #tpu.memory_space<vmem>>, vector<1x1x8xf32>
    %229 = vector.shape_cast %228 : vector<1x1x8xf32> to vector<1x8xf32>
    %230 = vector.shape_cast %229 : vector<1x8xf32> to vector<1x1x8xf32>
    %231 = vector.broadcast %230 : vector<1x1x8xf32> to vector<2x64x8xf32>
    %232 = arith.addf %227, %231 : vector<2x64x8xf32>
    %c2_87 = arith.constant 2 : index
    %c0_88 = arith.constant 0 : index
    %c0_89 = arith.constant 0 : index
    %233 = vector.load %arg8[%c2_87, %c0_88, %c0_89] : memref<4x64x8xf32, #tpu.memory_space<vmem>>, vector<1x64x8xf32>
    %234 = vector.shape_cast %233 : vector<1x64x8xf32> to vector<64x8xf32>
    %c3_90 = arith.constant 3 : index
    %c0_91 = arith.constant 0 : index
    %c0_92 = arith.constant 0 : index
    %235 = vector.load %arg8[%c3_90, %c0_91, %c0_92] : memref<4x64x8xf32, #tpu.memory_space<vmem>>, vector<1x64x8xf32>
    %236 = vector.shape_cast %235 : vector<1x64x8xf32> to vector<64x8xf32>
    %cst_93 = arith.constant dense<0.000000e+00> : vector<2x64xf32>
    %237 = vector.multi_reduction <add>, %232, %cst_93 [2] : vector<2x64x8xf32> to vector<2x64xf32>
    %238 = vector.shape_cast %237 : vector<2x64xf32> to vector<2x64x1xf32>
    %cst_94 = arith.constant 8.000000e+00 : f32
    %239 = vector.broadcast %cst_94 : f32 to vector<2x64x1xf32>
    %240 = arith.divf %238, %239 : vector<2x64x1xf32>
    %cst_95 = arith.constant dense<0.000000e+00> : vector<2x1xf32>
    %241 = vector.multi_reduction <add>, %240, %cst_95 [1] : vector<2x64x1xf32> to vector<2x1xf32>
    %242 = vector.shape_cast %241 : vector<2x1xf32> to vector<2x1x1xf32>
    %cst_96 = arith.constant 6.400000e+01 : f32
    %243 = vector.broadcast %cst_96 : f32 to vector<2x1x1xf32>
    %244 = arith.divf %242, %243 : vector<2x1x1xf32>
    %245 = vector.broadcast %244 : vector<2x1x1xf32> to vector<2x64x8xf32>
    %246 = arith.subf %232, %245 : vector<2x64x8xf32>
    %247 = arith.mulf %246, %246 : vector<2x64x8xf32>
    %cst_97 = arith.constant dense<0.000000e+00> : vector<2x64xf32>
    %248 = vector.multi_reduction <add>, %247, %cst_97 [2] : vector<2x64x8xf32> to vector<2x64xf32>
    %249 = vector.shape_cast %248 : vector<2x64xf32> to vector<2x64x1xf32>
    %cst_98 = arith.constant 8.000000e+00 : f32
    %250 = vector.broadcast %cst_98 : f32 to vector<2x64x1xf32>
    %251 = arith.divf %249, %250 : vector<2x64x1xf32>
    %cst_99 = arith.constant dense<0.000000e+00> : vector<2x1xf32>
    %252 = vector.multi_reduction <add>, %251, %cst_99 [1] : vector<2x64x1xf32> to vector<2x1xf32>
    %253 = vector.shape_cast %252 : vector<2x1xf32> to vector<2x1x1xf32>
    %cst_100 = arith.constant 6.400000e+01 : f32
    %254 = vector.broadcast %cst_100 : f32 to vector<2x1x1xf32>
    %255 = arith.divf %253, %254 : vector<2x1x1xf32>
    %cst_101 = arith.constant 9.99999974E-6 : f32
    %256 = vector.broadcast %cst_101 : f32 to vector<2x1x1xf32>
    %257 = arith.addf %255, %256 : vector<2x1x1xf32>
    %258 = math.rsqrt %257 : vector<2x1x1xf32>
    %259 = vector.broadcast %258 : vector<2x1x1xf32> to vector<2x64x8xf32>
    %260 = arith.mulf %246, %259 : vector<2x64x8xf32>
    %261 = vector.shape_cast %234 : vector<64x8xf32> to vector<1x64x8xf32>
    %262 = vector.broadcast %261 : vector<1x64x8xf32> to vector<2x64x8xf32>
    %263 = arith.mulf %260, %262 : vector<2x64x8xf32>
    %264 = vector.shape_cast %236 : vector<64x8xf32> to vector<1x64x8xf32>
    %265 = vector.broadcast %264 : vector<1x64x8xf32> to vector<2x64x8xf32>
    %266 = arith.addf %263, %265 : vector<2x64x8xf32>
    %cst_102 = arith.constant 5.000000e-01 : f32
    %267 = vector.broadcast %cst_102 : f32 to vector<2x64x8xf32>
    %268 = arith.mulf %267, %266 : vector<2x64x8xf32>
    %cst_103 = arith.constant 0.707106769 : f32
    %269 = vector.broadcast %cst_103 : f32 to vector<2x64x8xf32>
    %270 = arith.mulf %266, %269 : vector<2x64x8xf32>
    %cst_104 = arith.constant 0.000000e+00 : f32
    %271 = vector.broadcast %cst_104 : f32 to vector<2x64x8xf32>
    %272 = arith.cmpf oge, %270, %271 : vector<2x64x8xf32>
    %cst_105 = arith.constant 1.000000e+00 : f32
    %cst_106 = arith.constant -1.000000e+00 : f32
    %273 = vector.broadcast %cst_105 : f32 to vector<2x64x8xf32>
    %274 = vector.broadcast %cst_106 : f32 to vector<2x64x8xf32>
    %275 = arith.select %272, %273, %274 : vector<2x64x8xi1>, vector<2x64x8xf32>
    %276 = math.absf %270 : vector<2x64x8xf32>
    %cst_107 = arith.constant 0.327591091 : f32
    %277 = vector.broadcast %cst_107 : f32 to vector<2x64x8xf32>
    %278 = arith.mulf %277, %276 : vector<2x64x8xf32>
    %cst_108 = arith.constant 1.000000e+00 : f32
    %279 = vector.broadcast %cst_108 : f32 to vector<2x64x8xf32>
    %280 = arith.addf %279, %278 : vector<2x64x8xf32>
    %281 = tpu.reciprocal %280 : vector<2x64x8xf32> -> vector<2x64x8xf32>
    %cst_109 = arith.constant 1.06140542 : f32
    %282 = vector.broadcast %cst_109 : f32 to vector<2x64x8xf32>
    %283 = arith.mulf %282, %281 : vector<2x64x8xf32>
    %cst_110 = arith.constant -1.45315206 : f32
    %284 = vector.broadcast %cst_110 : f32 to vector<2x64x8xf32>
    %285 = arith.addf %283, %284 : vector<2x64x8xf32>
    %286 = arith.mulf %285, %281 : vector<2x64x8xf32>
    %cst_111 = arith.constant 1.42141378 : f32
    %287 = vector.broadcast %cst_111 : f32 to vector<2x64x8xf32>
    %288 = arith.addf %286, %287 : vector<2x64x8xf32>
    %289 = arith.mulf %288, %281 : vector<2x64x8xf32>
    %cst_112 = arith.constant -0.284496725 : f32
    %290 = vector.broadcast %cst_112 : f32 to vector<2x64x8xf32>
    %291 = arith.addf %289, %290 : vector<2x64x8xf32>
    %292 = arith.mulf %291, %281 : vector<2x64x8xf32>
    %cst_113 = arith.constant 0.254829586 : f32
    %293 = vector.broadcast %cst_113 : f32 to vector<2x64x8xf32>
    %294 = arith.addf %292, %293 : vector<2x64x8xf32>
    %295 = arith.mulf %294, %281 : vector<2x64x8xf32>
    %cst_114 = arith.constant 0.000000e+00 : f32
    %296 = vector.broadcast %cst_114 : f32 to vector<2x64x8xf32>
    %297 = arith.subf %296, %276 : vector<2x64x8xf32>
    %298 = arith.mulf %297, %276 : vector<2x64x8xf32>
    %299 = math.exp %298 : vector<2x64x8xf32>
    %300 = arith.mulf %295, %299 : vector<2x64x8xf32>
    %cst_115 = arith.constant 1.000000e+00 : f32
    %301 = vector.broadcast %cst_115 : f32 to vector<2x64x8xf32>
    %302 = arith.subf %301, %300 : vector<2x64x8xf32>
    %303 = arith.mulf %275, %302 : vector<2x64x8xf32>
    %cst_116 = arith.constant 1.000000e+00 : f32
    %304 = vector.broadcast %cst_116 : f32 to vector<2x64x8xf32>
    %305 = arith.addf %304, %303 : vector<2x64x8xf32>
    %306 = arith.mulf %268, %305 : vector<2x64x8xf32>
    %c0_117 = arith.constant 0 : index
    %c0_118 = arith.constant 0 : index
    %307 = vector.load %arg3[%c0_117, %c0_118] : memref<8x4xf32, #tpu.memory_space<vmem>>, vector<8x4xf32>
    %c0_119 = arith.constant 0 : index
    %c0_120 = arith.constant 0 : index
    %308 = vector.load %arg5[%c0_119, %c0_120] : memref<1x4xf32, #tpu.memory_space<vmem>>, vector<1x4xf32>
    %cst_121 = arith.constant 0.000000e+00 : f32
    %309 = vector.broadcast %cst_121 : f32 to vector<2x64x4xf32>
    %310 = vector.extract_strided_slice %306 {offsets = [0, 0, 0], sizes = [2, 64, 1], strides = [1, 1, 1]} : vector<2x64x8xf32> to vector<2x64x1xf32>
    %311 = vector.extract_strided_slice %307 {offsets = [0, 0], sizes = [1, 4], strides = [1, 1]} : vector<8x4xf32> to vector<1x4xf32>
    %312 = vector.shape_cast %311 : vector<1x4xf32> to vector<1x1x4xf32>
    %313 = vector.broadcast %310 : vector<2x64x1xf32> to vector<2x64x4xf32>
    %314 = vector.broadcast %312 : vector<1x1x4xf32> to vector<2x64x4xf32>
    %315 = arith.mulf %313, %314 : vector<2x64x4xf32>
    %316 = arith.addf %309, %315 : vector<2x64x4xf32>
    %317 = vector.extract_strided_slice %306 {offsets = [0, 0, 1], sizes = [2, 64, 1], strides = [1, 1, 1]} : vector<2x64x8xf32> to vector<2x64x1xf32>
    %318 = vector.extract_strided_slice %307 {offsets = [1, 0], sizes = [1, 4], strides = [1, 1]} : vector<8x4xf32> to vector<1x4xf32>
    %319 = vector.shape_cast %318 : vector<1x4xf32> to vector<1x1x4xf32>
    %320 = vector.broadcast %317 : vector<2x64x1xf32> to vector<2x64x4xf32>
    %321 = vector.broadcast %319 : vector<1x1x4xf32> to vector<2x64x4xf32>
    %322 = arith.mulf %320, %321 : vector<2x64x4xf32>
    %323 = arith.addf %316, %322 : vector<2x64x4xf32>
    %324 = vector.extract_strided_slice %306 {offsets = [0, 0, 2], sizes = [2, 64, 1], strides = [1, 1, 1]} : vector<2x64x8xf32> to vector<2x64x1xf32>
    %325 = vector.extract_strided_slice %307 {offsets = [2, 0], sizes = [1, 4], strides = [1, 1]} : vector<8x4xf32> to vector<1x4xf32>
    %326 = vector.shape_cast %325 : vector<1x4xf32> to vector<1x1x4xf32>
    %327 = vector.broadcast %324 : vector<2x64x1xf32> to vector<2x64x4xf32>
    %328 = vector.broadcast %326 : vector<1x1x4xf32> to vector<2x64x4xf32>
    %329 = arith.mulf %327, %328 : vector<2x64x4xf32>
    %330 = arith.addf %323, %329 : vector<2x64x4xf32>
    %331 = vector.extract_strided_slice %306 {offsets = [0, 0, 3], sizes = [2, 64, 1], strides = [1, 1, 1]} : vector<2x64x8xf32> to vector<2x64x1xf32>
    %332 = vector.extract_strided_slice %307 {offsets = [3, 0], sizes = [1, 4], strides = [1, 1]} : vector<8x4xf32> to vector<1x4xf32>
    %333 = vector.shape_cast %332 : vector<1x4xf32> to vector<1x1x4xf32>
    %334 = vector.broadcast %331 : vector<2x64x1xf32> to vector<2x64x4xf32>
    %335 = vector.broadcast %333 : vector<1x1x4xf32> to vector<2x64x4xf32>
    %336 = arith.mulf %334, %335 : vector<2x64x4xf32>
    %337 = arith.addf %330, %336 : vector<2x64x4xf32>
    %338 = vector.extract_strided_slice %306 {offsets = [0, 0, 4], sizes = [2, 64, 1], strides = [1, 1, 1]} : vector<2x64x8xf32> to vector<2x64x1xf32>
    %339 = vector.extract_strided_slice %307 {offsets = [4, 0], sizes = [1, 4], strides = [1, 1]} : vector<8x4xf32> to vector<1x4xf32>
    %340 = vector.shape_cast %339 : vector<1x4xf32> to vector<1x1x4xf32>
    %341 = vector.broadcast %338 : vector<2x64x1xf32> to vector<2x64x4xf32>
    %342 = vector.broadcast %340 : vector<1x1x4xf32> to vector<2x64x4xf32>
    %343 = arith.mulf %341, %342 : vector<2x64x4xf32>
    %344 = arith.addf %337, %343 : vector<2x64x4xf32>
    %345 = vector.extract_strided_slice %306 {offsets = [0, 0, 5], sizes = [2, 64, 1], strides = [1, 1, 1]} : vector<2x64x8xf32> to vector<2x64x1xf32>
    %346 = vector.extract_strided_slice %307 {offsets = [5, 0], sizes = [1, 4], strides = [1, 1]} : vector<8x4xf32> to vector<1x4xf32>
    %347 = vector.shape_cast %346 : vector<1x4xf32> to vector<1x1x4xf32>
    %348 = vector.broadcast %345 : vector<2x64x1xf32> to vector<2x64x4xf32>
    %349 = vector.broadcast %347 : vector<1x1x4xf32> to vector<2x64x4xf32>
    %350 = arith.mulf %348, %349 : vector<2x64x4xf32>
    %351 = arith.addf %344, %350 : vector<2x64x4xf32>
    %352 = vector.extract_strided_slice %306 {offsets = [0, 0, 6], sizes = [2, 64, 1], strides = [1, 1, 1]} : vector<2x64x8xf32> to vector<2x64x1xf32>
    %353 = vector.extract_strided_slice %307 {offsets = [6, 0], sizes = [1, 4], strides = [1, 1]} : vector<8x4xf32> to vector<1x4xf32>
    %354 = vector.shape_cast %353 : vector<1x4xf32> to vector<1x1x4xf32>
    %355 = vector.broadcast %352 : vector<2x64x1xf32> to vector<2x64x4xf32>
    %356 = vector.broadcast %354 : vector<1x1x4xf32> to vector<2x64x4xf32>
    %357 = arith.mulf %355, %356 : vector<2x64x4xf32>
    %358 = arith.addf %351, %357 : vector<2x64x4xf32>
    %359 = vector.extract_strided_slice %306 {offsets = [0, 0, 7], sizes = [2, 64, 1], strides = [1, 1, 1]} : vector<2x64x8xf32> to vector<2x64x1xf32>
    %360 = vector.extract_strided_slice %307 {offsets = [7, 0], sizes = [1, 4], strides = [1, 1]} : vector<8x4xf32> to vector<1x4xf32>
    %361 = vector.shape_cast %360 : vector<1x4xf32> to vector<1x1x4xf32>
    %362 = vector.broadcast %359 : vector<2x64x1xf32> to vector<2x64x4xf32>
    %363 = vector.broadcast %361 : vector<1x1x4xf32> to vector<2x64x4xf32>
    %364 = arith.mulf %362, %363 : vector<2x64x4xf32>
    %365 = arith.addf %358, %364 : vector<2x64x4xf32>
    %366 = vector.shape_cast %308 : vector<1x4xf32> to vector<1x1x4xf32>
    %367 = vector.broadcast %366 : vector<1x1x4xf32> to vector<2x64x4xf32>
    %368 = arith.addf %365, %367 : vector<2x64x4xf32>
    %c0_122 = arith.constant 0 : index
    %c0_123 = arith.constant 0 : index
    %c0_124 = arith.constant 0 : index
    %369 = vector.load %arg9[%c0_122, %c0_123, %c0_124] : memref<2x64x4xf32, #tpu.memory_space<vmem>>, vector<1x64x4xf32>
    %370 = vector.shape_cast %369 : vector<1x64x4xf32> to vector<64x4xf32>
    %c1_125 = arith.constant 1 : index
    %c0_126 = arith.constant 0 : index
    %c0_127 = arith.constant 0 : index
    %371 = vector.load %arg9[%c1_125, %c0_126, %c0_127] : memref<2x64x4xf32, #tpu.memory_space<vmem>>, vector<1x64x4xf32>
    %372 = vector.shape_cast %371 : vector<1x64x4xf32> to vector<64x4xf32>
    %cst_128 = arith.constant dense<0.000000e+00> : vector<2x64xf32>
    %373 = vector.multi_reduction <add>, %368, %cst_128 [2] : vector<2x64x4xf32> to vector<2x64xf32>
    %374 = vector.shape_cast %373 : vector<2x64xf32> to vector<2x64x1xf32>
    %cst_129 = arith.constant 4.000000e+00 : f32
    %375 = vector.broadcast %cst_129 : f32 to vector<2x64x1xf32>
    %376 = arith.divf %374, %375 : vector<2x64x1xf32>
    %cst_130 = arith.constant dense<0.000000e+00> : vector<2x1xf32>
    %377 = vector.multi_reduction <add>, %376, %cst_130 [1] : vector<2x64x1xf32> to vector<2x1xf32>
    %378 = vector.shape_cast %377 : vector<2x1xf32> to vector<2x1x1xf32>
    %cst_131 = arith.constant 6.400000e+01 : f32
    %379 = vector.broadcast %cst_131 : f32 to vector<2x1x1xf32>
    %380 = arith.divf %378, %379 : vector<2x1x1xf32>
    %381 = vector.broadcast %380 : vector<2x1x1xf32> to vector<2x64x4xf32>
    %382 = arith.subf %368, %381 : vector<2x64x4xf32>
    %383 = arith.mulf %382, %382 : vector<2x64x4xf32>
    %cst_132 = arith.constant dense<0.000000e+00> : vector<2x64xf32>
    %384 = vector.multi_reduction <add>, %383, %cst_132 [2] : vector<2x64x4xf32> to vector<2x64xf32>
    %385 = vector.shape_cast %384 : vector<2x64xf32> to vector<2x64x1xf32>
    %cst_133 = arith.constant 4.000000e+00 : f32
    %386 = vector.broadcast %cst_133 : f32 to vector<2x64x1xf32>
    %387 = arith.divf %385, %386 : vector<2x64x1xf32>
    %cst_134 = arith.constant dense<0.000000e+00> : vector<2x1xf32>
    %388 = vector.multi_reduction <add>, %387, %cst_134 [1] : vector<2x64x1xf32> to vector<2x1xf32>
    %389 = vector.shape_cast %388 : vector<2x1xf32> to vector<2x1x1xf32>
    %cst_135 = arith.constant 6.400000e+01 : f32
    %390 = vector.broadcast %cst_135 : f32 to vector<2x1x1xf32>
    %391 = arith.divf %389, %390 : vector<2x1x1xf32>
    %cst_136 = arith.constant 9.99999974E-6 : f32
    %392 = vector.broadcast %cst_136 : f32 to vector<2x1x1xf32>
    %393 = arith.addf %391, %392 : vector<2x1x1xf32>
    %394 = math.rsqrt %393 : vector<2x1x1xf32>
    %395 = vector.broadcast %394 : vector<2x1x1xf32> to vector<2x64x4xf32>
    %396 = arith.mulf %382, %395 : vector<2x64x4xf32>
    %397 = vector.shape_cast %370 : vector<64x4xf32> to vector<1x64x4xf32>
    %398 = vector.broadcast %397 : vector<1x64x4xf32> to vector<2x64x4xf32>
    %399 = arith.mulf %396, %398 : vector<2x64x4xf32>
    %400 = vector.shape_cast %372 : vector<64x4xf32> to vector<1x64x4xf32>
    %401 = vector.broadcast %400 : vector<1x64x4xf32> to vector<2x64x4xf32>
    %402 = arith.addf %399, %401 : vector<2x64x4xf32>
    %cst_137 = arith.constant 5.000000e-01 : f32
    %403 = vector.broadcast %cst_137 : f32 to vector<2x64x4xf32>
    %404 = arith.mulf %403, %402 : vector<2x64x4xf32>
    %cst_138 = arith.constant 0.707106769 : f32
    %405 = vector.broadcast %cst_138 : f32 to vector<2x64x4xf32>
    %406 = arith.mulf %402, %405 : vector<2x64x4xf32>
    %cst_139 = arith.constant 0.000000e+00 : f32
    %407 = vector.broadcast %cst_139 : f32 to vector<2x64x4xf32>
    %408 = arith.cmpf oge, %406, %407 : vector<2x64x4xf32>
    %cst_140 = arith.constant 1.000000e+00 : f32
    %cst_141 = arith.constant -1.000000e+00 : f32
    %409 = vector.broadcast %cst_140 : f32 to vector<2x64x4xf32>
    %410 = vector.broadcast %cst_141 : f32 to vector<2x64x4xf32>
    %411 = arith.select %408, %409, %410 : vector<2x64x4xi1>, vector<2x64x4xf32>
    %412 = math.absf %406 : vector<2x64x4xf32>
    %cst_142 = arith.constant 0.327591091 : f32
    %413 = vector.broadcast %cst_142 : f32 to vector<2x64x4xf32>
    %414 = arith.mulf %413, %412 : vector<2x64x4xf32>
    %cst_143 = arith.constant 1.000000e+00 : f32
    %415 = vector.broadcast %cst_143 : f32 to vector<2x64x4xf32>
    %416 = arith.addf %415, %414 : vector<2x64x4xf32>
    %417 = tpu.reciprocal %416 : vector<2x64x4xf32> -> vector<2x64x4xf32>
    %cst_144 = arith.constant 1.06140542 : f32
    %418 = vector.broadcast %cst_144 : f32 to vector<2x64x4xf32>
    %419 = arith.mulf %418, %417 : vector<2x64x4xf32>
    %cst_145 = arith.constant -1.45315206 : f32
    %420 = vector.broadcast %cst_145 : f32 to vector<2x64x4xf32>
    %421 = arith.addf %419, %420 : vector<2x64x4xf32>
    %422 = arith.mulf %421, %417 : vector<2x64x4xf32>
    %cst_146 = arith.constant 1.42141378 : f32
    %423 = vector.broadcast %cst_146 : f32 to vector<2x64x4xf32>
    %424 = arith.addf %422, %423 : vector<2x64x4xf32>
    %425 = arith.mulf %424, %417 : vector<2x64x4xf32>
    %cst_147 = arith.constant -0.284496725 : f32
    %426 = vector.broadcast %cst_147 : f32 to vector<2x64x4xf32>
    %427 = arith.addf %425, %426 : vector<2x64x4xf32>
    %428 = arith.mulf %427, %417 : vector<2x64x4xf32>
    %cst_148 = arith.constant 0.254829586 : f32
    %429 = vector.broadcast %cst_148 : f32 to vector<2x64x4xf32>
    %430 = arith.addf %428, %429 : vector<2x64x4xf32>
    %431 = arith.mulf %430, %417 : vector<2x64x4xf32>
    %cst_149 = arith.constant 0.000000e+00 : f32
    %432 = vector.broadcast %cst_149 : f32 to vector<2x64x4xf32>
    %433 = arith.subf %432, %412 : vector<2x64x4xf32>
    %434 = arith.mulf %433, %412 : vector<2x64x4xf32>
    %435 = math.exp %434 : vector<2x64x4xf32>
    %436 = arith.mulf %431, %435 : vector<2x64x4xf32>
    %cst_150 = arith.constant 1.000000e+00 : f32
    %437 = vector.broadcast %cst_150 : f32 to vector<2x64x4xf32>
    %438 = arith.subf %437, %436 : vector<2x64x4xf32>
    %439 = arith.mulf %411, %438 : vector<2x64x4xf32>
    %cst_151 = arith.constant 1.000000e+00 : f32
    %440 = vector.broadcast %cst_151 : f32 to vector<2x64x4xf32>
    %441 = arith.addf %440, %439 : vector<2x64x4xf32>
    %442 = arith.mulf %404, %441 : vector<2x64x4xf32>
    %c0_152 = arith.constant 0 : index
    %c0_153 = arith.constant 0 : index
    %c0_154 = arith.constant 0 : index
    %443 = vector.load %arg10[%c0_152, %c0_153, %c0_154] : memref<2x64x4xf32, #tpu.memory_space<vmem>>, vector<2x64x4xf32>
    tpu.vector_store %arg10[%c0_152, %c0_153, %c0_154], %442 {strides = array<i32>} : memref<2x64x4xf32, #tpu.memory_space<vmem>>, vector<2x64x4xf32>,
    return
  }
  func.func @transform_0(%arg0: i32) -> (i32, i32, i32) {
    %c0_i32 = arith.constant 0 : i32
    %c0_i32_0 = arith.constant 0 : i32
    %c0_i32_1 = arith.constant 0 : i32
    return %arg0, %c0_i32, %c0_i32_0 : i32, i32, i32
  }
  func.func @transform_1(%arg0: i32) -> (i32, i32) {
    %c0_i32 = arith.constant 0 : i32
    %c0_i32_0 = arith.constant 0 : i32
    %c0_i32_1 = arith.constant 0 : i32
    return %c0_i32, %c0_i32_0 : i32, i32
  }
  func.func @transform_2(%arg0: i32) -> (i32, i32) {
    %c0_i32 = arith.constant 0 : i32
    %c0_i32_0 = arith.constant 0 : i32
    %c0_i32_1 = arith.constant 0 : i32
    return %c0_i32, %c0_i32_0 : i32, i32
  }
  func.func @transform_3(%arg0: i32) -> (i32, i32, i32) {
    %c0_i32 = arith.constant 0 : i32
    %c0_i32_0 = arith.constant 0 : i32
    %c0_i32_1 = arith.constant 0 : i32
    %c0_i32_2 = arith.constant 0 : i32
    return %c0_i32, %c0_i32_0, %c0_i32_1 : i32, i32, i32
  }
  func.func @transform_4(%arg0: i32) -> (i32, i32) {
    %c0_i32 = arith.constant 0 : i32
    %c0_i32_0 = arith.constant 0 : i32
    %c0_i32_1 = arith.constant 0 : i32
    return %c0_i32, %c0_i32_0 : i32, i32
  }
  func.func @transform_5(%arg0: i32) -> (i32, i32, i32) {
    %c0_i32 = arith.constant 0 : i32
    %c0_i32_0 = arith.constant 0 : i32
    %c0_i32_1 = arith.constant 0 : i32
    %c0_i32_2 = arith.constant 0 : i32
    return %c0_i32, %c0_i32_0, %c0_i32_1 : i32, i32, i32
  }
  func.func @transform_6(%arg0: i32) -> (i32, i32, i32) {
    %c0_i32 = arith.constant 0 : i32
    %c0_i32_0 = arith.constant 0 : i32
    %c0_i32_1 = arith.constant 0 : i32
    %c0_i32_2 = arith.constant 0 : i32
    return %c0_i32, %c0_i32_0, %c0_i32_1 : i32, i32, i32
  }
  func.func @transform_7(%arg0: i32) -> (i32, i32, i32) {
    %c0_i32 = arith.constant 0 : i32
    %c0_i32_0 = arith.constant 0 : i32
    %c0_i32_1 = arith.constant 0 : i32
    %c0_i32_2 = arith.constant 0 : i32
    return %c0_i32, %c0_i32_0, %c0_i32_1 : i32, i32, i32
  }
  func.func @transform_8(%arg0: i32) -> (i32, i32, i32) {
    %c0_i32 = arith.constant 0 : i32
    %c0_i32_0 = arith.constant 0 : i32
    %c0_i32_1 = arith.constant 0 : i32
    %c0_i32_2 = arith.constant 0 : i32
    return %c0_i32, %c0_i32_0, %c0_i32_1 : i32, i32, i32
  }
  func.func @transform_9(%arg0: i32) -> (i32, i32, i32) {
    %c0_i32 = arith.constant 0 : i32
    %c0_i32_0 = arith.constant 0 : i32
    %c0_i32_1 = arith.constant 0 : i32
    return %arg0, %c0_i32, %c0_i32_0 : i32, i32, i32
  }
}

</mosaic_0001>

<llo_original>
// kernel: tpu_custom_call.1
$region0: #{tpu_custom_call.1}
  #allocation0 [shape = 'u32[]', space=smem, size = 0x4, offset = 0x4, fixed_abs, tag = 'smem constant byte address 0x4 - core index']
  #allocation1 [shape = 'u32[144,128]{1,0:T(1,128)}', space=vmem, size = 0x12000, scoped, tag = 'internal scratch']
  %s0 = inlined_call_operand.vmem [shape: f32[4,64,4], index: 0, kind: input, shape index: {}]
  %s1 = inlined_call_operand.vmem [shape: f32[4,8], index: 1, kind: input, shape index: {}]
  %s2 = inlined_call_operand.vmem [shape: f32[8,4], index: 2, kind: input, shape index: {}]
  %s3 = inlined_call_operand.vmem [shape: f32[2,1,8], index: 3, kind: input, shape index: {}]
  %s4 = inlined_call_operand.vmem [shape: f32[1,4], index: 4, kind: input, shape index: {}]
  %s5 = inlined_call_operand.vmem [shape: f32[9,1,8], index: 5, kind: input, shape index: {}]
  %s6 = inlined_call_operand.vmem [shape: f32[9,64,1], index: 6, kind: input, shape index: {}]
  %s7 = inlined_call_operand.vmem [shape: f32[4,64,8], index: 7, kind: input, shape index: {}]
  %s8 = inlined_call_operand.vmem [shape: f32[2,64,4], index: 8, kind: input, shape index: {}]
  %s9 = inlined_call_operand.vmem [shape: f32[4,64,4], index: 9, kind: output, shape index: {}]
  %s10 = sld [smem:[#allocation0]]
  $region69: #{tpu_custom_call.1} parent=0
    _
  %s12 = ssub.s32 1, %s10
  %s13 = scalar_select 0, %s12, %s10
  loop: start=0, step=1, limit=4
  $region2: #{tpu_custom_call.1} parent=0 // loop_pre_header
    _
  $region3: #{tpu_custom_call.1} parent=0 // loop_header
    %s15 = sphi 0, %s19
    %p16 = scmp.ge.s32.totalorder %s15, 4
    %s25 = sphi 0, %s27
    %s28 = sphi 0, %s25
    %s29 = sphi 0, %s28
    %s45 = sphi 0, %s29
    %s49 = sphi 0, %s49
    %s51 = sphi 0, %s49
    %s52 = sphi 0, %s51
    %s66 = sphi 0, %s52
    %s70 = sphi 0, %s70
    %s72 = sphi 0, %s70
    %s73 = sphi 0, %s72
    %s87 = sphi 0, %s73
    %s91 = sphi 0, %s91
    %s93 = sphi 0, %s91
    %s94 = sphi 0, %s93
    %s108 = sphi 0, %s94
    %s112 = sphi 0, %s112
    %s114 = sphi 0, %s112
    %s115 = sphi 0, %s114
    %s129 = sphi 0, %s115
    %s133 = sphi 0, %s133
    %s135 = sphi 0, %s133
    %s136 = sphi 0, %s135
    %s150 = sphi 0, %s136
    %s154 = sphi 0, %s154
    %s156 = sphi 0, %s154
    %s157 = sphi 0, %s156
    %s171 = sphi 0, %s157
    %s175 = sphi 0, %s175
    %s177 = sphi 0, %s175
    %s178 = sphi 0, %s177
    %s192 = sphi 0, %s178
    %s196 = sphi 0, %s196
    %s198 = sphi 0, %s196
    %s199 = sphi 0, %s198
    %s213 = sphi 0, %s199
    %s219 = sphi 0, %s221
    %s222 = sphi 0, %s219
    %s223 = sphi 0, %s222
    %s239 = sphi 0, %s223
  $region4: #{tpu_custom_call.1} parent=0 // loop_header_branch
    %18 = sbr.rel (%p16) target = $region8
  $region5: #{tpu_custom_call.1} parent=0 // loop_body
    %s20 = ssub.s32 %s15, 1
    %s21 = ssub.s32 %s15, 2
    %s22 = sadd.s32 %s15, 1
    %s23 = ssub.s32 %s15, %s22
    %p24 = scmp.eq.s32.totalorder %s23, 0
    %s26 = sadd.s32 %s25, 1
    %s27 = scalar_select %p24, %s25, %s26
    %p30 = pneg %p24
    %p31 = scmp.eq.s32.totalorder %s15, 1
    %p32 = por %p30, %p31
    %p33 = scmp.ne.s32.totalorder %s25, %s28
    %p34 = scmp.eq.s32.totalorder %s15, 0
    %p35 = por %p33, %p34
    %p36 = scmp.ne.s32.totalorder %s25, %s28
    %p37 = scmp.eq.s32.totalorder %s20, 1
    %p38 = por %p36, %p37
    %p39 = scmp.ne.s32.totalorder %s28, %s29
    %p40 = scmp.eq.s32.totalorder %s20, 0
    %p41 = por %p39, %p40
    %p42 = scmp.ne.s32.totalorder %s28, %s29
    %p43 = scmp.eq.s32.totalorder %s21, 1
    %p44 = por %p42, %p43
    %p46 = scmp.ne.s32.totalorder %s29, %s45
    %p47 = scmp.eq.s32.totalorder %s21, 0
    %p48 = por %p46, %p47
    %s50 = sadd.s32 %s49, 1
    %p53 = scmp.eq.s32.totalorder %s15, 1
    %p54 = scmp.ne.s32.totalorder %s49, %s51
    %p55 = scmp.eq.s32.totalorder %s15, 0
    %p56 = por %p54, %p55
    %p57 = scmp.ne.s32.totalorder %s49, %s51
    %p58 = scmp.eq.s32.totalorder %s20, 1
    %p59 = por %p57, %p58
    %p60 = scmp.ne.s32.totalorder %s51, %s52
    %p61 = scmp.eq.s32.totalorder %s20, 0
    %p62 = por %p60, %p61
    %p63 = scmp.ne.s32.totalorder %s51, %s52
    %p64 = scmp.eq.s32.totalorder %s21, 1
    %p65 = por %p63, %p64
    %p67 = scmp.ne.s32.totalorder %s52, %s66
    %p68 = scmp.eq.s32.totalorder %s21, 0
    %p69 = por %p67, %p68
    %s71 = sadd.s32 %s70, 1
    %p74 = scmp.eq.s32.totalorder %s15, 1
    %p75 = scmp.ne.s32.totalorder %s70, %s72
    %p76 = scmp.eq.s32.totalorder %s15, 0
    %p77 = por %p75, %p76
    %p78 = scmp.ne.s32.totalorder %s70, %s72
    %p79 = scmp.eq.s32.totalorder %s20, 1
    %p80 = por %p78, %p79
    %p81 = scmp.ne.s32.totalorder %s72, %s73
    %p82 = scmp.eq.s32.totalorder %s20, 0
    %p83 = por %p81, %p82
    %p84 = scmp.ne.s32.totalorder %s72, %s73
    %p85 = scmp.eq.s32.totalorder %s21, 1
    %p86 = por %p84, %p85
    %p88 = scmp.ne.s32.totalorder %s73, %s87
    %p89 = scmp.eq.s32.totalorder %s21, 0
    %p90 = por %p88, %p89
    %s92 = sadd.s32 %s91, 1
    %p95 = scmp.eq.s32.totalorder %s15, 1
    %p96 = scmp.ne.s32.totalorder %s91, %s93
    %p97 = scmp.eq.s32.totalorder %s15, 0
    %p98 = por %p96, %p97
    %p99 = scmp.ne.s32.totalorder %s91, %s93
    %p100 = scmp.eq.s32.totalorder %s20, 1
    %p101 = por %p99, %p100
    %p102 = scmp.ne.s32.totalorder %s93, %s94
    %p103 = scmp.eq.s32.totalorder %s20, 0
    %p104 = por %p102, %p103
    %p105 = scmp.ne.s32.totalorder %s93, %s94
    %p106 = scmp.eq.s32.totalorder %s21, 1
    %p107 = por %p105, %p106
    %p109 = scmp.ne.s32.totalorder %s94, %s108
    %p110 = scmp.eq.s32.totalorder %s21, 0
    %p111 = por %p109, %p110
    %s113 = sadd.s32 %s112, 1
    %p116 = scmp.eq.s32.totalorder %s15, 1
    %p117 = scmp.ne.s32.totalorder %s112, %s114
    %p118 = scmp.eq.s32.totalorder %s15, 0
    %p119 = por %p117, %p118
    %p120 = scmp.ne.s32.totalorder %s112, %s114
    %p121 = scmp.eq.s32.totalorder %s20, 1
    %p122 = por %p120, %p121
    %p123 = scmp.ne.s32.totalorder %s114, %s115
    %p124 = scmp.eq.s32.totalorder %s20, 0
    %p125 = por %p123, %p124
    %p126 = scmp.ne.s32.totalorder %s114, %s115
    %p127 = scmp.eq.s32.totalorder %s21, 1
    %p128 = por %p126, %p127
    %p130 = scmp.ne.s32.totalorder %s115, %s129
    %p131 = scmp.eq.s32.totalorder %s21, 0
    %p132 = por %p130, %p131
    %s134 = sadd.s32 %s133, 1
    %p137 = scmp.eq.s32.totalorder %s15, 1
    %p138 = scmp.ne.s32.totalorder %s133, %s135
    %p139 = scmp.eq.s32.totalorder %s15, 0
    %p140 = por %p138, %p139
    %p141 = scmp.ne.s32.totalorder %s133, %s135
    %p142 = scmp.eq.s32.totalorder %s20, 1
    %p143 = por %p141, %p142
    %p144 = scmp.ne.s32.totalorder %s135, %s136
    %p145 = scmp.eq.s32.totalorder %s20, 0
    %p146 = por %p144, %p145
    %p147 = scmp.ne.s32.totalorder %s135, %s136
    %p148 = scmp.eq.s32.totalorder %s21, 1
    %p149 = por %p147, %p148
    %p151 = scmp.ne.s32.totalorder %s136, %s150
    %p152 = scmp.eq.s32.totalorder %s21, 0
    %p153 = por %p151, %p152
    %s155 = sadd.s32 %s154, 1
    %p158 = scmp.eq.s32.totalorder %s15, 1
    %p159 = scmp.ne.s32.totalorder %s154, %s156
    %p160 = scmp.eq.s32.totalorder %s15, 0
    %p161 = por %p159, %p160
    %p162 = scmp.ne.s32.totalorder %s154, %s156
    %p163 = scmp.eq.s32.totalorder %s20, 1
    %p164 = por %p162, %p163
    %p165 = scmp.ne.s32.totalorder %s156, %s157
    %p166 = scmp.eq.s32.totalorder %s20, 0
    %p167 = por %p165, %p166
    %p168 = scmp.ne.s32.totalorder %s156, %s157
    %p169 = scmp.eq.s32.totalorder %s21, 1
    %p170 = por %p168, %p169
    %p172 = scmp.ne.s32.totalorder %s157, %s171
    %p173 = scmp.eq.s32.totalorder %s21, 0
    %p174 = por %p172, %p173
    %s176 = sadd.s32 %s175, 1
    %p179 = scmp.eq.s32.totalorder %s15, 1
    %p180 = scmp.ne.s32.totalorder %s175, %s177
    %p181 = scmp.eq.s32.totalorder %s15, 0
    %p182 = por %p180, %p181
    %p183 = scmp.ne.s32.totalorder %s175, %s177
    %p184 = scmp.eq.s32.totalorder %s20, 1
    %p185 = por %p183, %p184
    %p186 = scmp.ne.s32.totalorder %s177, %s178
    %p187 = scmp.eq.s32.totalorder %s20, 0
    %p188 = por %p186, %p187
    %p189 = scmp.ne.s32.totalorder %s177, %s178
    %p190 = scmp.eq.s32.totalorder %s21, 1
    %p191 = por %p189, %p190
    %p193 = scmp.ne.s32.totalorder %s178, %s192
    %p194 = scmp.eq.s32.totalorder %s21, 0
    %p195 = por %p193, %p194
    %s197 = sadd.s32 %s196, 1
    %p200 = scmp.eq.s32.totalorder %s15, 1
    %p201 = scmp.ne.s32.totalorder %s196, %s198
    %p202 = scmp.eq.s32.totalorder %s15, 0
    %p203 = por %p201, %p202
    %p204 = scmp.ne.s32.totalorder %s196, %s198
    %p205 = scmp.eq.s32.totalorder %s20, 1
    %p206 = por %p204, %p205
    %p207 = scmp.ne.s32.totalorder %s198, %s199
    %p208 = scmp.eq.s32.totalorder %s20, 0
    %p209 = por %p207, %p208
    %p210 = scmp.ne.s32.totalorder %s198, %s199
    %p211 = scmp.eq.s32.totalorder %s21, 1
    %p212 = por %p210, %p211
    %p214 = scmp.ne.s32.totalorder %s199, %s213
    %p215 = scmp.eq.s32.totalorder %s21, 0
    %p216 = por %p214, %p215
    %s217 = ssub.s32 %s15, %s22
    %p218 = scmp.eq.s32.totalorder %s217, 0
    %s220 = sadd.s32 %s219, 1
    %s221 = scalar_select %p218, %s219, %s220
    %p224 = pneg %p218
    %p225 = scmp.eq.s32.totalorder %s15, 1
    %p226 = por %p224, %p225
    %p227 = scmp.ne.s32.totalorder %s219, %s222
    %p228 = scmp.eq.s32.totalorder %s15, 0
    %p229 = por %p227, %p228
    %p230 = scmp.ne.s32.totalorder %s219, %s222
    %p231 = scmp.eq.s32.totalorder %s20, 1
    %p232 = por %p230, %p231
    %p233 = scmp.ne.s32.totalorder %s222, %s223
    %p234 = scmp.eq.s32.totalorder %s20, 0
    %p235 = por %p233, %p234
    %p236 = scmp.ne.s32.totalorder %s222, %s223
    %p237 = scmp.eq.s32.totalorder %s21, 1
    %p238 = por %p236, %p237
    %p240 = scmp.ne.s32.totalorder %s223, %s239
    %p241 = scmp.eq.s32.totalorder %s21, 0
    %p242 = por %p240, %p241
    %p243 = scmp.le.s32.totalorder 1, %s15
    %p244 = scmp.lt.s32.totalorder %s15, 3
    %p245 = pnand %p243, %p244
    %p246 = pneg %p245
    // Predicated region
    $region9: #{tpu_custom_call.1} parent=5 // pred_check
      _
    $region10: #{tpu_custom_call.1} parent=5 // pred_check_branch
      %248 = sbr.rel (%p245) target = $region12
    $region11: #{tpu_custom_call.1} parent=5 // pred_region
      %s249 = ssub.s32 %s15, 1
      // Predicated region
      $region13: #{tpu_custom_call.1} parent=11 // pred_check
        %p250 = pneg %p62
      $region14: #{tpu_custom_call.1} parent=11 // pred_check_branch
        %252 = sbr.rel (%p250) target = $region16
      $region15: #{tpu_custom_call.1} parent=11 // pred_region
        _
      $region16: #{tpu_custom_call.1} parent=11 // pred_fallthru
        _
      // Predicated region
      $region17: #{tpu_custom_call.1} parent=11 // pred_check
        %p253 = pneg %p83
      $region18: #{tpu_custom_call.1} parent=11 // pred_check_branch
        %255 = sbr.rel (%p253) target = $region20
      $region19: #{tpu_custom_call.1} parent=11 // pred_region
        _
      $region20: #{tpu_custom_call.1} parent=11 // pred_fallthru
        _
      // Predicated region
      $region21: #{tpu_custom_call.1} parent=11 // pred_check
        %p256 = pneg %p104
      $region22: #{tpu_custom_call.1} parent=11 // pred_check_branch
        %258 = sbr.rel (%p256) target = $region24
      $region23: #{tpu_custom_call.1} parent=11 // pred_region
        _
      $region24: #{tpu_custom_call.1} parent=11 // pred_fallthru
        _
      // Predicated region
      $region25: #{tpu_custom_call.1} parent=11 // pred_check
        %p259 = pneg %p125
      $region26: #{tpu_custom_call.1} parent=11 // pred_check_branch
        %261 = sbr.rel (%p259) target = $region28
      $region27: #{tpu_custom_call.1} parent=11 // pred_region
        _
      $region28: #{tpu_custom_call.1} parent=11 // pred_fallthru
        _
      // Predicated region
      $region29: #{tpu_custom_call.1} parent=11 // pred_check
        %p262 = pneg %p146
      $region30: #{tpu_custom_call.1} parent=11 // pred_check_branch
        %264 = sbr.rel (%p262) target = $region32
      $region31: #{tpu_custom_call.1} parent=11 // pred_region
        _
      $region32: #{tpu_custom_call.1} parent=11 // pred_fallthru
        _
      // Predicated region
      $region33: #{tpu_custom_call.1} parent=11 // pred_check
        %p265 = pneg %p167
      $region34: #{tpu_custom_call.1} parent=11 // pred_check_branch
        %267 = sbr.rel (%p265) target = $region36
      $region35: #{tpu_custom_call.1} parent=11 // pred_region
        _
      $region36: #{tpu_custom_call.1} parent=11 // pred_fallthru
        _
      // Predicated region
      $region37: #{tpu_custom_call.1} parent=11 // pred_check
        %p268 = pneg %p188
      $region38: #{tpu_custom_call.1} parent=11 // pred_check_branch
        %270 = sbr.rel (%p268) target = $region40
      $region39: #{tpu_custom_call.1} parent=11 // pred_region
        _
      $region40: #{tpu_custom_call.1} parent=11 // pred_fallthru
        _
      // Predicated region
      $region41: #{tpu_custom_call.1} parent=11 // pred_check
        %p271 = pneg %p209
      $region42: #{tpu_custom_call.1} parent=11 // pred_check_branch
        %273 = sbr.rel (%p271) target = $region44
      $region43: #{tpu_custom_call.1} parent=11 // pred_region
        _
      $region44: #{tpu_custom_call.1} parent=11 // pred_fallthru
        _
    $region12: #{tpu_custom_call.1} parent=5 // pred_fallthru
      _
    %p274 = scmp.lt.s32.totalorder %s15, 2
    // Predicated region
    $region45: #{tpu_custom_call.1} parent=5 // pred_check
      %p275 = pneg %p274
    $region46: #{tpu_custom_call.1} parent=5 // pred_check_branch
      %277 = sbr.rel (%p275) target = $region48
    $region47: #{tpu_custom_call.1} parent=5 // pred_region
      // Predicated region
      $region49: #{tpu_custom_call.1} parent=47 // pred_check
        %p278 = pneg %p35
      $region50: #{tpu_custom_call.1} parent=47 // pred_check_branch
        %280 = sbr.rel (%p278) target = $region52
      $region51: #{tpu_custom_call.1} parent=47 // pred_region
        %s281 = smul.u32 2, %s15
        %p282 = scmp.lt.s32.totalorder %s281, 3
        %s283 = scalar_select %p282, %s281, 3
        %s284 = smul.addr %s283, 8
        %s285 = smul.addr %s284, 8
        %s286 = scalar_lea.vmem %s0, %s285
        %s287 = smul.u32 2, %s15
      $region52: #{tpu_custom_call.1} parent=47 // pred_fallthru
        _
    $region48: #{tpu_custom_call.1} parent=5 // pred_fallthru
      _
    %p288 = scmp.le.s32.totalorder 1, %s15
    %p289 = scmp.lt.s32.totalorder %s15, 3
    %p290 = pnand %p288, %p289
    %p291 = pneg %p290
    // Predicated region
    $region53: #{tpu_custom_call.1} parent=5 // pred_check
      _
    $region54: #{tpu_custom_call.1} parent=5 // pred_check_branch
      %293 = sbr.rel (%p290) target = $region56
    $region55: #{tpu_custom_call.1} parent=5 // pred_region
      %s294 = ssub.s32 %s15, 1
      %s295 = smul.u32 2, %s20
      %p296 = scmp.lt.s32.totalorder %s295, 3
      %s297 = scalar_select %p296, %s295, 3
      %s298 = smul.addr %s297, 8
      %s299 = smul.addr %s298, 8
      %s300 = scalar_lea.vmem %s0, %s299
      %p301 = pneg %p41
      %p302 = pneg %p38
      %p303 = pneg %p62
      %p304 = pneg %p59
      %p305 = pneg %p83
      %p306 = pneg %p80
      %p307 = pneg %p104
      %p308 = pneg %p101
      %p309 = pneg %p125
      %p310 = pneg %p122
      %p311 = pneg %p146
      %p312 = pneg %p143
      %p313 = pneg %p167
      %p314 = pneg %p164
      %p315 = pneg %p188
      %p316 = pneg %p185
      %p317 = pneg %p209
      %p318 = pneg %p206
      %p319 = pneg %p235
      %p320 = pneg %p232
      %s321 = smul.u32 2, %s20
      %p322 = scmp.lt.s32.totalorder %s321, 3
      %s323 = scalar_select %p322, %s321, 3
      %s324 = smul.addr %s323, 8
      %s325 = smul.addr %s324, 8
      %s326 = scalar_lea.vmem %s9, %s325
      %s327 = smul.u32 2, %s20
      %p328 = scmp.lt.s32.totalorder %s327, 3
      %s329 = scalar_select %p328, %s327, 3
      %s330 = smul.addr %s329, 8
      %s331 = smul.addr %s330, 8
      %s332 = scalar_lea.vmem %s0, %s331
      %s333 = smul.u32 2, %s20
      %s334 = smul.u32 2, %s20
      %p335 = scmp.lt.s32.totalorder %s334, 3
      %s336 = scalar_select %p335, %s334, 3
      %s337 = smul.addr %s336, 8
      %s338 = smul.addr %s337, 8
      %s339 = scalar_lea.vmem %s9, %s338
      %s340 = smul.u32 2, %s20
      %v341 = vld [vmem:[%s332] sm:$0xff]
      %v342 = vld [vmem:[%s332 + $0x8] sm:$0xff]
      %v343 = vld [vmem:[%s332 + $0x10] sm:$0xff]
      %v344 = vld [vmem:[%s332 + $0x18] sm:$0xff]
      %v345 = vld [vmem:[%s332 + $0x20] sm:$0xff]
      %v346 = vld [vmem:[%s332 + $0x28] sm:$0xff]
      %v347 = vld [vmem:[%s332 + $0x30] sm:$0xff]
      %v348 = vld [vmem:[%s332 + $0x38] sm:$0xff]
      %v349 = vld [vmem:[%s332 + $0x40] sm:$0xff]
      %v350 = vld [vmem:[%s332 + $0x48] sm:$0xff]
      %v351 = vld [vmem:[%s332 + $0x50] sm:$0xff]
      %v352 = vld [vmem:[%s332 + $0x58] sm:$0xff]
      %v353 = vld [vmem:[%s332 + $0x60] sm:$0xff]
      %v354 = vld [vmem:[%s332 + $0x68] sm:$0xff]
      %v355 = vld [vmem:[%s332 + $0x70] sm:$0xff]
      %v356 = vld [vmem:[%s332 + $0x78] sm:$0xff]
      %v357 = vld [vmem:[%s1] sm:$0xf]
      %v358 = vld [vmem:[%s3] sm:$0x1]
      %360 = vset.pattern.permute.xlu0 0
      %361 = vperm.xlu0 %360, %v341
      %v362 = vpop.permute.xlu0 %361
      %365 = vset.pattern.permute.xlu0 0
      %366 = vperm.xlu0 %365, %v342
      %v367 = vpop.permute.xlu0 %366
      %370 = vset.pattern.permute.xlu0 0
      %371 = vperm.xlu0 %370, %v343
      %v372 = vpop.permute.xlu0 %371
      %375 = vset.pattern.permute.xlu0 0
      %376 = vperm.xlu0 %375, %v344
      %v377 = vpop.permute.xlu0 %376
      %380 = vset.pattern.permute.xlu0 0
      %381 = vperm.xlu0 %380, %v345
      %v382 = vpop.permute.xlu0 %381
      %385 = vset.pattern.permute.xlu0 0
      %386 = vperm.xlu0 %385, %v346
      %v387 = vpop.permute.xlu0 %386
      %390 = vset.pattern.permute.xlu0 0
      %391 = vperm.xlu0 %390, %v347
      %v392 = vpop.permute.xlu0 %391
      %395 = vset.pattern.permute.xlu0 0
      %396 = vperm.xlu0 %395, %v348
      %v397 = vpop.permute.xlu0 %396
      %400 = vset.pattern.permute.xlu0 0
      %401 = vperm.xlu0 %400, %v349
      %v402 = vpop.permute.xlu0 %401
      %405 = vset.pattern.permute.xlu0 0
      %406 = vperm.xlu0 %405, %v350
      %v407 = vpop.permute.xlu0 %406
      %410 = vset.pattern.permute.xlu0 0
      %411 = vperm.xlu0 %410, %v351
      %v412 = vpop.permute.xlu0 %411
      %415 = vset.pattern.permute.xlu0 0
      %416 = vperm.xlu0 %415, %v352
      %v417 = vpop.permute.xlu0 %416
      %420 = vset.pattern.permute.xlu0 0
      %421 = vperm.xlu0 %420, %v353
      %v422 = vpop.permute.xlu0 %421
      %425 = vset.pattern.permute.xlu0 0
      %426 = vperm.xlu0 %425, %v354
      %v427 = vpop.permute.xlu0 %426
      %430 = vset.pattern.permute.xlu0 0
      %431 = vperm.xlu0 %430, %v355
      %v432 = vpop.permute.xlu0 %431
      %435 = vset.pattern.permute.xlu0 0
      %436 = vperm.xlu0 %435, %v356
      %v437 = vpop.permute.xlu0 %436
      %v439 = vlaneseq
      %v440 = vshrl.u32 %v439, 7
      %v441 = vsub.s32 0, %v440
      %v442 = vrot.slane %v357, %v441
      %v443 = vmul.f32 %v362, %v442
      %v444 = vmul.f32 %v367, %v442
      %v445 = vmul.f32 %v372, %v442
      %v446 = vmul.f32 %v377, %v442
      %v447 = vmul.f32 %v382, %v442
      %v448 = vmul.f32 %v387, %v442
      %v449 = vmul.f32 %v392, %v442
      %v450 = vmul.f32 %v397, %v442
      %v451 = vmul.f32 %v402, %v442
      %v452 = vmul.f32 %v407, %v442
      %v453 = vmul.f32 %v412, %v442
      %v454 = vmul.f32 %v417, %v442
      %v455 = vmul.f32 %v422, %v442
      %v456 = vmul.f32 %v427, %v442
      %v457 = vmul.f32 %v432, %v442
      %v458 = vmul.f32 %v437, %v442
      %v459 = vadd.f32 %v443, 0.0
      %v460 = vadd.f32 %v444, 0.0
      %v461 = vadd.f32 %v445, 0.0
      %v462 = vadd.f32 %v446, 0.0
      %v463 = vadd.f32 %v447, 0.0
      %v464 = vadd.f32 %v448, 0.0
      %v465 = vadd.f32 %v449, 0.0
      %v466 = vadd.f32 %v450, 0.0
      %v467 = vadd.f32 %v451, 0.0
      %v468 = vadd.f32 %v452, 0.0
      %v469 = vadd.f32 %v453, 0.0
      %v470 = vadd.f32 %v454, 0.0
      %v471 = vadd.f32 %v455, 0.0
      %v472 = vadd.f32 %v456, 0.0
      %v473 = vadd.f32 %v457, 0.0
      %v474 = vadd.f32 %v458, 0.0
      %475 = vset.pattern.permute.xlu0 1
      %476 = vperm.xlu0 %475, %v341
      %v477 = vpop.permute.xlu0 %476
      %479 = vset.pattern.permute.xlu0 1
      %480 = vperm.xlu0 %479, %v342
      %v481 = vpop.permute.xlu0 %480
      %483 = vset.pattern.permute.xlu0 1
      %484 = vperm.xlu0 %483, %v343
      %v485 = vpop.permute.xlu0 %484
      %487 = vset.pattern.permute.xlu0 1
      %488 = vperm.xlu0 %487, %v344
      %v489 = vpop.permute.xlu0 %488
      %491 = vset.pattern.permute.xlu0 1
      %492 = vperm.xlu0 %491, %v345
      %v493 = vpop.permute.xlu0 %492
      %495 = vset.pattern.permute.xlu0 1
      %496 = vperm.xlu0 %495, %v346
      %v497 = vpop.permute.xlu0 %496
      %499 = vset.pattern.permute.xlu0 1
      %500 = vperm.xlu0 %499, %v347
      %v501 = vpop.permute.xlu0 %500
      %503 = vset.pattern.permute.xlu0 1
      %504 = vperm.xlu0 %503, %v348
      %v505 = vpop.permute.xlu0 %504
      %507 = vset.pattern.permute.xlu0 1
      %508 = vperm.xlu0 %507, %v349
      %v509 = vpop.permute.xlu0 %508
      %511 = vset.pattern.permute.xlu0 1
      %512 = vperm.xlu0 %511, %v350
      %v513 = vpop.permute.xlu0 %512
      %515 = vset.pattern.permute.xlu0 1
      %516 = vperm.xlu0 %515, %v351
      %v517 = vpop.permute.xlu0 %516
      %519 = vset.pattern.permute.xlu0 1
      %520 = vperm.xlu0 %519, %v352
      %v521 = vpop.permute.xlu0 %520
      %523 = vset.pattern.permute.xlu0 1
      %524 = vperm.xlu0 %523, %v353
      %v525 = vpop.permute.xlu0 %524
      %527 = vset.pattern.permute.xlu0 1
      %528 = vperm.xlu0 %527, %v354
      %v529 = vpop.permute.xlu0 %528
      %531 = vset.pattern.permute.xlu0 1
      %532 = vperm.xlu0 %531, %v355
      %v533 = vpop.permute.xlu0 %532
      %535 = vset.pattern.permute.xlu0 1
      %536 = vperm.xlu0 %535, %v356
      %v537 = vpop.permute.xlu0 %536
      %v539 = vlaneseq
      %v540 = vshrl.u32 %v539, 7
      %v541 = vsub.s32 1, %v540
      %v542 = vrot.slane %v357, %v541
      %v543 = vmul.f32 %v477, %v542
      %v544 = vmul.f32 %v481, %v542
      %v545 = vmul.f32 %v485, %v542
      %v546 = vmul.f32 %v489, %v542
      %v547 = vmul.f32 %v493, %v542
      %v548 = vmul.f32 %v497, %v542
      %v549 = vmul.f32 %v501, %v542
      %v550 = vmul.f32 %v505, %v542
      %v551 = vmul.f32 %v509, %v542
      %v552 = vmul.f32 %v513, %v542
      %v553 = vmul.f32 %v517, %v542
      %v554 = vmul.f32 %v521, %v542
      %v555 = vmul.f32 %v525, %v542
      %v556 = vmul.f32 %v529, %v542
      %v557 = vmul.f32 %v533, %v542
      %v558 = vmul.f32 %v537, %v542
      %v559 = vadd.f32 %v459, %v543
      %v560 = vadd.f32 %v460, %v544
      %v561 = vadd.f32 %v461, %v545
      %v562 = vadd.f32 %v462, %v546
      %v563 = vadd.f32 %v463, %v547
      %v564 = vadd.f32 %v464, %v548
      %v565 = vadd.f32 %v465, %v549
      %v566 = vadd.f32 %v466, %v550
      %v567 = vadd.f32 %v467, %v551
      %v568 = vadd.f32 %v468, %v552
      %v569 = vadd.f32 %v469, %v553
      %v570 = vadd.f32 %v470, %v554
      %v571 = vadd.f32 %v471, %v555
      %v572 = vadd.f32 %v472, %v556
      %v573 = vadd.f32 %v473, %v557
      %v574 = vadd.f32 %v474, %v558
      %575 = vset.pattern.permute.xlu0 2
      %576 = vperm.xlu0 %575, %v341
      %v577 = vpop.permute.xlu0 %576
      %579 = vset.pattern.permute.xlu0 2
      %580 = vperm.xlu0 %579, %v342
      %v581 = vpop.permute.xlu0 %580
      %583 = vset.pattern.permute.xlu0 2
      %584 = vperm.xlu0 %583, %v343
      %v585 = vpop.permute.xlu0 %584
      %587 = vset.pattern.permute.xlu0 2
      %588 = vperm.xlu0 %587, %v344
      %v589 = vpop.permute.xlu0 %588
      %591 = vset.pattern.permute.xlu0 2
      %592 = vperm.xlu0 %591, %v345
      %v593 = vpop.permute.xlu0 %592
      %595 = vset.pattern.permute.xlu0 2
      %596 = vperm.xlu0 %595, %v346
      %v597 = vpop.permute.xlu0 %596
      %599 = vset.pattern.permute.xlu0 2
      %600 = vperm.xlu0 %599, %v347
      %v601 = vpop.permute.xlu0 %600
      %603 = vset.pattern.permute.xlu0 2
      %604 = vperm.xlu0 %603, %v348
      %v605 = vpop.permute.xlu0 %604
      %607 = vset.pattern.permute.xlu0 2
      %608 = vperm.xlu0 %607, %v349
      %v609 = vpop.permute.xlu0 %608
      %611 = vset.pattern.permute.xlu0 2
      %612 = vperm.xlu0 %611, %v350
      %v613 = vpop.permute.xlu0 %612
      %615 = vset.pattern.permute.xlu0 2
      %616 = vperm.xlu0 %615, %v351
      %v617 = vpop.permute.xlu0 %616
      %619 = vset.pattern.permute.xlu0 2
      %620 = vperm.xlu0 %619, %v352
      %v621 = vpop.permute.xlu0 %620
      %623 = vset.pattern.permute.xlu0 2
      %624 = vperm.xlu0 %623, %v353
      %v625 = vpop.permute.xlu0 %624
      %627 = vset.pattern.permute.xlu0 2
      %628 = vperm.xlu0 %627, %v354
      %v629 = vpop.permute.xlu0 %628
      %631 = vset.pattern.permute.xlu0 2
      %632 = vperm.xlu0 %631, %v355
      %v633 = vpop.permute.xlu0 %632
      %635 = vset.pattern.permute.xlu0 2
      %636 = vperm.xlu0 %635, %v356
      %v637 = vpop.permute.xlu0 %636
      %v639 = vlaneseq
      %v640 = vshrl.u32 %v639, 7
      %v641 = vsub.s32 2, %v640
      %v642 = vrot.slane %v357, %v641
      %v643 = vmul.f32 %v577, %v642
      %v644 = vmul.f32 %v581, %v642
      %v645 = vmul.f32 %v585, %v642
      %v646 = vmul.f32 %v589, %v642
      %v647 = vmul.f32 %v593, %v642
      %v648 = vmul.f32 %v597, %v642
      %v649 = vmul.f32 %v601, %v642
      %v650 = vmul.f32 %v605, %v642
      %v651 = vmul.f32 %v609, %v642
      %v652 = vmul.f32 %v613, %v642
      %v653 = vmul.f32 %v617, %v642
      %v654 = vmul.f32 %v621, %v642
      %v655 = vmul.f32 %v625, %v642
      %v656 = vmul.f32 %v629, %v642
      %v657 = vmul.f32 %v633, %v642
      %v658 = vmul.f32 %v637, %v642
      %v659 = vadd.f32 %v559, %v643
      %v660 = vadd.f32 %v560, %v644
      %v661 = vadd.f32 %v561, %v645
      %v662 = vadd.f32 %v562, %v646
      %v663 = vadd.f32 %v563, %v647
      %v664 = vadd.f32 %v564, %v648
      %v665 = vadd.f32 %v565, %v649
      %v666 = vadd.f32 %v566, %v650
      %v667 = vadd.f32 %v567, %v651
      %v668 = vadd.f32 %v568, %v652
      %v669 = vadd.f32 %v569, %v653
      %v670 = vadd.f32 %v570, %v654
      %v671 = vadd.f32 %v571, %v655
      %v672 = vadd.f32 %v572, %v656
      %v673 = vadd.f32 %v573, %v657
      %v674 = vadd.f32 %v574, %v658
      %675 = vset.pattern.permute.xlu0 3
      %676 = vperm.xlu0 %675, %v341
      %v677 = vpop.permute.xlu0 %676
      %679 = vset.pattern.permute.xlu0 3
      %680 = vperm.xlu0 %679, %v342
      %v681 = vpop.permute.xlu0 %680
      %683 = vset.pattern.permute.xlu0 3
      %684 = vperm.xlu0 %683, %v343
      %v685 = vpop.permute.xlu0 %684
      %687 = vset.pattern.permute.xlu0 3
      %688 = vperm.xlu0 %687, %v344
      %v689 = vpop.permute.xlu0 %688
      %691 = vset.pattern.permute.xlu0 3
      %692 = vperm.xlu0 %691, %v345
      %v693 = vpop.permute.xlu0 %692
      %695 = vset.pattern.permute.xlu0 3
      %696 = vperm.xlu0 %695, %v346
      %v697 = vpop.permute.xlu0 %696
      %699 = vset.pattern.permute.xlu0 3
      %700 = vperm.xlu0 %699, %v347
      %v701 = vpop.permute.xlu0 %700
      %703 = vset.pattern.permute.xlu0 3
      %704 = vperm.xlu0 %703, %v348
      %v705 = vpop.permute.xlu0 %704
      %707 = vset.pattern.permute.xlu0 3
      %708 = vperm.xlu0 %707, %v349
      %v709 = vpop.permute.xlu0 %708
      %711 = vset.pattern.permute.xlu0 3
      %712 = vperm.xlu0 %711, %v350
      %v713 = vpop.permute.xlu0 %712
      %715 = vset.pattern.permute.xlu0 3
      %716 = vperm.xlu0 %715, %v351
      %v717 = vpop.permute.xlu0 %716
      %719 = vset.pattern.permute.xlu0 3
      %720 = vperm.xlu0 %719, %v352
      %v721 = vpop.permute.xlu0 %720
      %723 = vset.pattern.permute.xlu0 3
      %724 = vperm.xlu0 %723, %v353
      %v725 = vpop.permute.xlu0 %724
      %727 = vset.pattern.permute.xlu0 3
      %728 = vperm.xlu0 %727, %v354
      %v729 = vpop.permute.xlu0 %728
      %731 = vset.pattern.permute.xlu0 3
      %732 = vperm.xlu0 %731, %v355
      %v733 = vpop.permute.xlu0 %732
      %735 = vset.pattern.permute.xlu0 3
      %736 = vperm.xlu0 %735, %v356
      %v737 = vpop.permute.xlu0 %736
      %v739 = vlaneseq
      %v740 = vshrl.u32 %v739, 7
      %v741 = vsub.s32 3, %v740
      %v742 = vrot.slane %v357, %v741
      %v743 = vmul.f32 %v677, %v742
      %v744 = vmul.f32 %v681, %v742
      %v745 = vmul.f32 %v685, %v742
      %v746 = vmul.f32 %v689, %v742
      %v747 = vmul.f32 %v693, %v742
      %v748 = vmul.f32 %v697, %v742
      %v749 = vmul.f32 %v701, %v742
      %v750 = vmul.f32 %v705, %v742
      %v751 = vmul.f32 %v709, %v742
      %v752 = vmul.f32 %v713, %v742
      %v753 = vmul.f32 %v717, %v742
      %v754 = vmul.f32 %v721, %v742
      %v755 = vmul.f32 %v725, %v742
      %v756 = vmul.f32 %v729, %v742
      %v757 = vmul.f32 %v733, %v742
      %v758 = vmul.f32 %v737, %v742
      %v759 = vadd.f32 %v659, %v743
      %v760 = vadd.f32 %v660, %v744
      %v761 = vadd.f32 %v661, %v745
      %v762 = vadd.f32 %v662, %v746
      %v763 = vadd.f32 %v663, %v747
      %v764 = vadd.f32 %v664, %v748
      %v765 = vadd.f32 %v665, %v749
      %v766 = vadd.f32 %v666, %v750
      %v767 = vadd.f32 %v667, %v751
      %v768 = vadd.f32 %v668, %v752
      %v769 = vadd.f32 %v669, %v753
      %v770 = vadd.f32 %v670, %v754
      %v771 = vadd.f32 %v671, %v755
      %v772 = vadd.f32 %v672, %v756
      %v773 = vadd.f32 %v673, %v757
      %v774 = vadd.f32 %v674, %v758
      %v776 = vlaneseq
      %v777 = vshrl.u32 %v776, 7
      %v778 = vsub.s32 0, %v777
      %v779 = vrot.slane %v358, %v778
      %v781 = vadd.f32 %v759, %v779
      %v782 = vadd.f32 %v760, %v779
      %v783 = vadd.f32 %v761, %v779
      %v784 = vadd.f32 %v762, %v779
      %v785 = vadd.f32 %v763, %v779
      %v786 = vadd.f32 %v764, %v779
      %v787 = vadd.f32 %v765, %v779
      %v788 = vadd.f32 %v766, %v779
      %v789 = vadd.f32 %v767, %v779
      %v790 = vadd.f32 %v768, %v779
      %v791 = vadd.f32 %v769, %v779
      %v792 = vadd.f32 %v770, %v779
      %v793 = vadd.f32 %v771, %v779
      %v794 = vadd.f32 %v772, %v779
      %v795 = vadd.f32 %v773, %v779
      %v796 = vadd.f32 %v774, %v779
      %v797 = vld [vmem:[%s7] sm:$0xff]
      %v798 = vld [vmem:[%s7 + $0x8] sm:$0xff]
      %v799 = vld [vmem:[%s7 + $0x10] sm:$0xff]
      %v800 = vld [vmem:[%s7 + $0x18] sm:$0xff]
      %v801 = vld [vmem:[%s7 + $0x20] sm:$0xff]
      %v802 = vld [vmem:[%s7 + $0x28] sm:$0xff]
      %v803 = vld [vmem:[%s7 + $0x30] sm:$0xff]
      %v804 = vld [vmem:[%s7 + $0x38] sm:$0xff]
      %s805 = scalar_lea.vmem %s7, 64
      %v806 = vld [vmem:[%s805] sm:$0xff]
      %v807 = vld [vmem:[%s805 + $0x8] sm:$0xff]
      %v808 = vld [vmem:[%s805 + $0x10] sm:$0xff]
      %v809 = vld [vmem:[%s805 + $0x18] sm:$0xff]
      %v810 = vld [vmem:[%s805 + $0x20] sm:$0xff]
      %v811 = vld [vmem:[%s805 + $0x28] sm:$0xff]
      %v812 = vld [vmem:[%s805 + $0x30] sm:$0xff]
      %v813 = vld [vmem:[%s805 + $0x38] sm:$0xff]
      %vm814 = vcmask 64512
      %v815 = vsel %vm814, %v781, 0.0
      %816 = vadd.xlane.f32.xlu0 %v815
      %v817 = vpop.xlane.xlu0 %816
      %v818 = vsel %vm814, %v782, 0.0
      %819 = vadd.xlane.f32.xlu0 %v818
      %v820 = vpop.xlane.xlu0 %819
      %v821 = vsel %vm814, %v783, 0.0
      %822 = vadd.xlane.f32.xlu0 %v821
      %v823 = vpop.xlane.xlu0 %822
      %v824 = vsel %vm814, %v784, 0.0
      %825 = vadd.xlane.f32.xlu0 %v824
      %v826 = vpop.xlane.xlu0 %825
      %v827 = vsel %vm814, %v785, 0.0
      %828 = vadd.xlane.f32.xlu0 %v827
      %v829 = vpop.xlane.xlu0 %828
      %v830 = vsel %vm814, %v786, 0.0
      %831 = vadd.xlane.f32.xlu0 %v830
      %v832 = vpop.xlane.xlu0 %831
      %v833 = vsel %vm814, %v787, 0.0
      %834 = vadd.xlane.f32.xlu0 %v833
      %v835 = vpop.xlane.xlu0 %834
      %v836 = vsel %vm814, %v788, 0.0
      %837 = vadd.xlane.f32.xlu0 %v836
      %v838 = vpop.xlane.xlu0 %837
      %v839 = vsel %vm814, %v789, 0.0
      %840 = vadd.xlane.f32.xlu0 %v839
      %v841 = vpop.xlane.xlu0 %840
      %v842 = vsel %vm814, %v790, 0.0
      %843 = vadd.xlane.f32.xlu0 %v842
      %v844 = vpop.xlane.xlu0 %843
      %v845 = vsel %vm814, %v791, 0.0
      %846 = vadd.xlane.f32.xlu0 %v845
      %v847 = vpop.xlane.xlu0 %846
      %v848 = vsel %vm814, %v792, 0.0
      %849 = vadd.xlane.f32.xlu0 %v848
      %v850 = vpop.xlane.xlu0 %849
      %v851 = vsel %vm814, %v793, 0.0
      %852 = vadd.xlane.f32.xlu0 %v851
      %v853 = vpop.xlane.xlu0 %852
      %v854 = vsel %vm814, %v794, 0.0
      %855 = vadd.xlane.f32.xlu0 %v854
      %v856 = vpop.xlane.xlu0 %855
      %v857 = vsel %vm814, %v795, 0.0
      %858 = vadd.xlane.f32.xlu0 %v857
      %v859 = vpop.xlane.xlu0 %858
      %v860 = vsel %vm814, %v796, 0.0
      %861 = vadd.xlane.f32.xlu0 %v860
      %v862 = vpop.xlane.xlu0 %861
      %v863 = vrcp.pop 8.0
      %v864 = vmul.f32 %v817, %v863
      %v865 = vmul.f32 %v820, %v863
      %v866 = vmul.f32 %v823, %v863
      %v867 = vmul.f32 %v826, %v863
      %v868 = vmul.f32 %v829, %v863
      %v869 = vmul.f32 %v832, %v863
      %v870 = vmul.f32 %v835, %v863
      %v871 = vmul.f32 %v838, %v863
      %v872 = vmul.f32 %v841, %v863
      %v873 = vmul.f32 %v844, %v863
      %v874 = vmul.f32 %v847, %v863
      %v875 = vmul.f32 %v850, %v863
      %v876 = vmul.f32 %v853, %v863
      %v877 = vmul.f32 %v856, %v863
      %v878 = vmul.f32 %v859, %v863
      %v879 = vmul.f32 %v862, %v863
      %v880 = vadd.f32 %v864, %v865
      %v881 = vadd.f32 %v880, %v866
      %v882 = vadd.f32 %v881, %v867
      %v883 = vadd.f32 %v882, %v868
      %v884 = vadd.f32 %v883, %v869
      %v885 = vadd.f32 %v884, %v870
      %v886 = vadd.f32 %v885, %v871
      %v887 = vrot.slane %v886, 4
      %v888 = vadd.f32 %v886, %v887
      %v889 = vrot.slane %v888, 2
      %v890 = vadd.f32 %v888, %v889
      %v891 = vrot.slane %v890, 1
      %v892 = vadd.f32 %v890, %v891
      %v893 = vadd.f32 %v872, %v873
      %v894 = vadd.f32 %v893, %v874
      %v895 = vadd.f32 %v894, %v875
      %v896 = vadd.f32 %v895, %v876
      %v897 = vadd.f32 %v896, %v877
      %v898 = vadd.f32 %v897, %v878
      %v899 = vadd.f32 %v898, %v879
      %v900 = vrot.slane %v899, 4
      %v901 = vadd.f32 %v899, %v900
      %v902 = vrot.slane %v901, 2
      %v903 = vadd.f32 %v901, %v902
      %v904 = vrot.slane %v903, 1
      %v905 = vadd.f32 %v903, %v904
      %v906 = vrcp.pop 64.0
      %v907 = vmul.f32 %v892, %v906
      %v908 = vmul.f32 %v905, %v906
      %v909 = vsub.f32 %v781, %v907
      %v910 = vsub.f32 %v782, %v907
      %v911 = vsub.f32 %v783, %v907
      %v912 = vsub.f32 %v784, %v907
      %v913 = vsub.f32 %v785, %v907
      %v914 = vsub.f32 %v786, %v907
      %v915 = vsub.f32 %v787, %v907
      %v916 = vsub.f32 %v788, %v907
      %v917 = vsub.f32 %v789, %v908
      %v918 = vsub.f32 %v790, %v908
      %v919 = vsub.f32 %v791, %v908
      %v920 = vsub.f32 %v792, %v908
      %v921 = vsub.f32 %v793, %v908
      %v922 = vsub.f32 %v794, %v908
      %v923 = vsub.f32 %v795, %v908
      %v924 = vsub.f32 %v796, %v908
      %v925 = vmul.f32 %v909, %v909
      %v926 = vmul.f32 %v910, %v910
      %v927 = vmul.f32 %v911, %v911
      %v928 = vmul.f32 %v912, %v912
      %v929 = vmul.f32 %v913, %v913
      %v930 = vmul.f32 %v914, %v914
      %v931 = vmul.f32 %v915, %v915
      %v932 = vmul.f32 %v916, %v916
      %v933 = vmul.f32 %v917, %v917
      %v934 = vmul.f32 %v918, %v918
      %v935 = vmul.f32 %v919, %v919
      %v936 = vmul.f32 %v920, %v920
      %v937 = vmul.f32 %v921, %v921
      %v938 = vmul.f32 %v922, %v922
      %v939 = vmul.f32 %v923, %v923
      %v940 = vmul.f32 %v924, %v924
      %v941 = vsel %vm814, %v925, 0.0
      %942 = vadd.xlane.f32.xlu0 %v941
      %v943 = vpop.xlane.xlu0 %942
      %v944 = vsel %vm814, %v926, 0.0
      %945 = vadd.xlane.f32.xlu0 %v944
      %v946 = vpop.xlane.xlu0 %945
      %v947 = vsel %vm814, %v927, 0.0
      %948 = vadd.xlane.f32.xlu0 %v947
      %v949 = vpop.xlane.xlu0 %948
      %v950 = vsel %vm814, %v928, 0.0
      %951 = vadd.xlane.f32.xlu0 %v950
      %v952 = vpop.xlane.xlu0 %951
      %v953 = vsel %vm814, %v929, 0.0
      %954 = vadd.xlane.f32.xlu0 %v953
      %v955 = vpop.xlane.xlu0 %954
      %v956 = vsel %vm814, %v930, 0.0
      %957 = vadd.xlane.f32.xlu0 %v956
      %v958 = vpop.xlane.xlu0 %957
      %v959 = vsel %vm814, %v931, 0.0
      %960 = vadd.xlane.f32.xlu0 %v959
      %v961 = vpop.xlane.xlu0 %960
      %v962 = vsel %vm814, %v932, 0.0
      %963 = vadd.xlane.f32.xlu0 %v962
      %v964 = vpop.xlane.xlu0 %963
      %v965 = vsel %vm814, %v933, 0.0
      %966 = vadd.xlane.f32.xlu0 %v965
      %v967 = vpop.xlane.xlu0 %966
      %v968 = vsel %vm814, %v934, 0.0
      %969 = vadd.xlane.f32.xlu0 %v968
      %v970 = vpop.xlane.xlu0 %969
      %v971 = vsel %vm814, %v935, 0.0
      %972 = vadd.xlane.f32.xlu0 %v971
      %v973 = vpop.xlane.xlu0 %972
      %v974 = vsel %vm814, %v936, 0.0
      %975 = vadd.xlane.f32.xlu0 %v974
      %v976 = vpop.xlane.xlu0 %975
      %v977 = vsel %vm814, %v937, 0.0
      %978 = vadd.xlane.f32.xlu0 %v977
      %v979 = vpop.xlane.xlu0 %978
      %v980 = vsel %vm814, %v938, 0.0
      %981 = vadd.xlane.f32.xlu0 %v980
      %v982 = vpop.xlane.xlu0 %981
      %v983 = vsel %vm814, %v939, 0.0
      %984 = vadd.xlane.f32.xlu0 %v983
      %v985 = vpop.xlane.xlu0 %984
      %v986 = vsel %vm814, %v940, 0.0
      %987 = vadd.xlane.f32.xlu0 %v986
      %v988 = vpop.xlane.xlu0 %987
      %v989 = vmul.f32 %v943, %v863
      %v990 = vmul.f32 %v946, %v863
      %v991 = vmul.f32 %v949, %v863
      %v992 = vmul.f32 %v952, %v863
      %v993 = vmul.f32 %v955, %v863
      %v994 = vmul.f32 %v958, %v863
      %v995 = vmul.f32 %v961, %v863
      %v996 = vmul.f32 %v964, %v863
      %v997 = vmul.f32 %v967, %v863
      %v998 = vmul.f32 %v970, %v863
      %v999 = vmul.f32 %v973, %v863
      %v1000 = vmul.f32 %v976, %v863
      %v1001 = vmul.f32 %v979, %v863
      %v1002 = vmul.f32 %v982, %v863
      %v1003 = vmul.f32 %v985, %v863
      %v1004 = vmul.f32 %v988, %v863
      %v1005 = vadd.f32 %v989, %v990
      %v1006 = vadd.f32 %v1005, %v991
      %v1007 = vadd.f32 %v1006, %v992
      %v1008 = vadd.f32 %v1007, %v993
      %v1009 = vadd.f32 %v1008, %v994
      %v1010 = vadd.f32 %v1009, %v995
      %v1011 = vadd.f32 %v1010, %v996
      %v1012 = vrot.slane %v1011, 4
      %v1013 = vadd.f32 %v1011, %v1012
      %v1014 = vrot.slane %v1013, 2
      %v1015 = vadd.f32 %v1013, %v1014
      %v1016 = vrot.slane %v1015, 1
      %v1017 = vadd.f32 %v1015, %v1016
      %v1018 = vadd.f32 %v997, %v998
      %v1019 = vadd.f32 %v1018, %v999
      %v1020 = vadd.f32 %v1019, %v1000
      %v1021 = vadd.f32 %v1020, %v1001
      %v1022 = vadd.f32 %v1021, %v1002
      %v1023 = vadd.f32 %v1022, %v1003
      %v1024 = vadd.f32 %v1023, %v1004
      %v1025 = vrot.slane %v1024, 4
      %v1026 = vadd.f32 %v1024, %v1025
      %v1027 = vrot.slane %v1026, 2
      %v1028 = vadd.f32 %v1026, %v1027
      %v1029 = vrot.slane %v1028, 1
      %v1030 = vadd.f32 %v1028, %v1029
      %v1031 = vmul.f32 %v1017, %v906
      %v1032 = vmul.f32 %v1030, %v906
      %v1033 = vadd.f32 %v1031, 1e-05
      %v1034 = vadd.f32 %v1032, 1e-05
      %v1035 = vrsqrt.pop %v1033
      %v1036 = vrsqrt.pop %v1034
      %v1037 = vmul.f32 %v909, %v1035
      %v1038 = vmul.f32 %v910, %v1035
      %v1039 = vmul.f32 %v911, %v1035
      %v1040 = vmul.f32 %v912, %v1035
      %v1041 = vmul.f32 %v913, %v1035
      %v1042 = vmul.f32 %v914, %v1035
      %v1043 = vmul.f32 %v915, %v1035
      %v1044 = vmul.f32 %v916, %v1035
      %v1045 = vmul.f32 %v917, %v1036
      %v1046 = vmul.f32 %v918, %v1036
      %v1047 = vmul.f32 %v919, %v1036
      %v1048 = vmul.f32 %v920, %v1036
      %v1049 = vmul.f32 %v921, %v1036
      %v1050 = vmul.f32 %v922, %v1036
      %v1051 = vmul.f32 %v923, %v1036
      %v1052 = vmul.f32 %v924, %v1036
      %v1053 = vmul.f32 %v1037, %v797
      %v1054 = vmul.f32 %v1038, %v798
      %v1055 = vmul.f32 %v1039, %v799
      %v1056 = vmul.f32 %v1040, %v800
      %v1057 = vmul.f32 %v1041, %v801
      %v1058 = vmul.f32 %v1042, %v802
      %v1059 = vmul.f32 %v1043, %v803
      %v1060 = vmul.f32 %v1044, %v804
      %v1061 = vmul.f32 %v1045, %v797
      %v1062 = vmul.f32 %v1046, %v798
      %v1063 = vmul.f32 %v1047, %v799
      %v1064 = vmul.f32 %v1048, %v800
      %v1065 = vmul.f32 %v1049, %v801
      %v1066 = vmul.f32 %v1050, %v802
      %v1067 = vmul.f32 %v1051, %v803
      %v1068 = vmul.f32 %v1052, %v804
      %v1069 = vadd.f32 %v1053, %v806
      %v1070 = vadd.f32 %v1054, %v807
      %v1071 = vadd.f32 %v1055, %v808
      %v1072 = vadd.f32 %v1056, %v809
      %v1073 = vadd.f32 %v1057, %v810
      %v1074 = vadd.f32 %v1058, %v811
      %v1075 = vadd.f32 %v1059, %v812
      %v1076 = vadd.f32 %v1060, %v813
      %v1077 = vadd.f32 %v1061, %v806
      %v1078 = vadd.f32 %v1062, %v807
      %v1079 = vadd.f32 %v1063, %v808
      %v1080 = vadd.f32 %v1064, %v809
      %v1081 = vadd.f32 %v1065, %v810
      %v1082 = vadd.f32 %v1066, %v811
      %v1083 = vadd.f32 %v1067, %v812
      %v1084 = vadd.f32 %v1068, %v813
      %v1085 = vmul.f32 %v1069, 0.5
      %v1086 = vmul.f32 %v1070, 0.5
      %v1087 = vmul.f32 %v1071, 0.5
      %v1088 = vmul.f32 %v1072, 0.5
      %v1089 = vmul.f32 %v1073, 0.5
      %v1090 = vmul.f32 %v1074, 0.5
      %v1091 = vmul.f32 %v1075, 0.5
      %v1092 = vmul.f32 %v1076, 0.5
      %v1093 = vmul.f32 %v1077, 0.5
      %v1094 = vmul.f32 %v1078, 0.5
      %v1095 = vmul.f32 %v1079, 0.5
      %v1096 = vmul.f32 %v1080, 0.5
      %v1097 = vmul.f32 %v1081, 0.5
      %v1098 = vmul.f32 %v1082, 0.5
      %v1099 = vmul.f32 %v1083, 0.5
      %v1100 = vmul.f32 %v1084, 0.5
      %v1101 = vmul.f32 %v1069, 0.70710677
      %v1102 = vmul.f32 %v1070, 0.70710677
      %v1103 = vmul.f32 %v1071, 0.70710677
      %v1104 = vmul.f32 %v1072, 0.70710677
      %v1105 = vmul.f32 %v1073, 0.70710677
      %v1106 = vmul.f32 %v1074, 0.70710677
      %v1107 = vmul.f32 %v1075, 0.70710677
      %v1108 = vmul.f32 %v1076, 0.70710677
      %v1109 = vmul.f32 %v1077, 0.70710677
      %v1110 = vmul.f32 %v1078, 0.70710677
      %v1111 = vmul.f32 %v1079, 0.70710677
      %v1112 = vmul.f32 %v1080, 0.70710677
      %v1113 = vmul.f32 %v1081, 0.70710677
      %v1114 = vmul.f32 %v1082, 0.70710677
      %v1115 = vmul.f32 %v1083, 0.70710677
      %v1116 = vmul.f32 %v1084, 0.70710677
      %vm1117 = vcmp.ge.f32.partialorder %v1101, 0.0
      %vm1118 = vcmp.ge.f32.partialorder %v1102, 0.0
      %vm1119 = vcmp.ge.f32.partialorder %v1103, 0.0
      %vm1120 = vcmp.ge.f32.partialorder %v1104, 0.0
      %vm1121 = vcmp.ge.f32.partialorder %v1105, 0.0
      %vm1122 = vcmp.ge.f32.partialorder %v1106, 0.0
      %vm1123 = vcmp.ge.f32.partialorder %v1107, 0.0
      %vm1124 = vcmp.ge.f32.partialorder %v1108, 0.0
      %vm1125 = vcmp.ge.f32.partialorder %v1109, 0.0
      %vm1126 = vcmp.ge.f32.partialorder %v1110, 0.0
      %vm1127 = vcmp.ge.f32.partialorder %v1111, 0.0
      %vm1128 = vcmp.ge.f32.partialorder %v1112, 0.0
      %vm1129 = vcmp.ge.f32.partialorder %v1113, 0.0
      %vm1130 = vcmp.ge.f32.partialorder %v1114, 0.0
      %vm1131 = vcmp.ge.f32.partialorder %v1115, 0.0
      %vm1132 = vcmp.ge.f32.partialorder %v1116, 0.0
      %v1133 = vsel %vm1117, 1.0, -1.0
      %v1134 = vsel %vm1118, 1.0, -1.0
      %v1135 = vsel %vm1119, 1.0, -1.0
      %v1136 = vsel %vm1120, 1.0, -1.0
      %v1137 = vsel %vm1121, 1.0, -1.0
      %v1138 = vsel %vm1122, 1.0, -1.0
      %v1139 = vsel %vm1123, 1.0, -1.0
      %v1140 = vsel %vm1124, 1.0, -1.0
      %v1141 = vsel %vm1125, 1.0, -1.0
      %v1142 = vsel %vm1126, 1.0, -1.0
      %v1143 = vsel %vm1127, 1.0, -1.0
      %v1144 = vsel %vm1128, 1.0, -1.0
      %v1145 = vsel %vm1129, 1.0, -1.0
      %v1146 = vsel %vm1130, 1.0, -1.0
      %v1147 = vsel %vm1131, 1.0, -1.0
      %v1148 = vsel %vm1132, 1.0, -1.0
      %v1149 = vand.u32 2147483647, %v1101
      %v1150 = vand.u32 2147483647, %v1102
      %v1151 = vand.u32 2147483647, %v1103
      %v1152 = vand.u32 2147483647, %v1104
      %v1153 = vand.u32 2147483647, %v1105
      %v1154 = vand.u32 2147483647, %v1106
      %v1155 = vand.u32 2147483647, %v1107
      %v1156 = vand.u32 2147483647, %v1108
      %v1157 = vand.u32 2147483647, %v1109
      %v1158 = vand.u32 2147483647, %v1110
      %v1159 = vand.u32 2147483647, %v1111
      %v1160 = vand.u32 2147483647, %v1112
      %v1161 = vand.u32 2147483647, %v1113
      %v1162 = vand.u32 2147483647, %v1114
      %v1163 = vand.u32 2147483647, %v1115
      %v1164 = vand.u32 2147483647, %v1116
      %v1165 = vmul.f32 %v1149, 0.3275911
      %v1166 = vmul.f32 %v1150, 0.3275911
      %v1167 = vmul.f32 %v1151, 0.3275911
      %v1168 = vmul.f32 %v1152, 0.3275911
      %v1169 = vmul.f32 %v1153, 0.3275911
      %v1170 = vmul.f32 %v1154, 0.3275911
      %v1171 = vmul.f32 %v1155, 0.3275911
      %v1172 = vmul.f32 %v1156, 0.3275911
      %v1173 = vmul.f32 %v1157, 0.3275911
      %v1174 = vmul.f32 %v1158, 0.3275911
      %v1175 = vmul.f32 %v1159, 0.3275911
      %v1176 = vmul.f32 %v1160, 0.3275911
      %v1177 = vmul.f32 %v1161, 0.3275911
      %v1178 = vmul.f32 %v1162, 0.3275911
      %v1179 = vmul.f32 %v1163, 0.3275911
      %v1180 = vmul.f32 %v1164, 0.3275911
      %v1181 = vadd.f32 %v1165, 1.0
      %v1182 = vadd.f32 %v1166, 1.0
      %v1183 = vadd.f32 %v1167, 1.0
      %v1184 = vadd.f32 %v1168, 1.0
      %v1185 = vadd.f32 %v1169, 1.0
      %v1186 = vadd.f32 %v1170, 1.0
      %v1187 = vadd.f32 %v1171, 1.0
      %v1188 = vadd.f32 %v1172, 1.0
      %v1189 = vadd.f32 %v1173, 1.0
      %v1190 = vadd.f32 %v1174, 1.0
      %v1191 = vadd.f32 %v1175, 1.0
      %v1192 = vadd.f32 %v1176, 1.0
      %v1193 = vadd.f32 %v1177, 1.0
      %v1194 = vadd.f32 %v1178, 1.0
      %v1195 = vadd.f32 %v1179, 1.0
      %v1196 = vadd.f32 %v1180, 1.0
      %v1197 = vrcp.pop %v1181
      %v1198 = vrcp.pop %v1182
      %v1199 = vrcp.pop %v1183
      %v1200 = vrcp.pop %v1184
      %v1201 = vrcp.pop %v1185
      %v1202 = vrcp.pop %v1186
      %v1203 = vrcp.pop %v1187
      %v1204 = vrcp.pop %v1188
      %v1205 = vrcp.pop %v1189
      %v1206 = vrcp.pop %v1190
      %v1207 = vrcp.pop %v1191
      %v1208 = vrcp.pop %v1192
      %v1209 = vrcp.pop %v1193
      %v1210 = vrcp.pop %v1194
      %v1211 = vrcp.pop %v1195
      %v1212 = vrcp.pop %v1196
      %v1213 = vmul.f32 %v1197, 1.0614054
      %v1214 = vmul.f32 %v1198, 1.0614054
      %v1215 = vmul.f32 %v1199, 1.0614054
      %v1216 = vmul.f32 %v1200, 1.0614054
      %v1217 = vmul.f32 %v1201, 1.0614054
      %v1218 = vmul.f32 %v1202, 1.0614054
      %v1219 = vmul.f32 %v1203, 1.0614054
      %v1220 = vmul.f32 %v1204, 1.0614054
      %v1221 = vmul.f32 %v1205, 1.0614054
      %v1222 = vmul.f32 %v1206, 1.0614054
      %v1223 = vmul.f32 %v1207, 1.0614054
      %v1224 = vmul.f32 %v1208, 1.0614054
      %v1225 = vmul.f32 %v1209, 1.0614054
      %v1226 = vmul.f32 %v1210, 1.0614054
      %v1227 = vmul.f32 %v1211, 1.0614054
      %v1228 = vmul.f32 %v1212, 1.0614054
      %v1229 = vadd.f32 %v1213, -1.4531521
      %v1230 = vadd.f32 %v1214, -1.4531521
      %v1231 = vadd.f32 %v1215, -1.4531521
      %v1232 = vadd.f32 %v1216, -1.4531521
      %v1233 = vadd.f32 %v1217, -1.4531521
      %v1234 = vadd.f32 %v1218, -1.4531521
      %v1235 = vadd.f32 %v1219, -1.4531521
      %v1236 = vadd.f32 %v1220, -1.4531521
      %v1237 = vadd.f32 %v1221, -1.4531521
      %v1238 = vadd.f32 %v1222, -1.4531521
      %v1239 = vadd.f32 %v1223, -1.4531521
      %v1240 = vadd.f32 %v1224, -1.4531521
      %v1241 = vadd.f32 %v1225, -1.4531521
      %v1242 = vadd.f32 %v1226, -1.4531521
      %v1243 = vadd.f32 %v1227, -1.4531521
      %v1244 = vadd.f32 %v1228, -1.4531521
      %v1245 = vmul.f32 %v1229, %v1197
      %v1246 = vmul.f32 %v1230, %v1198
      %v1247 = vmul.f32 %v1231, %v1199
      %v1248 = vmul.f32 %v1232, %v1200
      %v1249 = vmul.f32 %v1233, %v1201
      %v1250 = vmul.f32 %v1234, %v1202
      %v1251 = vmul.f32 %v1235, %v1203
      %v1252 = vmul.f32 %v1236, %v1204
      %v1253 = vmul.f32 %v1237, %v1205
      %v1254 = vmul.f32 %v1238, %v1206
      %v1255 = vmul.f32 %v1239, %v1207
      %v1256 = vmul.f32 %v1240, %v1208
      %v1257 = vmul.f32 %v1241, %v1209
      %v1258 = vmul.f32 %v1242, %v1210
      %v1259 = vmul.f32 %v1243, %v1211
      %v1260 = vmul.f32 %v1244, %v1212
      %v1261 = vadd.f32 %v1245, 1.4214138
      %v1262 = vadd.f32 %v1246, 1.4214138
      %v1263 = vadd.f32 %v1247, 1.4214138
      %v1264 = vadd.f32 %v1248, 1.4214138
      %v1265 = vadd.f32 %v1249, 1.4214138
      %v1266 = vadd.f32 %v1250, 1.4214138
      %v1267 = vadd.f32 %v1251, 1.4214138
      %v1268 = vadd.f32 %v1252, 1.4214138
      %v1269 = vadd.f32 %v1253, 1.4214138
      %v1270 = vadd.f32 %v1254, 1.4214138
      %v1271 = vadd.f32 %v1255, 1.4214138
      %v1272 = vadd.f32 %v1256, 1.4214138
      %v1273 = vadd.f32 %v1257, 1.4214138
      %v1274 = vadd.f32 %v1258, 1.4214138
      %v1275 = vadd.f32 %v1259, 1.4214138
      %v1276 = vadd.f32 %v1260, 1.4214138
      %v1277 = vmul.f32 %v1261, %v1197
      %v1278 = vmul.f32 %v1262, %v1198
      %v1279 = vmul.f32 %v1263, %v1199
      %v1280 = vmul.f32 %v1264, %v1200
      %v1281 = vmul.f32 %v1265, %v1201
      %v1282 = vmul.f32 %v1266, %v1202
      %v1283 = vmul.f32 %v1267, %v1203
      %v1284 = vmul.f32 %v1268, %v1204
      %v1285 = vmul.f32 %v1269, %v1205
      %v1286 = vmul.f32 %v1270, %v1206
      %v1287 = vmul.f32 %v1271, %v1207
      %v1288 = vmul.f32 %v1272, %v1208
      %v1289 = vmul.f32 %v1273, %v1209
      %v1290 = vmul.f32 %v1274, %v1210
      %v1291 = vmul.f32 %v1275, %v1211
      %v1292 = vmul.f32 %v1276, %v1212
      %v1293 = vadd.f32 %v1277, -0.28449672
      %v1294 = vadd.f32 %v1278, -0.28449672
      %v1295 = vadd.f32 %v1279, -0.28449672
      %v1296 = vadd.f32 %v1280, -0.28449672
      %v1297 = vadd.f32 %v1281, -0.28449672
      %v1298 = vadd.f32 %v1282, -0.28449672
      %v1299 = vadd.f32 %v1283, -0.28449672
      %v1300 = vadd.f32 %v1284, -0.28449672
      %v1301 = vadd.f32 %v1285, -0.28449672
      %v1302 = vadd.f32 %v1286, -0.28449672
      %v1303 = vadd.f32 %v1287, -0.28449672
      %v1304 = vadd.f32 %v1288, -0.28449672
      %v1305 = vadd.f32 %v1289, -0.28449672
      %v1306 = vadd.f32 %v1290, -0.28449672
      %v1307 = vadd.f32 %v1291, -0.28449672
      %v1308 = vadd.f32 %v1292, -0.28449672
      %v1309 = vmul.f32 %v1293, %v1197
      %v1310 = vmul.f32 %v1294, %v1198
      %v1311 = vmul.f32 %v1295, %v1199
      %v1312 = vmul.f32 %v1296, %v1200
      %v1313 = vmul.f32 %v1297, %v1201
      %v1314 = vmul.f32 %v1298, %v1202
      %v1315 = vmul.f32 %v1299, %v1203
      %v1316 = vmul.f32 %v1300, %v1204
      %v1317 = vmul.f32 %v1301, %v1205
      %v1318 = vmul.f32 %v1302, %v1206
      %v1319 = vmul.f32 %v1303, %v1207
      %v1320 = vmul.f32 %v1304, %v1208
      %v1321 = vmul.f32 %v1305, %v1209
      %v1322 = vmul.f32 %v1306, %v1210
      %v1323 = vmul.f32 %v1307, %v1211
      %v1324 = vmul.f32 %v1308, %v1212
      %v1325 = vadd.f32 %v1309, 0.2548296
      %v1326 = vadd.f32 %v1310, 0.2548296
      %v1327 = vadd.f32 %v1311, 0.2548296
      %v1328 = vadd.f32 %v1312, 0.2548296
      %v1329 = vadd.f32 %v1313, 0.2548296
      %v1330 = vadd.f32 %v1314, 0.2548296
      %v1331 = vadd.f32 %v1315, 0.2548296
      %v1332 = vadd.f32 %v1316, 0.2548296
      %v1333 = vadd.f32 %v1317, 0.2548296
      %v1334 = vadd.f32 %v1318, 0.2548296
      %v1335 = vadd.f32 %v1319, 0.2548296
      %v1336 = vadd.f32 %v1320, 0.2548296
      %v1337 = vadd.f32 %v1321, 0.2548296
      %v1338 = vadd.f32 %v1322, 0.2548296
      %v1339 = vadd.f32 %v1323, 0.2548296
      %v1340 = vadd.f32 %v1324, 0.2548296
      %v1341 = vmul.f32 %v1325, %v1197
      %v1342 = vmul.f32 %v1326, %v1198
      %v1343 = vmul.f32 %v1327, %v1199
      %v1344 = vmul.f32 %v1328, %v1200
      %v1345 = vmul.f32 %v1329, %v1201
      %v1346 = vmul.f32 %v1330, %v1202
      %v1347 = vmul.f32 %v1331, %v1203
      %v1348 = vmul.f32 %v1332, %v1204
      %v1349 = vmul.f32 %v1333, %v1205
      %v1350 = vmul.f32 %v1334, %v1206
      %v1351 = vmul.f32 %v1335, %v1207
      %v1352 = vmul.f32 %v1336, %v1208
      %v1353 = vmul.f32 %v1337, %v1209
      %v1354 = vmul.f32 %v1338, %v1210
      %v1355 = vmul.f32 %v1339, %v1211
      %v1356 = vmul.f32 %v1340, %v1212
      %v1357 = vsub.f32 0.0, %v1149
      %v1358 = vsub.f32 0.0, %v1150
      %v1359 = vsub.f32 0.0, %v1151
      %v1360 = vsub.f32 0.0, %v1152
      %v1361 = vsub.f32 0.0, %v1153
      %v1362 = vsub.f32 0.0, %v1154
      %v1363 = vsub.f32 0.0, %v1155
      %v1364 = vsub.f32 0.0, %v1156
      %v1365 = vsub.f32 0.0, %v1157
      %v1366 = vsub.f32 0.0, %v1158
      %v1367 = vsub.f32 0.0, %v1159
      %v1368 = vsub.f32 0.0, %v1160
      %v1369 = vsub.f32 0.0, %v1161
      %v1370 = vsub.f32 0.0, %v1162
      %v1371 = vsub.f32 0.0, %v1163
      %v1372 = vsub.f32 0.0, %v1164
      %v1373 = vmul.f32 %v1357, %v1149
      %v1374 = vmul.f32 %v1358, %v1150
      %v1375 = vmul.f32 %v1359, %v1151
      %v1376 = vmul.f32 %v1360, %v1152
      %v1377 = vmul.f32 %v1361, %v1153
      %v1378 = vmul.f32 %v1362, %v1154
      %v1379 = vmul.f32 %v1363, %v1155
      %v1380 = vmul.f32 %v1364, %v1156
      %v1381 = vmul.f32 %v1365, %v1157
      %v1382 = vmul.f32 %v1366, %v1158
      %v1383 = vmul.f32 %v1367, %v1159
      %v1384 = vmul.f32 %v1368, %v1160
      %v1385 = vmul.f32 %v1369, %v1161
      %v1386 = vmul.f32 %v1370, %v1162
      %v1387 = vmul.f32 %v1371, %v1163
      %v1388 = vmul.f32 %v1372, %v1164
      %v1389 = vmul.f32 %v1373, 1.442695
      %v1390 = vpow.pop %v1389
      %v1391 = vmul.f32 %v1374, 1.442695
      %v1392 = vpow.pop %v1391
      %v1393 = vmul.f32 %v1375, 1.442695
      %v1394 = vpow.pop %v1393
      %v1395 = vmul.f32 %v1376, 1.442695
      %v1396 = vpow.pop %v1395
      %v1397 = vmul.f32 %v1377, 1.442695
      %v1398 = vpow.pop %v1397
      %v1399 = vmul.f32 %v1378, 1.442695
      %v1400 = vpow.pop %v1399
      %v1401 = vmul.f32 %v1379, 1.442695
      %v1402 = vpow.pop %v1401
      %v1403 = vmul.f32 %v1380, 1.442695
      %v1404 = vpow.pop %v1403
      %v1405 = vmul.f32 %v1381, 1.442695
      %v1406 = vpow.pop %v1405
      %v1407 = vmul.f32 %v1382, 1.442695
      %v1408 = vpow.pop %v1407
      %v1409 = vmul.f32 %v1383, 1.442695
      %v1410 = vpow.pop %v1409
      %v1411 = vmul.f32 %v1384, 1.442695
      %v1412 = vpow.pop %v1411
      %v1413 = vmul.f32 %v1385, 1.442695
      %v1414 = vpow.pop %v1413
      %v1415 = vmul.f32 %v1386, 1.442695
      %v1416 = vpow.pop %v1415
      %v1417 = vmul.f32 %v1387, 1.442695
      %v1418 = vpow.pop %v1417
      %v1419 = vmul.f32 %v1388, 1.442695
      %v1420 = vpow.pop %v1419
      %v1421 = vmul.f32 %v1341, %v1390
      %v1422 = vmul.f32 %v1342, %v1392
      %v1423 = vmul.f32 %v1343, %v1394
      %v1424 = vmul.f32 %v1344, %v1396
      %v1425 = vmul.f32 %v1345, %v1398
      %v1426 = vmul.f32 %v1346, %v1400
      %v1427 = vmul.f32 %v1347, %v1402
      %v1428 = vmul.f32 %v1348, %v1404
      %v1429 = vmul.f32 %v1349, %v1406
      %v1430 = vmul.f32 %v1350, %v1408
      %v1431 = vmul.f32 %v1351, %v1410
      %v1432 = vmul.f32 %v1352, %v1412
      %v1433 = vmul.f32 %v1353, %v1414
      %v1434 = vmul.f32 %v1354, %v1416
      %v1435 = vmul.f32 %v1355, %v1418
      %v1436 = vmul.f32 %v1356, %v1420
      %v1437 = vsub.f32 1.0, %v1421
      %v1438 = vsub.f32 1.0, %v1422
      %v1439 = vsub.f32 1.0, %v1423
      %v1440 = vsub.f32 1.0, %v1424
      %v1441 = vsub.f32 1.0, %v1425
      %v1442 = vsub.f32 1.0, %v1426
      %v1443 = vsub.f32 1.0, %v1427
      %v1444 = vsub.f32 1.0, %v1428
      %v1445 = vsub.f32 1.0, %v1429
      %v1446 = vsub.f32 1.0, %v1430
      %v1447 = vsub.f32 1.0, %v1431
      %v1448 = vsub.f32 1.0, %v1432
      %v1449 = vsub.f32 1.0, %v1433
      %v1450 = vsub.f32 1.0, %v1434
      %v1451 = vsub.f32 1.0, %v1435
      %v1452 = vsub.f32 1.0, %v1436
      %v1453 = vmul.f32 %v1133, %v1437
      %v1454 = vmul.f32 %v1134, %v1438
      %v1455 = vmul.f32 %v1135, %v1439
      %v1456 = vmul.f32 %v1136, %v1440
      %v1457 = vmul.f32 %v1137, %v1441
      %v1458 = vmul.f32 %v1138, %v1442
      %v1459 = vmul.f32 %v1139, %v1443
      %v1460 = vmul.f32 %v1140, %v1444
      %v1461 = vmul.f32 %v1141, %v1445
      %v1462 = vmul.f32 %v1142, %v1446
      %v1463 = vmul.f32 %v1143, %v1447
      %v1464 = vmul.f32 %v1144, %v1448
      %v1465 = vmul.f32 %v1145, %v1449
      %v1466 = vmul.f32 %v1146, %v1450
      %v1467 = vmul.f32 %v1147, %v1451
      %v1468 = vmul.f32 %v1148, %v1452
      %v1469 = vadd.f32 %v1453, 1.0
      %v1470 = vadd.f32 %v1454, 1.0
      %v1471 = vadd.f32 %v1455, 1.0
      %v1472 = vadd.f32 %v1456, 1.0
      %v1473 = vadd.f32 %v1457, 1.0
      %v1474 = vadd.f32 %v1458, 1.0
      %v1475 = vadd.f32 %v1459, 1.0
      %v1476 = vadd.f32 %v1460, 1.0
      %v1477 = vadd.f32 %v1461, 1.0
      %v1478 = vadd.f32 %v1462, 1.0
      %v1479 = vadd.f32 %v1463, 1.0
      %v1480 = vadd.f32 %v1464, 1.0
      %v1481 = vadd.f32 %v1465, 1.0
      %v1482 = vadd.f32 %v1466, 1.0
      %v1483 = vadd.f32 %v1467, 1.0
      %v1484 = vadd.f32 %v1468, 1.0
      %v1485 = vmul.f32 %v1085, %v1469
      %v1486 = vmul.f32 %v1086, %v1470
      %v1487 = vmul.f32 %v1087, %v1471
      %v1488 = vmul.f32 %v1088, %v1472
      %v1489 = vmul.f32 %v1089, %v1473
      %v1490 = vmul.f32 %v1090, %v1474
      %v1491 = vmul.f32 %v1091, %v1475
      %v1492 = vmul.f32 %v1092, %v1476
      %v1493 = vmul.f32 %v1093, %v1477
      %v1494 = vmul.f32 %v1094, %v1478
      %v1495 = vmul.f32 %v1095, %v1479
      %v1496 = vmul.f32 %v1096, %v1480
      %v1497 = vmul.f32 %v1097, %v1481
      %v1498 = vmul.f32 %v1098, %v1482
      %v1499 = vmul.f32 %v1099, %v1483
      %v1500 = vmul.f32 %v1100, %v1484
      %v1501 = vrot.slane %v1485, 7
      %v1502 = vrot.slane %v1486, 7
      %v1503 = vrot.slane %v1487, 7
      %v1504 = vrot.slane %v1488, 7
      %v1505 = vrot.slane %v1489, 7
      %v1506 = vrot.slane %v1490, 7
      %v1507 = vrot.slane %v1491, 7
      %v1508 = vrot.slane %v1492, 7
      %v1509 = vrot.slane %v1493, 7
      %v1510 = vrot.slane %v1494, 7
      %v1511 = vrot.slane %v1495, 7
      %v1512 = vrot.slane %v1496, 7
      %v1513 = vrot.slane %v1497, 7
      %v1514 = vrot.slane %v1498, 7
      %v1515 = vrot.slane %v1499, 7
      %v1516 = vrot.slane %v1500, 7
      %v1517 = vlaneseq
      %v1518 = vshrl.u32 %v1517, 7
      %vm1519 = vcmp.lt.s32.totalorder %v1518, 1
      %v1520 = vsel %vm1519, %v1515, %v1516
      %v1521 = vsel %vm1519, %v1514, %v1515
      %v1522 = vsel %vm1519, %v1513, %v1514
      %v1523 = vsel %vm1519, %v1512, %v1513
      %v1524 = vsel %vm1519, %v1511, %v1512
      %v1525 = vsel %vm1519, %v1510, %v1511
      %v1526 = vsel %vm1519, %v1509, %v1510
      %v1527 = vsel %vm1519, %v1508, %v1509
      %v1528 = vsel %vm1519, %v1507, %v1508
      %v1529 = vsel %vm1519, %v1506, %v1507
      %v1530 = vsel %vm1519, %v1505, %v1506
      %v1531 = vsel %vm1519, %v1504, %v1505
      %v1532 = vsel %vm1519, %v1503, %v1504
      %v1533 = vsel %vm1519, %v1502, %v1503
      %v1534 = vsel %vm1519, %v1501, %v1502
      %v1535 = vsel %vm1519, %v1516, %v1501
      %v1536 = vld [vmem:[%s6] sm:$0xff]
      %v1537 = vld [vmem:[%s6 + $0x8] sm:$0xff]
      %v1538 = vld [vmem:[%s6 + $0x10] sm:$0xff]
      %v1539 = vld [vmem:[%s6 + $0x18] sm:$0xff]
      %v1540 = vld [vmem:[%s6 + $0x20] sm:$0xff]
      %v1541 = vld [vmem:[%s6 + $0x28] sm:$0xff]
      %v1542 = vld [vmem:[%s6 + $0x30] sm:$0xff]
      %v1543 = vld [vmem:[%s6 + $0x38] sm:$0xff]
      %1545 = vset.pattern.permute.xlu0 0
      %1546 = vperm.xlu0 %1545, %v1536
      %v1547 = vpop.permute.xlu0 %1546
      %1550 = vset.pattern.permute.xlu0 0
      %1551 = vperm.xlu0 %1550, %v1537
      %v1552 = vpop.permute.xlu0 %1551
      %1555 = vset.pattern.permute.xlu0 0
      %1556 = vperm.xlu0 %1555, %v1538
      %v1557 = vpop.permute.xlu0 %1556
      %1560 = vset.pattern.permute.xlu0 0
      %1561 = vperm.xlu0 %1560, %v1539
      %v1562 = vpop.permute.xlu0 %1561
      %1565 = vset.pattern.permute.xlu0 0
      %1566 = vperm.xlu0 %1565, %v1540
      %v1567 = vpop.permute.xlu0 %1566
      %1570 = vset.pattern.permute.xlu0 0
      %1571 = vperm.xlu0 %1570, %v1541
      %v1572 = vpop.permute.xlu0 %1571
      %1575 = vset.pattern.permute.xlu0 0
      %1576 = vperm.xlu0 %1575, %v1542
      %v1577 = vpop.permute.xlu0 %1576
      %1580 = vset.pattern.permute.xlu0 0
      %1581 = vperm.xlu0 %1580, %v1543
      %v1582 = vpop.permute.xlu0 %1581
      %v1584 = vmul.f32 %v1520, %v1547
      %v1585 = vmul.f32 %v1535, %v1552
      %v1586 = vmul.f32 %v1534, %v1557
      %v1587 = vmul.f32 %v1533, %v1562
      %v1588 = vmul.f32 %v1532, %v1567
      %v1589 = vmul.f32 %v1531, %v1572
      %v1590 = vmul.f32 %v1530, %v1577
      %v1591 = vmul.f32 %v1529, %v1582
      %v1592 = vmul.f32 %v1528, %v1547
      %v1593 = vmul.f32 %v1527, %v1552
      %v1594 = vmul.f32 %v1526, %v1557
      %v1595 = vmul.f32 %v1525, %v1562
      %v1596 = vmul.f32 %v1524, %v1567
      %v1597 = vmul.f32 %v1523, %v1572
      %v1598 = vmul.f32 %v1522, %v1577
      %v1599 = vmul.f32 %v1521, %v1582
      %v1600 = vld [vmem:[%s5] sm:$0x1]
      %v1602 = vlaneseq
      %v1603 = vshrl.u32 %v1602, 7
      %v1604 = vsub.s32 0, %v1603
      %v1605 = vrot.slane %v1600, %v1604
      %v1607 = vmul.f32 %v1584, %v1605
      %v1608 = vmul.f32 %v1585, %v1605
      %v1609 = vmul.f32 %v1586, %v1605
      %v1610 = vmul.f32 %v1587, %v1605
      %v1611 = vmul.f32 %v1588, %v1605
      %v1612 = vmul.f32 %v1589, %v1605
      %v1613 = vmul.f32 %v1590, %v1605
      %v1614 = vmul.f32 %v1591, %v1605
      %v1615 = vmul.f32 %v1592, %v1605
      %v1616 = vmul.f32 %v1593, %v1605
      %v1617 = vmul.f32 %v1594, %v1605
      %v1618 = vmul.f32 %v1595, %v1605
      %v1619 = vmul.f32 %v1596, %v1605
      %v1620 = vmul.f32 %v1597, %v1605
      %v1621 = vmul.f32 %v1598, %v1605
      %v1622 = vmul.f32 %v1599, %v1605
      %v1623 = vadd.f32 %v1607, 0.0
      %v1624 = vadd.f32 %v1608, 0.0
      %v1625 = vadd.f32 %v1609, 0.0
      %v1626 = vadd.f32 %v1610, 0.0
      %v1627 = vadd.f32 %v1611, 0.0
      %v1628 = vadd.f32 %v1612, 0.0
      %v1629 = vadd.f32 %v1613, 0.0
      %v1630 = vadd.f32 %v1614, 0.0
      %v1631 = vadd.f32 %v1615, 0.0
      %v1632 = vadd.f32 %v1616, 0.0
      %v1633 = vadd.f32 %v1617, 0.0
      %v1634 = vadd.f32 %v1618, 0.0
      %v1635 = vadd.f32 %v1619, 0.0
      %v1636 = vadd.f32 %v1620, 0.0
      %v1637 = vadd.f32 %v1621, 0.0
      %v1638 = vadd.f32 %v1622, 0.0
      %s1639 = scalar_lea.vmem %s6, 64
      %v1640 = vld [vmem:[%s1639] sm:$0xff]
      %v1641 = vld [vmem:[%s1639 + $0x8] sm:$0xff]
      %v1642 = vld [vmem:[%s1639 + $0x10] sm:$0xff]
      %v1643 = vld [vmem:[%s1639 + $0x18] sm:$0xff]
      %v1644 = vld [vmem:[%s1639 + $0x20] sm:$0xff]
      %v1645 = vld [vmem:[%s1639 + $0x28] sm:$0xff]
      %v1646 = vld [vmem:[%s1639 + $0x30] sm:$0xff]
      %v1647 = vld [vmem:[%s1639 + $0x38] sm:$0xff]
      %1649 = vset.pattern.permute.xlu0 0
      %1650 = vperm.xlu0 %1649, %v1640
      %v1651 = vpop.permute.xlu0 %1650
      %1654 = vset.pattern.permute.xlu0 0
      %1655 = vperm.xlu0 %1654, %v1641
      %v1656 = vpop.permute.xlu0 %1655
      %1659 = vset.pattern.permute.xlu0 0
      %1660 = vperm.xlu0 %1659, %v1642
      %v1661 = vpop.permute.xlu0 %1660
      %1664 = vset.pattern.permute.xlu0 0
      %1665 = vperm.xlu0 %1664, %v1643
      %v1666 = vpop.permute.xlu0 %1665
      %1669 = vset.pattern.permute.xlu0 0
      %1670 = vperm.xlu0 %1669, %v1644
      %v1671 = vpop.permute.xlu0 %1670
      %1674 = vset.pattern.permute.xlu0 0
      %1675 = vperm.xlu0 %1674, %v1645
      %v1676 = vpop.permute.xlu0 %1675
      %1679 = vset.pattern.permute.xlu0 0
      %1680 = vperm.xlu0 %1679, %v1646
      %v1681 = vpop.permute.xlu0 %1680
      %1684 = vset.pattern.permute.xlu0 0
      %1685 = vperm.xlu0 %1684, %v1647
      %v1686 = vpop.permute.xlu0 %1685
      %v1688 = vmul.f32 %v1500, %v1651
      %v1689 = vmul.f32 %v1485, %v1656
      %v1690 = vmul.f32 %v1486, %v1661
      %v1691 = vmul.f32 %v1487, %v1666
      %v1692 = vmul.f32 %v1488, %v1671
      %v1693 = vmul.f32 %v1489, %v1676
      %v1694 = vmul.f32 %v1490, %v1681
      %v1695 = vmul.f32 %v1491, %v1686
      %v1696 = vmul.f32 %v1492, %v1651
      %v1697 = vmul.f32 %v1493, %v1656
      %v1698 = vmul.f32 %v1494, %v1661
      %v1699 = vmul.f32 %v1495, %v1666
      %v1700 = vmul.f32 %v1496, %v1671
      %v1701 = vmul.f32 %v1497, %v1676
      %v1702 = vmul.f32 %v1498, %v1681
      %v1703 = vmul.f32 %v1499, %v1686
      %s1704 = scalar_lea.vmem %s5, 1
      %v1705 = vld [vmem:[%s1704] sm:$0x1]
      %v1707 = vlaneseq
      %v1708 = vshrl.u32 %v1707, 7
      %v1709 = vsub.s32 0, %v1708
      %v1710 = vrot.slane %v1705, %v1709
      %v1712 = vmul.f32 %v1688, %v1710
      %v1713 = vmul.f32 %v1689, %v1710
      %v1714 = vmul.f32 %v1690, %v1710
      %v1715 = vmul.f32 %v1691, %v1710
      %v1716 = vmul.f32 %v1692, %v1710
      %v1717 = vmul.f32 %v1693, %v1710
      %v1718 = vmul.f32 %v1694, %v1710
      %v1719 = vmul.f32 %v1695, %v1710
      %v1720 = vmul.f32 %v1696, %v1710
      %v1721 = vmul.f32 %v1697, %v1710
      %v1722 = vmul.f32 %v1698, %v1710
      %v1723 = vmul.f32 %v1699, %v1710
      %v1724 = vmul.f32 %v1700, %v1710
      %v1725 = vmul.f32 %v1701, %v1710
      %v1726 = vmul.f32 %v1702, %v1710
      %v1727 = vmul.f32 %v1703, %v1710
      %v1728 = vadd.f32 %v1623, %v1712
      %v1729 = vadd.f32 %v1624, %v1713
      %v1730 = vadd.f32 %v1625, %v1714
      %v1731 = vadd.f32 %v1626, %v1715
      %v1732 = vadd.f32 %v1627, %v1716
      %v1733 = vadd.f32 %v1628, %v1717
      %v1734 = vadd.f32 %v1629, %v1718
      %v1735 = vadd.f32 %v1630, %v1719
      %v1736 = vadd.f32 %v1631, %v1720
      %v1737 = vadd.f32 %v1632, %v1721
      %v1738 = vadd.f32 %v1633, %v1722
      %v1739 = vadd.f32 %v1634, %v1723
      %v1740 = vadd.f32 %v1635, %v1724
      %v1741 = vadd.f32 %v1636, %v1725
      %v1742 = vadd.f32 %v1637, %v1726
      %v1743 = vadd.f32 %v1638, %v1727
      %v1744 = vrot.slane %v1485, 1
      %v1745 = vrot.slane %v1486, 1
      %v1746 = vrot.slane %v1487, 1
      %v1747 = vrot.slane %v1488, 1
      %v1748 = vrot.slane %v1489, 1
      %v1749 = vrot.slane %v1490, 1
      %v1750 = vrot.slane %v1491, 1
      %v1751 = vrot.slane %v1492, 1
      %v1752 = vrot.slane %v1493, 1
      %v1753 = vrot.slane %v1494, 1
      %v1754 = vrot.slane %v1495, 1
      %v1755 = vrot.slane %v1496, 1
      %v1756 = vrot.slane %v1497, 1
      %v1757 = vrot.slane %v1498, 1
      %v1758 = vrot.slane %v1499, 1
      %v1759 = vrot.slane %v1500, 1
      %vm1760 = vcmp.lt.s32.totalorder %v1518, 7
      %v1761 = vsel %vm1760, %v1758, %v1759
      %v1762 = vsel %vm1760, %v1757, %v1758
      %v1763 = vsel %vm1760, %v1756, %v1757
      %v1764 = vsel %vm1760, %v1755, %v1756
      %v1765 = vsel %vm1760, %v1754, %v1755
      %v1766 = vsel %vm1760, %v1753, %v1754
      %v1767 = vsel %vm1760, %v1752, %v1753
      %v1768 = vsel %vm1760, %v1751, %v1752
      %v1769 = vsel %vm1760, %v1750, %v1751
      %v1770 = vsel %vm1760, %v1749, %v1750
      %v1771 = vsel %vm1760, %v1748, %v1749
      %v1772 = vsel %vm1760, %v1747, %v1748
      %v1773 = vsel %vm1760, %v1746, %v1747
      %v1774 = vsel %vm1760, %v1745, %v1746
      %v1775 = vsel %vm1760, %v1744, %v1745
      %v1776 = vsel %vm1760, %v1759, %v1744
      %s1777 = scalar_lea.vmem %s6, 128
      %v1778 = vld [vmem:[%s1777] sm:$0xff]
      %v1779 = vld [vmem:[%s1777 + $0x8] sm:$0xff]
      %v1780 = vld [vmem:[%s1777 + $0x10] sm:$0xff]
      %v1781 = vld [vmem:[%s1777 + $0x18] sm:$0xff]
      %v1782 = vld [vmem:[%s1777 + $0x20] sm:$0xff]
      %v1783 = vld [vmem:[%s1777 + $0x28] sm:$0xff]
      %v1784 = vld [vmem:[%s1777 + $0x30] sm:$0xff]
      %v1785 = vld [vmem:[%s1777 + $0x38] sm:$0xff]
      %1787 = vset.pattern.permute.xlu0 0
      %1788 = vperm.xlu0 %1787, %v1778
      %v1789 = vpop.permute.xlu0 %1788
      %1792 = vset.pattern.permute.xlu0 0
      %1793 = vperm.xlu0 %1792, %v1779
      %v1794 = vpop.permute.xlu0 %1793
      %1797 = vset.pattern.permute.xlu0 0
      %1798 = vperm.xlu0 %1797, %v1780
      %v1799 = vpop.permute.xlu0 %1798
      %1802 = vset.pattern.permute.xlu0 0
      %1803 = vperm.xlu0 %1802, %v1781
      %v1804 = vpop.permute.xlu0 %1803
      %1807 = vset.pattern.permute.xlu0 0
      %1808 = vperm.xlu0 %1807, %v1782
      %v1809 = vpop.permute.xlu0 %1808
      %1812 = vset.pattern.permute.xlu0 0
      %1813 = vperm.xlu0 %1812, %v1783
      %v1814 = vpop.permute.xlu0 %1813
      %1817 = vset.pattern.permute.xlu0 0
      %1818 = vperm.xlu0 %1817, %v1784
      %v1819 = vpop.permute.xlu0 %1818
      %1822 = vset.pattern.permute.xlu0 0
      %1823 = vperm.xlu0 %1822, %v1785
      %v1824 = vpop.permute.xlu0 %1823
      %v1826 = vmul.f32 %v1776, %v1789
      %v1827 = vmul.f32 %v1775, %v1794
      %v1828 = vmul.f32 %v1774, %v1799
      %v1829 = vmul.f32 %v1773, %v1804
      %v1830 = vmul.f32 %v1772, %v1809
      %v1831 = vmul.f32 %v1771, %v1814
      %v1832 = vmul.f32 %v1770, %v1819
      %v1833 = vmul.f32 %v1769, %v1824
      %v1834 = vmul.f32 %v1768, %v1789
      %v1835 = vmul.f32 %v1767, %v1794
      %v1836 = vmul.f32 %v1766, %v1799
      %v1837 = vmul.f32 %v1765, %v1804
      %v1838 = vmul.f32 %v1764, %v1809
      %v1839 = vmul.f32 %v1763, %v1814
      %v1840 = vmul.f32 %v1762, %v1819
      %v1841 = vmul.f32 %v1761, %v1824
      %s1842 = scalar_lea.vmem %s5, 2
      %v1843 = vld [vmem:[%s1842] sm:$0x1]
      %v1845 = vlaneseq
      %v1846 = vshrl.u32 %v1845, 7
      %v1847 = vsub.s32 0, %v1846
      %v1848 = vrot.slane %v1843, %v1847
      %v1850 = vmul.f32 %v1826, %v1848
      %v1851 = vmul.f32 %v1827, %v1848
      %v1852 = vmul.f32 %v1828, %v1848
      %v1853 = vmul.f32 %v1829, %v1848
      %v1854 = vmul.f32 %v1830, %v1848
      %v1855 = vmul.f32 %v1831, %v1848
      %v1856 = vmul.f32 %v1832, %v1848
      %v1857 = vmul.f32 %v1833, %v1848
      %v1858 = vmul.f32 %v1834, %v1848
      %v1859 = vmul.f32 %v1835, %v1848
      %v1860 = vmul.f32 %v1836, %v1848
      %v1861 = vmul.f32 %v1837, %v1848
      %v1862 = vmul.f32 %v1838, %v1848
      %v1863 = vmul.f32 %v1839, %v1848
      %v1864 = vmul.f32 %v1840, %v1848
      %v1865 = vmul.f32 %v1841, %v1848
      %v1866 = vadd.f32 %v1728, %v1850
      %v1867 = vadd.f32 %v1729, %v1851
      %v1868 = vadd.f32 %v1730, %v1852
      %v1869 = vadd.f32 %v1731, %v1853
      %v1870 = vadd.f32 %v1732, %v1854
      %v1871 = vadd.f32 %v1733, %v1855
      %v1872 = vadd.f32 %v1734, %v1856
      %v1873 = vadd.f32 %v1735, %v1857
      %v1874 = vadd.f32 %v1736, %v1858
      %v1875 = vadd.f32 %v1737, %v1859
      %v1876 = vadd.f32 %v1738, %v1860
      %v1877 = vadd.f32 %v1739, %v1861
      %v1878 = vadd.f32 %v1740, %v1862
      %v1879 = vadd.f32 %v1741, %v1863
      %v1880 = vadd.f32 %v1742, %v1864
      %v1881 = vadd.f32 %v1743, %v1865
      %s1882 = scalar_lea.vmem %s6, 192
      %v1883 = vld [vmem:[%s1882] sm:$0xff]
      %v1884 = vld [vmem:[%s1882 + $0x8] sm:$0xff]
      %v1885 = vld [vmem:[%s1882 + $0x10] sm:$0xff]
      %v1886 = vld [vmem:[%s1882 + $0x18] sm:$0xff]
      %v1887 = vld [vmem:[%s1882 + $0x20] sm:$0xff]
      %v1888 = vld [vmem:[%s1882 + $0x28] sm:$0xff]
      %v1889 = vld [vmem:[%s1882 + $0x30] sm:$0xff]
      %v1890 = vld [vmem:[%s1882 + $0x38] sm:$0xff]
      %1892 = vset.pattern.permute.xlu0 0
      %1893 = vperm.xlu0 %1892, %v1883
      %v1894 = vpop.permute.xlu0 %1893
      %1897 = vset.pattern.permute.xlu0 0
      %1898 = vperm.xlu0 %1897, %v1884
      %v1899 = vpop.permute.xlu0 %1898
      %1902 = vset.pattern.permute.xlu0 0
      %1903 = vperm.xlu0 %1902, %v1885
      %v1904 = vpop.permute.xlu0 %1903
      %1907 = vset.pattern.permute.xlu0 0
      %1908 = vperm.xlu0 %1907, %v1886
      %v1909 = vpop.permute.xlu0 %1908
      %1912 = vset.pattern.permute.xlu0 0
      %1913 = vperm.xlu0 %1912, %v1887
      %v1914 = vpop.permute.xlu0 %1913
      %1917 = vset.pattern.permute.xlu0 0
      %1918 = vperm.xlu0 %1917, %v1888
      %v1919 = vpop.permute.xlu0 %1918
      %1922 = vset.pattern.permute.xlu0 0
      %1923 = vperm.xlu0 %1922, %v1889
      %v1924 = vpop.permute.xlu0 %1923
      %1927 = vset.pattern.permute.xlu0 0
      %1928 = vperm.xlu0 %1927, %v1890
      %v1929 = vpop.permute.xlu0 %1928
      %v1931 = vmul.f32 %v1535, %v1894
      %v1932 = vmul.f32 %v1534, %v1899
      %v1933 = vmul.f32 %v1533, %v1904
      %v1934 = vmul.f32 %v1532, %v1909
      %v1935 = vmul.f32 %v1531, %v1914
      %v1936 = vmul.f32 %v1530, %v1919
      %v1937 = vmul.f32 %v1529, %v1924
      %v1938 = vmul.f32 %v1528, %v1929
      %v1939 = vmul.f32 %v1527, %v1894
      %v1940 = vmul.f32 %v1526, %v1899
      %v1941 = vmul.f32 %v1525, %v1904
      %v1942 = vmul.f32 %v1524, %v1909
      %v1943 = vmul.f32 %v1523, %v1914
      %v1944 = vmul.f32 %v1522, %v1919
      %v1945 = vmul.f32 %v1521, %v1924
      %v1946 = vmul.f32 %v1520, %v1929
      %s1947 = scalar_lea.vmem %s5, 3
      %v1948 = vld [vmem:[%s1947] sm:$0x1]
      %v1950 = vlaneseq
      %v1951 = vshrl.u32 %v1950, 7
      %v1952 = vsub.s32 0, %v1951
      %v1953 = vrot.slane %v1948, %v1952
      %v1955 = vmul.f32 %v1931, %v1953
      %v1956 = vmul.f32 %v1932, %v1953
      %v1957 = vmul.f32 %v1933, %v1953
      %v1958 = vmul.f32 %v1934, %v1953
      %v1959 = vmul.f32 %v1935, %v1953
      %v1960 = vmul.f32 %v1936, %v1953
      %v1961 = vmul.f32 %v1937, %v1953
      %v1962 = vmul.f32 %v1938, %v1953
      %v1963 = vmul.f32 %v1939, %v1953
      %v1964 = vmul.f32 %v1940, %v1953
      %v1965 = vmul.f32 %v1941, %v1953
      %v1966 = vmul.f32 %v1942, %v1953
      %v1967 = vmul.f32 %v1943, %v1953
      %v1968 = vmul.f32 %v1944, %v1953
      %v1969 = vmul.f32 %v1945, %v1953
      %v1970 = vmul.f32 %v1946, %v1953
      %v1971 = vadd.f32 %v1866, %v1955
      %v1972 = vadd.f32 %v1867, %v1956
      %v1973 = vadd.f32 %v1868, %v1957
      %v1974 = vadd.f32 %v1869, %v1958
      %v1975 = vadd.f32 %v1870, %v1959
      %v1976 = vadd.f32 %v1871, %v1960
      %v1977 = vadd.f32 %v1872, %v1961
      %v1978 = vadd.f32 %v1873, %v1962
      %v1979 = vadd.f32 %v1874, %v1963
      %v1980 = vadd.f32 %v1875, %v1964
      %v1981 = vadd.f32 %v1876, %v1965
      %v1982 = vadd.f32 %v1877, %v1966
      %v1983 = vadd.f32 %v1878, %v1967
      %v1984 = vadd.f32 %v1879, %v1968
      %v1985 = vadd.f32 %v1880, %v1969
      %v1986 = vadd.f32 %v1881, %v1970
      %s1987 = scalar_lea.vmem %s6, 256
      %v1988 = vld [vmem:[%s1987] sm:$0xff]
      %v1989 = vld [vmem:[%s1987 + $0x8] sm:$0xff]
      %v1990 = vld [vmem:[%s1987 + $0x10] sm:$0xff]
      %v1991 = vld [vmem:[%s1987 + $0x18] sm:$0xff]
      %v1992 = vld [vmem:[%s1987 + $0x20] sm:$0xff]
      %v1993 = vld [vmem:[%s1987 + $0x28] sm:$0xff]
      %v1994 = vld [vmem:[%s1987 + $0x30] sm:$0xff]
      %v1995 = vld [vmem:[%s1987 + $0x38] sm:$0xff]
      %1997 = vset.pattern.permute.xlu0 0
      %1998 = vperm.xlu0 %1997, %v1988
      %v1999 = vpop.permute.xlu0 %1998
      %2002 = vset.pattern.permute.xlu0 0
      %2003 = vperm.xlu0 %2002, %v1989
      %v2004 = vpop.permute.xlu0 %2003
      %2007 = vset.pattern.permute.xlu0 0
      %2008 = vperm.xlu0 %2007, %v1990
      %v2009 = vpop.permute.xlu0 %2008
      %2012 = vset.pattern.permute.xlu0 0
      %2013 = vperm.xlu0 %2012, %v1991
      %v2014 = vpop.permute.xlu0 %2013
      %2017 = vset.pattern.permute.xlu0 0
      %2018 = vperm.xlu0 %2017, %v1992
      %v2019 = vpop.permute.xlu0 %2018
      %2022 = vset.pattern.permute.xlu0 0
      %2023 = vperm.xlu0 %2022, %v1993
      %v2024 = vpop.permute.xlu0 %2023
      %2027 = vset.pattern.permute.xlu0 0
      %2028 = vperm.xlu0 %2027, %v1994
      %v2029 = vpop.permute.xlu0 %2028
      %2032 = vset.pattern.permute.xlu0 0
      %2033 = vperm.xlu0 %2032, %v1995
      %v2034 = vpop.permute.xlu0 %2033
      %v2036 = vmul.f32 %v1485, %v1999
      %v2037 = vmul.f32 %v1486, %v2004
      %v2038 = vmul.f32 %v1487, %v2009
      %v2039 = vmul.f32 %v1488, %v2014
      %v2040 = vmul.f32 %v1489, %v2019
      %v2041 = vmul.f32 %v1490, %v2024
      %v2042 = vmul.f32 %v1491, %v2029
      %v2043 = vmul.f32 %v1492, %v2034
      %v2044 = vmul.f32 %v1493, %v1999
      %v2045 = vmul.f32 %v1494, %v2004
      %v2046 = vmul.f32 %v1495, %v2009
      %v2047 = vmul.f32 %v1496, %v2014
      %v2048 = vmul.f32 %v1497, %v2019
      %v2049 = vmul.f32 %v1498, %v2024
      %v2050 = vmul.f32 %v1499, %v2029
      %v2051 = vmul.f32 %v1500, %v2034
      %s2052 = scalar_lea.vmem %s5, 4
      %v2053 = vld [vmem:[%s2052] sm:$0x1]
      %v2055 = vlaneseq
      %v2056 = vshrl.u32 %v2055, 7
      %v2057 = vsub.s32 0, %v2056
      %v2058 = vrot.slane %v2053, %v2057
      %v2060 = vmul.f32 %v2036, %v2058
      %v2061 = vmul.f32 %v2037, %v2058
      %v2062 = vmul.f32 %v2038, %v2058
      %v2063 = vmul.f32 %v2039, %v2058
      %v2064 = vmul.f32 %v2040, %v2058
      %v2065 = vmul.f32 %v2041, %v2058
      %v2066 = vmul.f32 %v2042, %v2058
      %v2067 = vmul.f32 %v2043, %v2058
      %v2068 = vmul.f32 %v2044, %v2058
      %v2069 = vmul.f32 %v2045, %v2058
      %v2070 = vmul.f32 %v2046, %v2058
      %v2071 = vmul.f32 %v2047, %v2058
      %v2072 = vmul.f32 %v2048, %v2058
      %v2073 = vmul.f32 %v2049, %v2058
      %v2074 = vmul.f32 %v2050, %v2058
      %v2075 = vmul.f32 %v2051, %v2058
      %v2076 = vadd.f32 %v1971, %v2060
      %v2077 = vadd.f32 %v1972, %v2061
      %v2078 = vadd.f32 %v1973, %v2062
      %v2079 = vadd.f32 %v1974, %v2063
      %v2080 = vadd.f32 %v1975, %v2064
      %v2081 = vadd.f32 %v1976, %v2065
      %v2082 = vadd.f32 %v1977, %v2066
      %v2083 = vadd.f32 %v1978, %v2067
      %v2084 = vadd.f32 %v1979, %v2068
      %v2085 = vadd.f32 %v1980, %v2069
      %v2086 = vadd.f32 %v1981, %v2070
      %v2087 = vadd.f32 %v1982, %v2071
      %v2088 = vadd.f32 %v1983, %v2072
      %v2089 = vadd.f32 %v1984, %v2073
      %v2090 = vadd.f32 %v1985, %v2074
      %v2091 = vadd.f32 %v1986, %v2075
      %s2092 = scalar_lea.vmem %s6, 320
      %v2093 = vld [vmem:[%s2092] sm:$0xff]
      %v2094 = vld [vmem:[%s2092 + $0x8] sm:$0xff]
      %v2095 = vld [vmem:[%s2092 + $0x10] sm:$0xff]
      %v2096 = vld [vmem:[%s2092 + $0x18] sm:$0xff]
      %v2097 = vld [vmem:[%s2092 + $0x20] sm:$0xff]
      %v2098 = vld [vmem:[%s2092 + $0x28] sm:$0xff]
      %v2099 = vld [vmem:[%s2092 + $0x30] sm:$0xff]
      %v2100 = vld [vmem:[%s2092 + $0x38] sm:$0xff]
      %2102 = vset.pattern.permute.xlu0 0
      %2103 = vperm.xlu0 %2102, %v2093
      %v2104 = vpop.permute.xlu0 %2103
      %2107 = vset.pattern.permute.xlu0 0
      %2108 = vperm.xlu0 %2107, %v2094
      %v2109 = vpop.permute.xlu0 %2108
      %2112 = vset.pattern.permute.xlu0 0
      %2113 = vperm.xlu0 %2112, %v2095
      %v2114 = vpop.permute.xlu0 %2113
      %2117 = vset.pattern.permute.xlu0 0
      %2118 = vperm.xlu0 %2117, %v2096
      %v2119 = vpop.permute.xlu0 %2118
      %2122 = vset.pattern.permute.xlu0 0
      %2123 = vperm.xlu0 %2122, %v2097
      %v2124 = vpop.permute.xlu0 %2123
      %2127 = vset.pattern.permute.xlu0 0
      %2128 = vperm.xlu0 %2127, %v2098
      %v2129 = vpop.permute.xlu0 %2128
      %2132 = vset.pattern.permute.xlu0 0
      %2133 = vperm.xlu0 %2132, %v2099
      %v2134 = vpop.permute.xlu0 %2133
      %2137 = vset.pattern.permute.xlu0 0
      %2138 = vperm.xlu0 %2137, %v2100
      %v2139 = vpop.permute.xlu0 %2138
      %v2141 = vmul.f32 %v1775, %v2104
      %v2142 = vmul.f32 %v1774, %v2109
      %v2143 = vmul.f32 %v1773, %v2114
      %v2144 = vmul.f32 %v1772, %v2119
      %v2145 = vmul.f32 %v1771, %v2124
      %v2146 = vmul.f32 %v1770, %v2129
      %v2147 = vmul.f32 %v1769, %v2134
      %v2148 = vmul.f32 %v1768, %v2139
      %v2149 = vmul.f32 %v1767, %v2104
      %v2150 = vmul.f32 %v1766, %v2109
      %v2151 = vmul.f32 %v1765, %v2114
      %v2152 = vmul.f32 %v1764, %v2119
      %v2153 = vmul.f32 %v1763, %v2124
      %v2154 = vmul.f32 %v1762, %v2129
      %v2155 = vmul.f32 %v1761, %v2134
      %v2156 = vmul.f32 %v1776, %v2139
      %s2157 = scalar_lea.vmem %s5, 5
      %v2158 = vld [vmem:[%s2157] sm:$0x1]
      %v2160 = vlaneseq
      %v2161 = vshrl.u32 %v2160, 7
      %v2162 = vsub.s32 0, %v2161
      %v2163 = vrot.slane %v2158, %v2162
      %v2165 = vmul.f32 %v2141, %v2163
      %v2166 = vmul.f32 %v2142, %v2163
      %v2167 = vmul.f32 %v2143, %v2163
      %v2168 = vmul.f32 %v2144, %v2163
      %v2169 = vmul.f32 %v2145, %v2163
      %v2170 = vmul.f32 %v2146, %v2163
      %v2171 = vmul.f32 %v2147, %v2163
      %v2172 = vmul.f32 %v2148, %v2163
      %v2173 = vmul.f32 %v2149, %v2163
      %v2174 = vmul.f32 %v2150, %v2163
      %v2175 = vmul.f32 %v2151, %v2163
      %v2176 = vmul.f32 %v2152, %v2163
      %v2177 = vmul.f32 %v2153, %v2163
      %v2178 = vmul.f32 %v2154, %v2163
      %v2179 = vmul.f32 %v2155, %v2163
      %v2180 = vmul.f32 %v2156, %v2163
      %v2181 = vadd.f32 %v2076, %v2165
      %v2182 = vadd.f32 %v2077, %v2166
      %v2183 = vadd.f32 %v2078, %v2167
      %v2184 = vadd.f32 %v2079, %v2168
      %v2185 = vadd.f32 %v2080, %v2169
      %v2186 = vadd.f32 %v2081, %v2170
      %v2187 = vadd.f32 %v2082, %v2171
      %v2188 = vadd.f32 %v2083, %v2172
      %v2189 = vadd.f32 %v2084, %v2173
      %v2190 = vadd.f32 %v2085, %v2174
      %v2191 = vadd.f32 %v2086, %v2175
      %v2192 = vadd.f32 %v2087, %v2176
      %v2193 = vadd.f32 %v2088, %v2177
      %v2194 = vadd.f32 %v2089, %v2178
      %v2195 = vadd.f32 %v2090, %v2179
      %v2196 = vadd.f32 %v2091, %v2180
      %s2197 = scalar_lea.vmem %s6, 384
      %v2198 = vld [vmem:[%s2197] sm:$0xff]
      %v2199 = vld [vmem:[%s2197 + $0x8] sm:$0xff]
      %v2200 = vld [vmem:[%s2197 + $0x10] sm:$0xff]
      %v2201 = vld [vmem:[%s2197 + $0x18] sm:$0xff]
      %v2202 = vld [vmem:[%s2197 + $0x20] sm:$0xff]
      %v2203 = vld [vmem:[%s2197 + $0x28] sm:$0xff]
      %v2204 = vld [vmem:[%s2197 + $0x30] sm:$0xff]
      %v2205 = vld [vmem:[%s2197 + $0x38] sm:$0xff]
      %2207 = vset.pattern.permute.xlu0 0
      %2208 = vperm.xlu0 %2207, %v2198
      %v2209 = vpop.permute.xlu0 %2208
      %2212 = vset.pattern.permute.xlu0 0
      %2213 = vperm.xlu0 %2212, %v2199
      %v2214 = vpop.permute.xlu0 %2213
      %2217 = vset.pattern.permute.xlu0 0
      %2218 = vperm.xlu0 %2217, %v2200
      %v2219 = vpop.permute.xlu0 %2218
      %2222 = vset.pattern.permute.xlu0 0
      %2223 = vperm.xlu0 %2222, %v2201
      %v2224 = vpop.permute.xlu0 %2223
      %2227 = vset.pattern.permute.xlu0 0
      %2228 = vperm.xlu0 %2227, %v2202
      %v2229 = vpop.permute.xlu0 %2228
      %2232 = vset.pattern.permute.xlu0 0
      %2233 = vperm.xlu0 %2232, %v2203
      %v2234 = vpop.permute.xlu0 %2233
      %2237 = vset.pattern.permute.xlu0 0
      %2238 = vperm.xlu0 %2237, %v2204
      %v2239 = vpop.permute.xlu0 %2238
      %2242 = vset.pattern.permute.xlu0 0
      %2243 = vperm.xlu0 %2242, %v2205
      %v2244 = vpop.permute.xlu0 %2243
      %v2246 = vmul.f32 %v1534, %v2209
      %v2247 = vmul.f32 %v1533, %v2214
      %v2248 = vmul.f32 %v1532, %v2219
      %v2249 = vmul.f32 %v1531, %v2224
      %v2250 = vmul.f32 %v1530, %v2229
      %v2251 = vmul.f32 %v1529, %v2234
      %v2252 = vmul.f32 %v1528, %v2239
      %v2253 = vmul.f32 %v1527, %v2244
      %v2254 = vmul.f32 %v1526, %v2209
      %v2255 = vmul.f32 %v1525, %v2214
      %v2256 = vmul.f32 %v1524, %v2219
      %v2257 = vmul.f32 %v1523, %v2224
      %v2258 = vmul.f32 %v1522, %v2229
      %v2259 = vmul.f32 %v1521, %v2234
      %v2260 = vmul.f32 %v1520, %v2239
      %v2261 = vmul.f32 %v1535, %v2244
      %s2262 = scalar_lea.vmem %s5, 6
      %v2263 = vld [vmem:[%s2262] sm:$0x1]
      %v2265 = vlaneseq
      %v2266 = vshrl.u32 %v2265, 7
      %v2267 = vsub.s32 0, %v2266
      %v2268 = vrot.slane %v2263, %v2267
      %v2270 = vmul.f32 %v2246, %v2268
      %v2271 = vmul.f32 %v2247, %v2268
      %v2272 = vmul.f32 %v2248, %v2268
      %v2273 = vmul.f32 %v2249, %v2268
      %v2274 = vmul.f32 %v2250, %v2268
      %v2275 = vmul.f32 %v2251, %v2268
      %v2276 = vmul.f32 %v2252, %v2268
      %v2277 = vmul.f32 %v2253, %v2268
      %v2278 = vmul.f32 %v2254, %v2268
      %v2279 = vmul.f32 %v2255, %v2268
      %v2280 = vmul.f32 %v2256, %v2268
      %v2281 = vmul.f32 %v2257, %v2268
      %v2282 = vmul.f32 %v2258, %v2268
      %v2283 = vmul.f32 %v2259, %v2268
      %v2284 = vmul.f32 %v2260, %v2268
      %v2285 = vmul.f32 %v2261, %v2268
      %v2286 = vadd.f32 %v2181, %v2270
      %v2287 = vadd.f32 %v2182, %v2271
      %v2288 = vadd.f32 %v2183, %v2272
      %v2289 = vadd.f32 %v2184, %v2273
      %v2290 = vadd.f32 %v2185, %v2274
      %v2291 = vadd.f32 %v2186, %v2275
      %v2292 = vadd.f32 %v2187, %v2276
      %v2293 = vadd.f32 %v2188, %v2277
      %v2294 = vadd.f32 %v2189, %v2278
      %v2295 = vadd.f32 %v2190, %v2279
      %v2296 = vadd.f32 %v2191, %v2280
      %v2297 = vadd.f32 %v2192, %v2281
      %v2298 = vadd.f32 %v2193, %v2282
      %v2299 = vadd.f32 %v2194, %v2283
      %v2300 = vadd.f32 %v2195, %v2284
      %v2301 = vadd.f32 %v2196, %v2285
      %s2302 = scalar_lea.vmem %s6, 448
      %v2303 = vld [vmem:[%s2302] sm:$0xff]
      %v2304 = vld [vmem:[%s2302 + $0x8] sm:$0xff]
      %v2305 = vld [vmem:[%s2302 + $0x10] sm:$0xff]
      %v2306 = vld [vmem:[%s2302 + $0x18] sm:$0xff]
      %v2307 = vld [vmem:[%s2302 + $0x20] sm:$0xff]
      %v2308 = vld [vmem:[%s2302 + $0x28] sm:$0xff]
      %v2309 = vld [vmem:[%s2302 + $0x30] sm:$0xff]
      %v2310 = vld [vmem:[%s2302 + $0x38] sm:$0xff]
      %2312 = vset.pattern.permute.xlu0 0
      %2313 = vperm.xlu0 %2312, %v2303
      %v2314 = vpop.permute.xlu0 %2313
      %2317 = vset.pattern.permute.xlu0 0
      %2318 = vperm.xlu0 %2317, %v2304
      %v2319 = vpop.permute.xlu0 %2318
      %2322 = vset.pattern.permute.xlu0 0
      %2323 = vperm.xlu0 %2322, %v2305
      %v2324 = vpop.permute.xlu0 %2323
      %2327 = vset.pattern.permute.xlu0 0
      %2328 = vperm.xlu0 %2327, %v2306
      %v2329 = vpop.permute.xlu0 %2328
      %2332 = vset.pattern.permute.xlu0 0
      %2333 = vperm.xlu0 %2332, %v2307
      %v2334 = vpop.permute.xlu0 %2333
      %2337 = vset.pattern.permute.xlu0 0
      %2338 = vperm.xlu0 %2337, %v2308
      %v2339 = vpop.permute.xlu0 %2338
      %2342 = vset.pattern.permute.xlu0 0
      %2343 = vperm.xlu0 %2342, %v2309
      %v2344 = vpop.permute.xlu0 %2343
      %2347 = vset.pattern.permute.xlu0 0
      %2348 = vperm.xlu0 %2347, %v2310
      %v2349 = vpop.permute.xlu0 %2348
      %v2351 = vmul.f32 %v1486, %v2314
      %v2352 = vmul.f32 %v1487, %v2319
      %v2353 = vmul.f32 %v1488, %v2324
      %v2354 = vmul.f32 %v1489, %v2329
      %v2355 = vmul.f32 %v1490, %v2334
      %v2356 = vmul.f32 %v1491, %v2339
      %v2357 = vmul.f32 %v1492, %v2344
      %v2358 = vmul.f32 %v1493, %v2349
      %v2359 = vmul.f32 %v1494, %v2314
      %v2360 = vmul.f32 %v1495, %v2319
      %v2361 = vmul.f32 %v1496, %v2324
      %v2362 = vmul.f32 %v1497, %v2329
      %v2363 = vmul.f32 %v1498, %v2334
      %v2364 = vmul.f32 %v1499, %v2339
      %v2365 = vmul.f32 %v1500, %v2344
      %v2366 = vmul.f32 %v1485, %v2349
      %s2367 = scalar_lea.vmem %s5, 7
      %v2368 = vld [vmem:[%s2367] sm:$0x1]
      %v2370 = vlaneseq
      %v2371 = vshrl.u32 %v2370, 7
      %v2372 = vsub.s32 0, %v2371
      %v2373 = vrot.slane %v2368, %v2372
      %v2375 = vmul.f32 %v2351, %v2373
      %v2376 = vmul.f32 %v2352, %v2373
      %v2377 = vmul.f32 %v2353, %v2373
      %v2378 = vmul.f32 %v2354, %v2373
      %v2379 = vmul.f32 %v2355, %v2373
      %v2380 = vmul.f32 %v2356, %v2373
      %v2381 = vmul.f32 %v2357, %v2373
      %v2382 = vmul.f32 %v2358, %v2373
      %v2383 = vmul.f32 %v2359, %v2373
      %v2384 = vmul.f32 %v2360, %v2373
      %v2385 = vmul.f32 %v2361, %v2373
      %v2386 = vmul.f32 %v2362, %v2373
      %v2387 = vmul.f32 %v2363, %v2373
      %v2388 = vmul.f32 %v2364, %v2373
      %v2389 = vmul.f32 %v2365, %v2373
      %v2390 = vmul.f32 %v2366, %v2373
      %v2391 = vadd.f32 %v2286, %v2375
      %v2392 = vadd.f32 %v2287, %v2376
      %v2393 = vadd.f32 %v2288, %v2377
      %v2394 = vadd.f32 %v2289, %v2378
      %v2395 = vadd.f32 %v2290, %v2379
      %v2396 = vadd.f32 %v2291, %v2380
      %v2397 = vadd.f32 %v2292, %v2381
      %v2398 = vadd.f32 %v2293, %v2382
      %v2399 = vadd.f32 %v2294, %v2383
      %v2400 = vadd.f32 %v2295, %v2384
      %v2401 = vadd.f32 %v2296, %v2385
      %v2402 = vadd.f32 %v2297, %v2386
      %v2403 = vadd.f32 %v2298, %v2387
      %v2404 = vadd.f32 %v2299, %v2388
      %v2405 = vadd.f32 %v2300, %v2389
      %v2406 = vadd.f32 %v2301, %v2390
      %s2407 = scalar_lea.vmem %s6, 512
      %v2408 = vld [vmem:[%s2407] sm:$0xff]
      %v2409 = vld [vmem:[%s2407 + $0x8] sm:$0xff]
      %v2410 = vld [vmem:[%s2407 + $0x10] sm:$0xff]
      %v2411 = vld [vmem:[%s2407 + $0x18] sm:$0xff]
      %v2412 = vld [vmem:[%s2407 + $0x20] sm:$0xff]
      %v2413 = vld [vmem:[%s2407 + $0x28] sm:$0xff]
      %v2414 = vld [vmem:[%s2407 + $0x30] sm:$0xff]
      %v2415 = vld [vmem:[%s2407 + $0x38] sm:$0xff]
      %2417 = vset.pattern.permute.xlu0 0
      %2418 = vperm.xlu0 %2417, %v2408
      %v2419 = vpop.permute.xlu0 %2418
      %2422 = vset.pattern.permute.xlu0 0
      %2423 = vperm.xlu0 %2422, %v2409
      %v2424 = vpop.permute.xlu0 %2423
      %2427 = vset.pattern.permute.xlu0 0
      %2428 = vperm.xlu0 %2427, %v2410
      %v2429 = vpop.permute.xlu0 %2428
      %2432 = vset.pattern.permute.xlu0 0
      %2433 = vperm.xlu0 %2432, %v2411
      %v2434 = vpop.permute.xlu0 %2433
      %2437 = vset.pattern.permute.xlu0 0
      %2438 = vperm.xlu0 %2437, %v2412
      %v2439 = vpop.permute.xlu0 %2438
      %2442 = vset.pattern.permute.xlu0 0
      %2443 = vperm.xlu0 %2442, %v2413
      %v2444 = vpop.permute.xlu0 %2443
      %2447 = vset.pattern.permute.xlu0 0
      %2448 = vperm.xlu0 %2447, %v2414
      %v2449 = vpop.permute.xlu0 %2448
      %2452 = vset.pattern.permute.xlu0 0
      %2453 = vperm.xlu0 %2452, %v2415
      %v2454 = vpop.permute.xlu0 %2453
      %v2456 = vmul.f32 %v1774, %v2419
      %v2457 = vmul.f32 %v1773, %v2424
      %v2458 = vmul.f32 %v1772, %v2429
      %v2459 = vmul.f32 %v1771, %v2434
      %v2460 = vmul.f32 %v1770, %v2439
      %v2461 = vmul.f32 %v1769, %v2444
      %v2462 = vmul.f32 %v1768, %v2449
      %v2463 = vmul.f32 %v1767, %v2454
      %v2464 = vmul.f32 %v1766, %v2419
      %v2465 = vmul.f32 %v1765, %v2424
      %v2466 = vmul.f32 %v1764, %v2429
      %v2467 = vmul.f32 %v1763, %v2434
      %v2468 = vmul.f32 %v1762, %v2439
      %v2469 = vmul.f32 %v1761, %v2444
      %v2470 = vmul.f32 %v1776, %v2449
      %v2471 = vmul.f32 %v1775, %v2454
      %s2472 = scalar_lea.vmem %s5, 8
      %v2473 = vld [vmem:[%s2472] sm:$0x1]
      %v2475 = vlaneseq
      %v2476 = vshrl.u32 %v2475, 7
      %v2477 = vsub.s32 0, %v2476
      %v2478 = vrot.slane %v2473, %v2477
      %v2480 = vmul.f32 %v2456, %v2478
      %v2481 = vmul.f32 %v2457, %v2478
      %v2482 = vmul.f32 %v2458, %v2478
      %v2483 = vmul.f32 %v2459, %v2478
      %v2484 = vmul.f32 %v2460, %v2478
      %v2485 = vmul.f32 %v2461, %v2478
      %v2486 = vmul.f32 %v2462, %v2478
      %v2487 = vmul.f32 %v2463, %v2478
      %v2488 = vmul.f32 %v2464, %v2478
      %v2489 = vmul.f32 %v2465, %v2478
      %v2490 = vmul.f32 %v2466, %v2478
      %v2491 = vmul.f32 %v2467, %v2478
      %v2492 = vmul.f32 %v2468, %v2478
      %v2493 = vmul.f32 %v2469, %v2478
      %v2494 = vmul.f32 %v2470, %v2478
      %v2495 = vmul.f32 %v2471, %v2478
      %v2496 = vadd.f32 %v2391, %v2480
      %v2497 = vadd.f32 %v2392, %v2481
      %v2498 = vadd.f32 %v2393, %v2482
      %v2499 = vadd.f32 %v2394, %v2483
      %v2500 = vadd.f32 %v2395, %v2484
      %v2501 = vadd.f32 %v2396, %v2485
      %v2502 = vadd.f32 %v2397, %v2486
      %v2503 = vadd.f32 %v2398, %v2487
      %v2504 = vadd.f32 %v2399, %v2488
      %v2505 = vadd.f32 %v2400, %v2489
      %v2506 = vadd.f32 %v2401, %v2490
      %v2507 = vadd.f32 %v2402, %v2491
      %v2508 = vadd.f32 %v2403, %v2492
      %v2509 = vadd.f32 %v2404, %v2493
      %v2510 = vadd.f32 %v2405, %v2494
      %v2511 = vadd.f32 %v2406, %v2495
      %s2512 = scalar_lea.vmem %s3, 1
      %v2513 = vld [vmem:[%s2512] sm:$0x1]
      %v2515 = vlaneseq
      %v2516 = vshrl.u32 %v2515, 7
      %v2517 = vsub.s32 0, %v2516
      %v2518 = vrot.slane %v2513, %v2517
      %v2520 = vadd.f32 %v2496, %v2518
      %v2521 = vadd.f32 %v2497, %v2518
      %v2522 = vadd.f32 %v2498, %v2518
      %v2523 = vadd.f32 %v2499, %v2518
      %v2524 = vadd.f32 %v2500, %v2518
      %v2525 = vadd.f32 %v2501, %v2518
      %v2526 = vadd.f32 %v2502, %v2518
      %v2527 = vadd.f32 %v2503, %v2518
      %v2528 = vadd.f32 %v2504, %v2518
      %v2529 = vadd.f32 %v2505, %v2518
      %v2530 = vadd.f32 %v2506, %v2518
      %v2531 = vadd.f32 %v2507, %v2518
      %v2532 = vadd.f32 %v2508, %v2518
      %v2533 = vadd.f32 %v2509, %v2518
      %v2534 = vadd.f32 %v2510, %v2518
      %v2535 = vadd.f32 %v2511, %v2518
      %s2536 = scalar_lea.vmem %s7, 128
      %v2537 = vld [vmem:[%s2536] sm:$0xff]
      %v2538 = vld [vmem:[%s2536 + $0x8] sm:$0xff]
      %v2539 = vld [vmem:[%s2536 + $0x10] sm:$0xff]
      %v2540 = vld [vmem:[%s2536 + $0x18] sm:$0xff]
      %v2541 = vld [vmem:[%s2536 + $0x20] sm:$0xff]
      %v2542 = vld [vmem:[%s2536 + $0x28] sm:$0xff]
      %v2543 = vld [vmem:[%s2536 + $0x30] sm:$0xff]
      %v2544 = vld [vmem:[%s2536 + $0x38] sm:$0xff]
      %s2545 = scalar_lea.vmem %s7, 192
      %v2546 = vld [vmem:[%s2545] sm:$0xff]
      %v2547 = vld [vmem:[%s2545 + $0x8] sm:$0xff]
      %v2548 = vld [vmem:[%s2545 + $0x10] sm:$0xff]
      %v2549 = vld [vmem:[%s2545 + $0x18] sm:$0xff]
      %v2550 = vld [vmem:[%s2545 + $0x20] sm:$0xff]
      %v2551 = vld [vmem:[%s2545 + $0x28] sm:$0xff]
      %v2552 = vld [vmem:[%s2545 + $0x30] sm:$0xff]
      %v2553 = vld [vmem:[%s2545 + $0x38] sm:$0xff]
      %v2554 = vsel %vm814, %v2520, 0.0
      %2555 = vadd.xlane.f32.xlu0 %v2554
      %v2556 = vpop.xlane.xlu0 %2555
      %v2557 = vsel %vm814, %v2521, 0.0
      %2558 = vadd.xlane.f32.xlu0 %v2557
      %v2559 = vpop.xlane.xlu0 %2558
      %v2560 = vsel %vm814, %v2522, 0.0
      %2561 = vadd.xlane.f32.xlu0 %v2560
      %v2562 = vpop.xlane.xlu0 %2561
      %v2563 = vsel %vm814, %v2523, 0.0
      %2564 = vadd.xlane.f32.xlu0 %v2563
      %v2565 = vpop.xlane.xlu0 %2564
      %v2566 = vsel %vm814, %v2524, 0.0
      %2567 = vadd.xlane.f32.xlu0 %v2566
      %v2568 = vpop.xlane.xlu0 %2567
      %v2569 = vsel %vm814, %v2525, 0.0
      %2570 = vadd.xlane.f32.xlu0 %v2569
      %v2571 = vpop.xlane.xlu0 %2570
      %v2572 = vsel %vm814, %v2526, 0.0
      %2573 = vadd.xlane.f32.xlu0 %v2572
      %v2574 = vpop.xlane.xlu0 %2573
      %v2575 = vsel %vm814, %v2527, 0.0
      %2576 = vadd.xlane.f32.xlu0 %v2575
      %v2577 = vpop.xlane.xlu0 %2576
      %v2578 = vsel %vm814, %v2528, 0.0
      %2579 = vadd.xlane.f32.xlu0 %v2578
      %v2580 = vpop.xlane.xlu0 %2579
      %v2581 = vsel %vm814, %v2529, 0.0
      %2582 = vadd.xlane.f32.xlu0 %v2581
      %v2583 = vpop.xlane.xlu0 %2582
      %v2584 = vsel %vm814, %v2530, 0.0
      %2585 = vadd.xlane.f32.xlu0 %v2584
      %v2586 = vpop.xlane.xlu0 %2585
      %v2587 = vsel %vm814, %v2531, 0.0
      %2588 = vadd.xlane.f32.xlu0 %v2587
      %v2589 = vpop.xlane.xlu0 %2588
      %v2590 = vsel %vm814, %v2532, 0.0
      %2591 = vadd.xlane.f32.xlu0 %v2590
      %v2592 = vpop.xlane.xlu0 %2591
      %v2593 = vsel %vm814, %v2533, 0.0
      %2594 = vadd.xlane.f32.xlu0 %v2593
      %v2595 = vpop.xlane.xlu0 %2594
      %v2596 = vsel %vm814, %v2534, 0.0
      %2597 = vadd.xlane.f32.xlu0 %v2596
      %v2598 = vpop.xlane.xlu0 %2597
      %v2599 = vsel %vm814, %v2535, 0.0
      %2600 = vadd.xlane.f32.xlu0 %v2599
      %v2601 = vpop.xlane.xlu0 %2600
      %v2602 = vmul.f32 %v2556, %v863
      %v2603 = vmul.f32 %v2559, %v863
      %v2604 = vmul.f32 %v2562, %v863
      %v2605 = vmul.f32 %v2565, %v863
      %v2606 = vmul.f32 %v2568, %v863
      %v2607 = vmul.f32 %v2571, %v863
      %v2608 = vmul.f32 %v2574, %v863
      %v2609 = vmul.f32 %v2577, %v863
      %v2610 = vmul.f32 %v2580, %v863
      %v2611 = vmul.f32 %v2583, %v863
      %v2612 = vmul.f32 %v2586, %v863
      %v2613 = vmul.f32 %v2589, %v863
      %v2614 = vmul.f32 %v2592, %v863
      %v2615 = vmul.f32 %v2595, %v863
      %v2616 = vmul.f32 %v2598, %v863
      %v2617 = vmul.f32 %v2601, %v863
      %v2618 = vadd.f32 %v2602, %v2603
      %v2619 = vadd.f32 %v2618, %v2604
      %v2620 = vadd.f32 %v2619, %v2605
      %v2621 = vadd.f32 %v2620, %v2606
      %v2622 = vadd.f32 %v2621, %v2607
      %v2623 = vadd.f32 %v2622, %v2608
      %v2624 = vadd.f32 %v2623, %v2609
      %v2625 = vrot.slane %v2624, 4
      %v2626 = vadd.f32 %v2624, %v2625
      %v2627 = vrot.slane %v2626, 2
      %v2628 = vadd.f32 %v2626, %v2627
      %v2629 = vrot.slane %v2628, 1
      %v2630 = vadd.f32 %v2628, %v2629
      %v2631 = vadd.f32 %v2610, %v2611
      %v2632 = vadd.f32 %v2631, %v2612
      %v2633 = vadd.f32 %v2632, %v2613
      %v2634 = vadd.f32 %v2633, %v2614
      %v2635 = vadd.f32 %v2634, %v2615
      %v2636 = vadd.f32 %v2635, %v2616
      %v2637 = vadd.f32 %v2636, %v2617
      %v2638 = vrot.slane %v2637, 4
      %v2639 = vadd.f32 %v2637, %v2638
      %v2640 = vrot.slane %v2639, 2
      %v2641 = vadd.f32 %v2639, %v2640
      %v2642 = vrot.slane %v2641, 1
      %v2643 = vadd.f32 %v2641, %v2642
      %v2644 = vmul.f32 %v2630, %v906
      %v2645 = vmul.f32 %v2643, %v906
      %v2646 = vsub.f32 %v2520, %v2644
      %v2647 = vsub.f32 %v2521, %v2644
      %v2648 = vsub.f32 %v2522, %v2644
      %v2649 = vsub.f32 %v2523, %v2644
      %v2650 = vsub.f32 %v2524, %v2644
      %v2651 = vsub.f32 %v2525, %v2644
      %v2652 = vsub.f32 %v2526, %v2644
      %v2653 = vsub.f32 %v2527, %v2644
      %v2654 = vsub.f32 %v2528, %v2645
      %v2655 = vsub.f32 %v2529, %v2645
      %v2656 = vsub.f32 %v2530, %v2645
      %v2657 = vsub.f32 %v2531, %v2645
      %v2658 = vsub.f32 %v2532, %v2645
      %v2659 = vsub.f32 %v2533, %v2645
      %v2660 = vsub.f32 %v2534, %v2645
      %v2661 = vsub.f32 %v2535, %v2645
      %v2662 = vmul.f32 %v2646, %v2646
      %v2663 = vmul.f32 %v2647, %v2647
      %v2664 = vmul.f32 %v2648, %v2648
      %v2665 = vmul.f32 %v2649, %v2649
      %v2666 = vmul.f32 %v2650, %v2650
      %v2667 = vmul.f32 %v2651, %v2651
      %v2668 = vmul.f32 %v2652, %v2652
      %v2669 = vmul.f32 %v2653, %v2653
      %v2670 = vmul.f32 %v2654, %v2654
      %v2671 = vmul.f32 %v2655, %v2655
      %v2672 = vmul.f32 %v2656, %v2656
      %v2673 = vmul.f32 %v2657, %v2657
      %v2674 = vmul.f32 %v2658, %v2658
      %v2675 = vmul.f32 %v2659, %v2659
      %v2676 = vmul.f32 %v2660, %v2660
      %v2677 = vmul.f32 %v2661, %v2661
      %v2678 = vsel %vm814, %v2662, 0.0
      %2679 = vadd.xlane.f32.xlu0 %v2678
      %v2680 = vpop.xlane.xlu0 %2679
      %v2681 = vsel %vm814, %v2663, 0.0
      %2682 = vadd.xlane.f32.xlu0 %v2681
      %v2683 = vpop.xlane.xlu0 %2682
      %v2684 = vsel %vm814, %v2664, 0.0
      %2685 = vadd.xlane.f32.xlu0 %v2684
      %v2686 = vpop.xlane.xlu0 %2685
      %v2687 = vsel %vm814, %v2665, 0.0
      %2688 = vadd.xlane.f32.xlu0 %v2687
      %v2689 = vpop.xlane.xlu0 %2688
      %v2690 = vsel %vm814, %v2666, 0.0
      %2691 = vadd.xlane.f32.xlu0 %v2690
      %v2692 = vpop.xlane.xlu0 %2691
      %v2693 = vsel %vm814, %v2667, 0.0
      %2694 = vadd.xlane.f32.xlu0 %v2693
      %v2695 = vpop.xlane.xlu0 %2694
      %v2696 = vsel %vm814, %v2668, 0.0
      %2697 = vadd.xlane.f32.xlu0 %v2696
      %v2698 = vpop.xlane.xlu0 %2697
      %v2699 = vsel %vm814, %v2669, 0.0
      %2700 = vadd.xlane.f32.xlu0 %v2699
      %v2701 = vpop.xlane.xlu0 %2700
      %v2702 = vsel %vm814, %v2670, 0.0
      %2703 = vadd.xlane.f32.xlu0 %v2702
      %v2704 = vpop.xlane.xlu0 %2703
      %v2705 = vsel %vm814, %v2671, 0.0
      %2706 = vadd.xlane.f32.xlu0 %v2705
      %v2707 = vpop.xlane.xlu0 %2706
      %v2708 = vsel %vm814, %v2672, 0.0
      %2709 = vadd.xlane.f32.xlu0 %v2708
      %v2710 = vpop.xlane.xlu0 %2709
      %v2711 = vsel %vm814, %v2673, 0.0
      %2712 = vadd.xlane.f32.xlu0 %v2711
      %v2713 = vpop.xlane.xlu0 %2712
      %v2714 = vsel %vm814, %v2674, 0.0
      %2715 = vadd.xlane.f32.xlu0 %v2714
      %v2716 = vpop.xlane.xlu0 %2715
      %v2717 = vsel %vm814, %v2675, 0.0
      %2718 = vadd.xlane.f32.xlu0 %v2717
      %v2719 = vpop.xlane.xlu0 %2718
      %v2720 = vsel %vm814, %v2676, 0.0
      %2721 = vadd.xlane.f32.xlu0 %v2720
      %v2722 = vpop.xlane.xlu0 %2721
      %v2723 = vsel %vm814, %v2677, 0.0
      %2724 = vadd.xlane.f32.xlu0 %v2723
      %v2725 = vpop.xlane.xlu0 %2724
      %v2726 = vmul.f32 %v2680, %v863
      %v2727 = vmul.f32 %v2683, %v863
      %v2728 = vmul.f32 %v2686, %v863
      %v2729 = vmul.f32 %v2689, %v863
      %v2730 = vmul.f32 %v2692, %v863
      %v2731 = vmul.f32 %v2695, %v863
      %v2732 = vmul.f32 %v2698, %v863
      %v2733 = vmul.f32 %v2701, %v863
      %v2734 = vmul.f32 %v2704, %v863
      %v2735 = vmul.f32 %v2707, %v863
      %v2736 = vmul.f32 %v2710, %v863
      %v2737 = vmul.f32 %v2713, %v863
      %v2738 = vmul.f32 %v2716, %v863
      %v2739 = vmul.f32 %v2719, %v863
      %v2740 = vmul.f32 %v2722, %v863
      %v2741 = vmul.f32 %v2725, %v863
      %v2742 = vadd.f32 %v2726, %v2727
      %v2743 = vadd.f32 %v2742, %v2728
      %v2744 = vadd.f32 %v2743, %v2729
      %v2745 = vadd.f32 %v2744, %v2730
      %v2746 = vadd.f32 %v2745, %v2731
      %v2747 = vadd.f32 %v2746, %v2732
      %v2748 = vadd.f32 %v2747, %v2733
      %v2749 = vrot.slane %v2748, 4
      %v2750 = vadd.f32 %v2748, %v2749
      %v2751 = vrot.slane %v2750, 2
      %v2752 = vadd.f32 %v2750, %v2751
      %v2753 = vrot.slane %v2752, 1
      %v2754 = vadd.f32 %v2752, %v2753
      %v2755 = vadd.f32 %v2734, %v2735
      %v2756 = vadd.f32 %v2755, %v2736
      %v2757 = vadd.f32 %v2756, %v2737
      %v2758 = vadd.f32 %v2757, %v2738
      %v2759 = vadd.f32 %v2758, %v2739
      %v2760 = vadd.f32 %v2759, %v2740
      %v2761 = vadd.f32 %v2760, %v2741
      %v2762 = vrot.slane %v2761, 4
      %v2763 = vadd.f32 %v2761, %v2762
      %v2764 = vrot.slane %v2763, 2
      %v2765 = vadd.f32 %v2763, %v2764
      %v2766 = vrot.slane %v2765, 1
      %v2767 = vadd.f32 %v2765, %v2766
      %v2768 = vmul.f32 %v2754, %v906
      %v2769 = vmul.f32 %v2767, %v906
      %v2770 = vadd.f32 %v2768, 1e-05
      %v2771 = vadd.f32 %v2769, 1e-05
      %v2772 = vrsqrt.pop %v2770
      %v2773 = vrsqrt.pop %v2771
      %v2774 = vmul.f32 %v2646, %v2772
      %v2775 = vmul.f32 %v2647, %v2772
      %v2776 = vmul.f32 %v2648, %v2772
      %v2777 = vmul.f32 %v2649, %v2772
      %v2778 = vmul.f32 %v2650, %v2772
      %v2779 = vmul.f32 %v2651, %v2772
      %v2780 = vmul.f32 %v2652, %v2772
      %v2781 = vmul.f32 %v2653, %v2772
      %v2782 = vmul.f32 %v2654, %v2773
      %v2783 = vmul.f32 %v2655, %v2773
      %v2784 = vmul.f32 %v2656, %v2773
      %v2785 = vmul.f32 %v2657, %v2773
      %v2786 = vmul.f32 %v2658, %v2773
      %v2787 = vmul.f32 %v2659, %v2773
      %v2788 = vmul.f32 %v2660, %v2773
      %v2789 = vmul.f32 %v2661, %v2773
      %v2790 = vmul.f32 %v2774, %v2537
      %v2791 = vmul.f32 %v2775, %v2538
      %v2792 = vmul.f32 %v2776, %v2539
      %v2793 = vmul.f32 %v2777, %v2540
      %v2794 = vmul.f32 %v2778, %v2541
      %v2795 = vmul.f32 %v2779, %v2542
      %v2796 = vmul.f32 %v2780, %v2543
      %v2797 = vmul.f32 %v2781, %v2544
      %v2798 = vmul.f32 %v2782, %v2537
      %v2799 = vmul.f32 %v2783, %v2538
      %v2800 = vmul.f32 %v2784, %v2539
      %v2801 = vmul.f32 %v2785, %v2540
      %v2802 = vmul.f32 %v2786, %v2541
      %v2803 = vmul.f32 %v2787, %v2542
      %v2804 = vmul.f32 %v2788, %v2543
      %v2805 = vmul.f32 %v2789, %v2544
      %v2806 = vadd.f32 %v2790, %v2546
      %v2807 = vadd.f32 %v2791, %v2547
      %v2808 = vadd.f32 %v2792, %v2548
      %v2809 = vadd.f32 %v2793, %v2549
      %v2810 = vadd.f32 %v2794, %v2550
      %v2811 = vadd.f32 %v2795, %v2551
      %v2812 = vadd.f32 %v2796, %v2552
      %v2813 = vadd.f32 %v2797, %v2553
      %v2814 = vadd.f32 %v2798, %v2546
      %v2815 = vadd.f32 %v2799, %v2547
      %v2816 = vadd.f32 %v2800, %v2548
      %v2817 = vadd.f32 %v2801, %v2549
      %v2818 = vadd.f32 %v2802, %v2550
      %v2819 = vadd.f32 %v2803, %v2551
      %v2820 = vadd.f32 %v2804, %v2552
      %v2821 = vadd.f32 %v2805, %v2553
      %v2822 = vmul.f32 %v2806, 0.5
      %v2823 = vmul.f32 %v2807, 0.5
      %v2824 = vmul.f32 %v2808, 0.5
      %v2825 = vmul.f32 %v2809, 0.5
      %v2826 = vmul.f32 %v2810, 0.5
      %v2827 = vmul.f32 %v2811, 0.5
      %v2828 = vmul.f32 %v2812, 0.5
      %v2829 = vmul.f32 %v2813, 0.5
      %v2830 = vmul.f32 %v2814, 0.5
      %v2831 = vmul.f32 %v2815, 0.5
      %v2832 = vmul.f32 %v2816, 0.5
      %v2833 = vmul.f32 %v2817, 0.5
      %v2834 = vmul.f32 %v2818, 0.5
      %v2835 = vmul.f32 %v2819, 0.5
      %v2836 = vmul.f32 %v2820, 0.5
      %v2837 = vmul.f32 %v2821, 0.5
      %v2838 = vmul.f32 %v2806, 0.70710677
      %v2839 = vmul.f32 %v2807, 0.70710677
      %v2840 = vmul.f32 %v2808, 0.70710677
      %v2841 = vmul.f32 %v2809, 0.70710677
      %v2842 = vmul.f32 %v2810, 0.70710677
      %v2843 = vmul.f32 %v2811, 0.70710677
      %v2844 = vmul.f32 %v2812, 0.70710677
      %v2845 = vmul.f32 %v2813, 0.70710677
      %v2846 = vmul.f32 %v2814, 0.70710677
      %v2847 = vmul.f32 %v2815, 0.70710677
      %v2848 = vmul.f32 %v2816, 0.70710677
      %v2849 = vmul.f32 %v2817, 0.70710677
      %v2850 = vmul.f32 %v2818, 0.70710677
      %v2851 = vmul.f32 %v2819, 0.70710677
      %v2852 = vmul.f32 %v2820, 0.70710677
      %v2853 = vmul.f32 %v2821, 0.70710677
      %vm2854 = vcmp.ge.f32.partialorder %v2838, 0.0
      %vm2855 = vcmp.ge.f32.partialorder %v2839, 0.0
      %vm2856 = vcmp.ge.f32.partialorder %v2840, 0.0
      %vm2857 = vcmp.ge.f32.partialorder %v2841, 0.0
      %vm2858 = vcmp.ge.f32.partialorder %v2842, 0.0
      %vm2859 = vcmp.ge.f32.partialorder %v2843, 0.0
      %vm2860 = vcmp.ge.f32.partialorder %v2844, 0.0
      %vm2861 = vcmp.ge.f32.partialorder %v2845, 0.0
      %vm2862 = vcmp.ge.f32.partialorder %v2846, 0.0
      %vm2863 = vcmp.ge.f32.partialorder %v2847, 0.0
      %vm2864 = vcmp.ge.f32.partialorder %v2848, 0.0
      %vm2865 = vcmp.ge.f32.partialorder %v2849, 0.0
      %vm2866 = vcmp.ge.f32.partialorder %v2850, 0.0
      %vm2867 = vcmp.ge.f32.partialorder %v2851, 0.0
      %vm2868 = vcmp.ge.f32.partialorder %v2852, 0.0
      %vm2869 = vcmp.ge.f32.partialorder %v2853, 0.0
      %v2870 = vsel %vm2854, 1.0, -1.0
      %v2871 = vsel %vm2855, 1.0, -1.0
      %v2872 = vsel %vm2856, 1.0, -1.0
      %v2873 = vsel %vm2857, 1.0, -1.0
      %v2874 = vsel %vm2858, 1.0, -1.0
      %v2875 = vsel %vm2859, 1.0, -1.0
      %v2876 = vsel %vm2860, 1.0, -1.0
      %v2877 = vsel %vm2861, 1.0, -1.0
      %v2878 = vsel %vm2862, 1.0, -1.0
      %v2879 = vsel %vm2863, 1.0, -1.0
      %v2880 = vsel %vm2864, 1.0, -1.0
      %v2881 = vsel %vm2865, 1.0, -1.0
      %v2882 = vsel %vm2866, 1.0, -1.0
      %v2883 = vsel %vm2867, 1.0, -1.0
      %v2884 = vsel %vm2868, 1.0, -1.0
      %v2885 = vsel %vm2869, 1.0, -1.0
      %v2886 = vand.u32 2147483647, %v2838
      %v2887 = vand.u32 2147483647, %v2839
      %v2888 = vand.u32 2147483647, %v2840
      %v2889 = vand.u32 2147483647, %v2841
      %v2890 = vand.u32 2147483647, %v2842
      %v2891 = vand.u32 2147483647, %v2843
      %v2892 = vand.u32 2147483647, %v2844
      %v2893 = vand.u32 2147483647, %v2845
      %v2894 = vand.u32 2147483647, %v2846
      %v2895 = vand.u32 2147483647, %v2847
      %v2896 = vand.u32 2147483647, %v2848
      %v2897 = vand.u32 2147483647, %v2849
      %v2898 = vand.u32 2147483647, %v2850
      %v2899 = vand.u32 2147483647, %v2851
      %v2900 = vand.u32 2147483647, %v2852
      %v2901 = vand.u32 2147483647, %v2853
      %v2902 = vmul.f32 %v2886, 0.3275911
      %v2903 = vmul.f32 %v2887, 0.3275911
      %v2904 = vmul.f32 %v2888, 0.3275911
      %v2905 = vmul.f32 %v2889, 0.3275911
      %v2906 = vmul.f32 %v2890, 0.3275911
      %v2907 = vmul.f32 %v2891, 0.3275911
      %v2908 = vmul.f32 %v2892, 0.3275911
      %v2909 = vmul.f32 %v2893, 0.3275911
      %v2910 = vmul.f32 %v2894, 0.3275911
      %v2911 = vmul.f32 %v2895, 0.3275911
      %v2912 = vmul.f32 %v2896, 0.3275911
      %v2913 = vmul.f32 %v2897, 0.3275911
      %v2914 = vmul.f32 %v2898, 0.3275911
      %v2915 = vmul.f32 %v2899, 0.3275911
      %v2916 = vmul.f32 %v2900, 0.3275911
      %v2917 = vmul.f32 %v2901, 0.3275911
      %v2918 = vadd.f32 %v2902, 1.0
      %v2919 = vadd.f32 %v2903, 1.0
      %v2920 = vadd.f32 %v2904, 1.0
      %v2921 = vadd.f32 %v2905, 1.0
      %v2922 = vadd.f32 %v2906, 1.0
      %v2923 = vadd.f32 %v2907, 1.0
      %v2924 = vadd.f32 %v2908, 1.0
      %v2925 = vadd.f32 %v2909, 1.0
      %v2926 = vadd.f32 %v2910, 1.0
      %v2927 = vadd.f32 %v2911, 1.0
      %v2928 = vadd.f32 %v2912, 1.0
      %v2929 = vadd.f32 %v2913, 1.0
      %v2930 = vadd.f32 %v2914, 1.0
      %v2931 = vadd.f32 %v2915, 1.0
      %v2932 = vadd.f32 %v2916, 1.0
      %v2933 = vadd.f32 %v2917, 1.0
      %v2934 = vrcp.pop %v2918
      %v2935 = vrcp.pop %v2919
      %v2936 = vrcp.pop %v2920
      %v2937 = vrcp.pop %v2921
      %v2938 = vrcp.pop %v2922
      %v2939 = vrcp.pop %v2923
      %v2940 = vrcp.pop %v2924
      %v2941 = vrcp.pop %v2925
      %v2942 = vrcp.pop %v2926
      %v2943 = vrcp.pop %v2927
      %v2944 = vrcp.pop %v2928
      %v2945 = vrcp.pop %v2929
      %v2946 = vrcp.pop %v2930
      %v2947 = vrcp.pop %v2931
      %v2948 = vrcp.pop %v2932
      %v2949 = vrcp.pop %v2933
      %v2950 = vmul.f32 %v2934, 1.0614054
      %v2951 = vmul.f32 %v2935, 1.0614054
      %v2952 = vmul.f32 %v2936, 1.0614054
      %v2953 = vmul.f32 %v2937, 1.0614054
      %v2954 = vmul.f32 %v2938, 1.0614054
      %v2955 = vmul.f32 %v2939, 1.0614054
      %v2956 = vmul.f32 %v2940, 1.0614054
      %v2957 = vmul.f32 %v2941, 1.0614054
      %v2958 = vmul.f32 %v2942, 1.0614054
      %v2959 = vmul.f32 %v2943, 1.0614054
      %v2960 = vmul.f32 %v2944, 1.0614054
      %v2961 = vmul.f32 %v2945, 1.0614054
      %v2962 = vmul.f32 %v2946, 1.0614054
      %v2963 = vmul.f32 %v2947, 1.0614054
      %v2964 = vmul.f32 %v2948, 1.0614054
      %v2965 = vmul.f32 %v2949, 1.0614054
      %v2966 = vadd.f32 %v2950, -1.4531521
      %v2967 = vadd.f32 %v2951, -1.4531521
      %v2968 = vadd.f32 %v2952, -1.4531521
      %v2969 = vadd.f32 %v2953, -1.4531521
      %v2970 = vadd.f32 %v2954, -1.4531521
      %v2971 = vadd.f32 %v2955, -1.4531521
      %v2972 = vadd.f32 %v2956, -1.4531521
      %v2973 = vadd.f32 %v2957, -1.4531521
      %v2974 = vadd.f32 %v2958, -1.4531521
      %v2975 = vadd.f32 %v2959, -1.4531521
      %v2976 = vadd.f32 %v2960, -1.4531521
      %v2977 = vadd.f32 %v2961, -1.4531521
      %v2978 = vadd.f32 %v2962, -1.4531521
      %v2979 = vadd.f32 %v2963, -1.4531521
      %v2980 = vadd.f32 %v2964, -1.4531521
      %v2981 = vadd.f32 %v2965, -1.4531521
      %v2982 = vmul.f32 %v2966, %v2934
      %v2983 = vmul.f32 %v2967, %v2935
      %v2984 = vmul.f32 %v2968, %v2936
      %v2985 = vmul.f32 %v2969, %v2937
      %v2986 = vmul.f32 %v2970, %v2938
      %v2987 = vmul.f32 %v2971, %v2939
      %v2988 = vmul.f32 %v2972, %v2940
      %v2989 = vmul.f32 %v2973, %v2941
      %v2990 = vmul.f32 %v2974, %v2942
      %v2991 = vmul.f32 %v2975, %v2943
      %v2992 = vmul.f32 %v2976, %v2944
      %v2993 = vmul.f32 %v2977, %v2945
      %v2994 = vmul.f32 %v2978, %v2946
      %v2995 = vmul.f32 %v2979, %v2947
      %v2996 = vmul.f32 %v2980, %v2948
      %v2997 = vmul.f32 %v2981, %v2949
      %v2998 = vadd.f32 %v2982, 1.4214138
      %v2999 = vadd.f32 %v2983, 1.4214138
      %v3000 = vadd.f32 %v2984, 1.4214138
      %v3001 = vadd.f32 %v2985, 1.4214138
      %v3002 = vadd.f32 %v2986, 1.4214138
      %v3003 = vadd.f32 %v2987, 1.4214138
      %v3004 = vadd.f32 %v2988, 1.4214138
      %v3005 = vadd.f32 %v2989, 1.4214138
      %v3006 = vadd.f32 %v2990, 1.4214138
      %v3007 = vadd.f32 %v2991, 1.4214138
      %v3008 = vadd.f32 %v2992, 1.4214138
      %v3009 = vadd.f32 %v2993, 1.4214138
      %v3010 = vadd.f32 %v2994, 1.4214138
      %v3011 = vadd.f32 %v2995, 1.4214138
      %v3012 = vadd.f32 %v2996, 1.4214138
      %v3013 = vadd.f32 %v2997, 1.4214138
      %v3014 = vmul.f32 %v2998, %v2934
      %v3015 = vmul.f32 %v2999, %v2935
      %v3016 = vmul.f32 %v3000, %v2936
      %v3017 = vmul.f32 %v3001, %v2937
      %v3018 = vmul.f32 %v3002, %v2938
      %v3019 = vmul.f32 %v3003, %v2939
      %v3020 = vmul.f32 %v3004, %v2940
      %v3021 = vmul.f32 %v3005, %v2941
      %v3022 = vmul.f32 %v3006, %v2942
      %v3023 = vmul.f32 %v3007, %v2943
      %v3024 = vmul.f32 %v3008, %v2944
      %v3025 = vmul.f32 %v3009, %v2945
      %v3026 = vmul.f32 %v3010, %v2946
      %v3027 = vmul.f32 %v3011, %v2947
      %v3028 = vmul.f32 %v3012, %v2948
      %v3029 = vmul.f32 %v3013, %v2949
      %v3030 = vadd.f32 %v3014, -0.28449672
      %v3031 = vadd.f32 %v3015, -0.28449672
      %v3032 = vadd.f32 %v3016, -0.28449672
      %v3033 = vadd.f32 %v3017, -0.28449672
      %v3034 = vadd.f32 %v3018, -0.28449672
      %v3035 = vadd.f32 %v3019, -0.28449672
      %v3036 = vadd.f32 %v3020, -0.28449672
      %v3037 = vadd.f32 %v3021, -0.28449672
      %v3038 = vadd.f32 %v3022, -0.28449672
      %v3039 = vadd.f32 %v3023, -0.28449672
      %v3040 = vadd.f32 %v3024, -0.28449672
      %v3041 = vadd.f32 %v3025, -0.28449672
      %v3042 = vadd.f32 %v3026, -0.28449672
      %v3043 = vadd.f32 %v3027, -0.28449672
      %v3044 = vadd.f32 %v3028, -0.28449672
      %v3045 = vadd.f32 %v3029, -0.28449672
      %v3046 = vmul.f32 %v3030, %v2934
      %v3047 = vmul.f32 %v3031, %v2935
      %v3048 = vmul.f32 %v3032, %v2936
      %v3049 = vmul.f32 %v3033, %v2937
      %v3050 = vmul.f32 %v3034, %v2938
      %v3051 = vmul.f32 %v3035, %v2939
      %v3052 = vmul.f32 %v3036, %v2940
      %v3053 = vmul.f32 %v3037, %v2941
      %v3054 = vmul.f32 %v3038, %v2942
      %v3055 = vmul.f32 %v3039, %v2943
      %v3056 = vmul.f32 %v3040, %v2944
      %v3057 = vmul.f32 %v3041, %v2945
      %v3058 = vmul.f32 %v3042, %v2946
      %v3059 = vmul.f32 %v3043, %v2947
      %v3060 = vmul.f32 %v3044, %v2948
      %v3061 = vmul.f32 %v3045, %v2949
      %v3062 = vadd.f32 %v3046, 0.2548296
      %v3063 = vadd.f32 %v3047, 0.2548296
      %v3064 = vadd.f32 %v3048, 0.2548296
      %v3065 = vadd.f32 %v3049, 0.2548296
      %v3066 = vadd.f32 %v3050, 0.2548296
      %v3067 = vadd.f32 %v3051, 0.2548296
      %v3068 = vadd.f32 %v3052, 0.2548296
      %v3069 = vadd.f32 %v3053, 0.2548296
      %v3070 = vadd.f32 %v3054, 0.2548296
      %v3071 = vadd.f32 %v3055, 0.2548296
      %v3072 = vadd.f32 %v3056, 0.2548296
      %v3073 = vadd.f32 %v3057, 0.2548296
      %v3074 = vadd.f32 %v3058, 0.2548296
      %v3075 = vadd.f32 %v3059, 0.2548296
      %v3076 = vadd.f32 %v3060, 0.2548296
      %v3077 = vadd.f32 %v3061, 0.2548296
      %v3078 = vmul.f32 %v3062, %v2934
      %v3079 = vmul.f32 %v3063, %v2935
      %v3080 = vmul.f32 %v3064, %v2936
      %v3081 = vmul.f32 %v3065, %v2937
      %v3082 = vmul.f32 %v3066, %v2938
      %v3083 = vmul.f32 %v3067, %v2939
      %v3084 = vmul.f32 %v3068, %v2940
      %v3085 = vmul.f32 %v3069, %v2941
      %v3086 = vmul.f32 %v3070, %v2942
      %v3087 = vmul.f32 %v3071, %v2943
      %v3088 = vmul.f32 %v3072, %v2944
      %v3089 = vmul.f32 %v3073, %v2945
      %v3090 = vmul.f32 %v3074, %v2946
      %v3091 = vmul.f32 %v3075, %v2947
      %v3092 = vmul.f32 %v3076, %v2948
      %v3093 = vmul.f32 %v3077, %v2949
      %v3094 = vsub.f32 0.0, %v2886
      %v3095 = vsub.f32 0.0, %v2887
      %v3096 = vsub.f32 0.0, %v2888
      %v3097 = vsub.f32 0.0, %v2889
      %v3098 = vsub.f32 0.0, %v2890
      %v3099 = vsub.f32 0.0, %v2891
      %v3100 = vsub.f32 0.0, %v2892
      %v3101 = vsub.f32 0.0, %v2893
      %v3102 = vsub.f32 0.0, %v2894
      %v3103 = vsub.f32 0.0, %v2895
      %v3104 = vsub.f32 0.0, %v2896
      %v3105 = vsub.f32 0.0, %v2897
      %v3106 = vsub.f32 0.0, %v2898
      %v3107 = vsub.f32 0.0, %v2899
      %v3108 = vsub.f32 0.0, %v2900
      %v3109 = vsub.f32 0.0, %v2901
      %v3110 = vmul.f32 %v3094, %v2886
      %v3111 = vmul.f32 %v3095, %v2887
      %v3112 = vmul.f32 %v3096, %v2888
      %v3113 = vmul.f32 %v3097, %v2889
      %v3114 = vmul.f32 %v3098, %v2890
      %v3115 = vmul.f32 %v3099, %v2891
      %v3116 = vmul.f32 %v3100, %v2892
      %v3117 = vmul.f32 %v3101, %v2893
      %v3118 = vmul.f32 %v3102, %v2894
      %v3119 = vmul.f32 %v3103, %v2895
      %v3120 = vmul.f32 %v3104, %v2896
      %v3121 = vmul.f32 %v3105, %v2897
      %v3122 = vmul.f32 %v3106, %v2898
      %v3123 = vmul.f32 %v3107, %v2899
      %v3124 = vmul.f32 %v3108, %v2900
      %v3125 = vmul.f32 %v3109, %v2901
      %v3126 = vmul.f32 %v3110, 1.442695
      %v3127 = vpow.pop %v3126
      %v3128 = vmul.f32 %v3111, 1.442695
      %v3129 = vpow.pop %v3128
      %v3130 = vmul.f32 %v3112, 1.442695
      %v3131 = vpow.pop %v3130
      %v3132 = vmul.f32 %v3113, 1.442695
      %v3133 = vpow.pop %v3132
      %v3134 = vmul.f32 %v3114, 1.442695
      %v3135 = vpow.pop %v3134
      %v3136 = vmul.f32 %v3115, 1.442695
      %v3137 = vpow.pop %v3136
      %v3138 = vmul.f32 %v3116, 1.442695
      %v3139 = vpow.pop %v3138
      %v3140 = vmul.f32 %v3117, 1.442695
      %v3141 = vpow.pop %v3140
      %v3142 = vmul.f32 %v3118, 1.442695
      %v3143 = vpow.pop %v3142
      %v3144 = vmul.f32 %v3119, 1.442695
      %v3145 = vpow.pop %v3144
      %v3146 = vmul.f32 %v3120, 1.442695
      %v3147 = vpow.pop %v3146
      %v3148 = vmul.f32 %v3121, 1.442695
      %v3149 = vpow.pop %v3148
      %v3150 = vmul.f32 %v3122, 1.442695
      %v3151 = vpow.pop %v3150
      %v3152 = vmul.f32 %v3123, 1.442695
      %v3153 = vpow.pop %v3152
      %v3154 = vmul.f32 %v3124, 1.442695
      %v3155 = vpow.pop %v3154
      %v3156 = vmul.f32 %v3125, 1.442695
      %v3157 = vpow.pop %v3156
      %v3158 = vmul.f32 %v3078, %v3127
      %v3159 = vmul.f32 %v3079, %v3129
      %v3160 = vmul.f32 %v3080, %v3131
      %v3161 = vmul.f32 %v3081, %v3133
      %v3162 = vmul.f32 %v3082, %v3135
      %v3163 = vmul.f32 %v3083, %v3137
      %v3164 = vmul.f32 %v3084, %v3139
      %v3165 = vmul.f32 %v3085, %v3141
      %v3166 = vmul.f32 %v3086, %v3143
      %v3167 = vmul.f32 %v3087, %v3145
      %v3168 = vmul.f32 %v3088, %v3147
      %v3169 = vmul.f32 %v3089, %v3149
      %v3170 = vmul.f32 %v3090, %v3151
      %v3171 = vmul.f32 %v3091, %v3153
      %v3172 = vmul.f32 %v3092, %v3155
      %v3173 = vmul.f32 %v3093, %v3157
      %v3174 = vsub.f32 1.0, %v3158
      %v3175 = vsub.f32 1.0, %v3159
      %v3176 = vsub.f32 1.0, %v3160
      %v3177 = vsub.f32 1.0, %v3161
      %v3178 = vsub.f32 1.0, %v3162
      %v3179 = vsub.f32 1.0, %v3163
      %v3180 = vsub.f32 1.0, %v3164
      %v3181 = vsub.f32 1.0, %v3165
      %v3182 = vsub.f32 1.0, %v3166
      %v3183 = vsub.f32 1.0, %v3167
      %v3184 = vsub.f32 1.0, %v3168
      %v3185 = vsub.f32 1.0, %v3169
      %v3186 = vsub.f32 1.0, %v3170
      %v3187 = vsub.f32 1.0, %v3171
      %v3188 = vsub.f32 1.0, %v3172
      %v3189 = vsub.f32 1.0, %v3173
      %v3190 = vmul.f32 %v2870, %v3174
      %v3191 = vmul.f32 %v2871, %v3175
      %v3192 = vmul.f32 %v2872, %v3176
      %v3193 = vmul.f32 %v2873, %v3177
      %v3194 = vmul.f32 %v2874, %v3178
      %v3195 = vmul.f32 %v2875, %v3179
      %v3196 = vmul.f32 %v2876, %v3180
      %v3197 = vmul.f32 %v2877, %v3181
      %v3198 = vmul.f32 %v2878, %v3182
      %v3199 = vmul.f32 %v2879, %v3183
      %v3200 = vmul.f32 %v2880, %v3184
      %v3201 = vmul.f32 %v2881, %v3185
      %v3202 = vmul.f32 %v2882, %v3186
      %v3203 = vmul.f32 %v2883, %v3187
      %v3204 = vmul.f32 %v2884, %v3188
      %v3205 = vmul.f32 %v2885, %v3189
      %v3206 = vadd.f32 %v3190, 1.0
      %v3207 = vadd.f32 %v3191, 1.0
      %v3208 = vadd.f32 %v3192, 1.0
      %v3209 = vadd.f32 %v3193, 1.0
      %v3210 = vadd.f32 %v3194, 1.0
      %v3211 = vadd.f32 %v3195, 1.0
      %v3212 = vadd.f32 %v3196, 1.0
      %v3213 = vadd.f32 %v3197, 1.0
      %v3214 = vadd.f32 %v3198, 1.0
      %v3215 = vadd.f32 %v3199, 1.0
      %v3216 = vadd.f32 %v3200, 1.0
      %v3217 = vadd.f32 %v3201, 1.0
      %v3218 = vadd.f32 %v3202, 1.0
      %v3219 = vadd.f32 %v3203, 1.0
      %v3220 = vadd.f32 %v3204, 1.0
      %v3221 = vadd.f32 %v3205, 1.0
      %v3222 = vmul.f32 %v2822, %v3206
      %v3223 = vmul.f32 %v2823, %v3207
      %v3224 = vmul.f32 %v2824, %v3208
      %v3225 = vmul.f32 %v2825, %v3209
      %v3226 = vmul.f32 %v2826, %v3210
      %v3227 = vmul.f32 %v2827, %v3211
      %v3228 = vmul.f32 %v2828, %v3212
      %v3229 = vmul.f32 %v2829, %v3213
      %v3230 = vmul.f32 %v2830, %v3214
      %v3231 = vmul.f32 %v2831, %v3215
      %v3232 = vmul.f32 %v2832, %v3216
      %v3233 = vmul.f32 %v2833, %v3217
      %v3234 = vmul.f32 %v2834, %v3218
      %v3235 = vmul.f32 %v2835, %v3219
      %v3236 = vmul.f32 %v2836, %v3220
      %v3237 = vmul.f32 %v2837, %v3221
      %v3238 = vld [vmem:[%s2] sm:$0xff]
      %v3239 = vld [vmem:[%s4] sm:$0x1]
      %3241 = vset.pattern.permute.xlu0 0
      %3242 = vperm.xlu0 %3241, %v3222
      %v3243 = vpop.permute.xlu0 %3242
      %3246 = vset.pattern.permute.xlu0 0
      %3247 = vperm.xlu0 %3246, %v3223
      %v3248 = vpop.permute.xlu0 %3247
      %3251 = vset.pattern.permute.xlu0 0
      %3252 = vperm.xlu0 %3251, %v3224
      %v3253 = vpop.permute.xlu0 %3252
      %3256 = vset.pattern.permute.xlu0 0
      %3257 = vperm.xlu0 %3256, %v3225
      %v3258 = vpop.permute.xlu0 %3257
      %3261 = vset.pattern.permute.xlu0 0
      %3262 = vperm.xlu0 %3261, %v3226
      %v3263 = vpop.permute.xlu0 %3262
      %3266 = vset.pattern.permute.xlu0 0
      %3267 = vperm.xlu0 %3266, %v3227
      %v3268 = vpop.permute.xlu0 %3267
      %3271 = vset.pattern.permute.xlu0 0
      %3272 = vperm.xlu0 %3271, %v3228
      %v3273 = vpop.permute.xlu0 %3272
      %3276 = vset.pattern.permute.xlu0 0
      %3277 = vperm.xlu0 %3276, %v3229
      %v3278 = vpop.permute.xlu0 %3277
      %3281 = vset.pattern.permute.xlu0 0
      %3282 = vperm.xlu0 %3281, %v3230
      %v3283 = vpop.permute.xlu0 %3282
      %3286 = vset.pattern.permute.xlu0 0
      %3287 = vperm.xlu0 %3286, %v3231
      %v3288 = vpop.permute.xlu0 %3287
      %3291 = vset.pattern.permute.xlu0 0
      %3292 = vperm.xlu0 %3291, %v3232
      %v3293 = vpop.permute.xlu0 %3292
      %3296 = vset.pattern.permute.xlu0 0
      %3297 = vperm.xlu0 %3296, %v3233
      %v3298 = vpop.permute.xlu0 %3297
      %3301 = vset.pattern.permute.xlu0 0
      %3302 = vperm.xlu0 %3301, %v3234
      %v3303 = vpop.permute.xlu0 %3302
      %3306 = vset.pattern.permute.xlu0 0
      %3307 = vperm.xlu0 %3306, %v3235
      %v3308 = vpop.permute.xlu0 %3307
      %3311 = vset.pattern.permute.xlu0 0
      %3312 = vperm.xlu0 %3311, %v3236
      %v3313 = vpop.permute.xlu0 %3312
      %3316 = vset.pattern.permute.xlu0 0
      %3317 = vperm.xlu0 %3316, %v3237
      %v3318 = vpop.permute.xlu0 %3317
      %v3320 = vlaneseq
      %v3321 = vshrl.u32 %v3320, 7
      %v3322 = vsub.s32 0, %v3321
      %v3323 = vrot.slane %v3238, %v3322
      %v3324 = vmul.f32 %v3243, %v3323
      %v3325 = vmul.f32 %v3248, %v3323
      %v3326 = vmul.f32 %v3253, %v3323
      %v3327 = vmul.f32 %v3258, %v3323
      %v3328 = vmul.f32 %v3263, %v3323
      %v3329 = vmul.f32 %v3268, %v3323
      %v3330 = vmul.f32 %v3273, %v3323
      %v3331 = vmul.f32 %v3278, %v3323
      %v3332 = vmul.f32 %v3283, %v3323
      %v3333 = vmul.f32 %v3288, %v3323
      %v3334 = vmul.f32 %v3293, %v3323
      %v3335 = vmul.f32 %v3298, %v3323
      %v3336 = vmul.f32 %v3303, %v3323
      %v3337 = vmul.f32 %v3308, %v3323
      %v3338 = vmul.f32 %v3313, %v3323
      %v3339 = vmul.f32 %v3318, %v3323
      %v3340 = vadd.f32 %v3324, 0.0
      %v3341 = vadd.f32 %v3325, 0.0
      %v3342 = vadd.f32 %v3326, 0.0
      %v3343 = vadd.f32 %v3327, 0.0
      %v3344 = vadd.f32 %v3328, 0.0
      %v3345 = vadd.f32 %v3329, 0.0
      %v3346 = vadd.f32 %v3330, 0.0
      %v3347 = vadd.f32 %v3331, 0.0
      %v3348 = vadd.f32 %v3332, 0.0
      %v3349 = vadd.f32 %v3333, 0.0
      %v3350 = vadd.f32 %v3334, 0.0
      %v3351 = vadd.f32 %v3335, 0.0
      %v3352 = vadd.f32 %v3336, 0.0
      %v3353 = vadd.f32 %v3337, 0.0
      %v3354 = vadd.f32 %v3338, 0.0
      %v3355 = vadd.f32 %v3339, 0.0
      %3356 = vset.pattern.permute.xlu0 1
      %3357 = vperm.xlu0 %3356, %v3222
      %v3358 = vpop.permute.xlu0 %3357
      %3360 = vset.pattern.permute.xlu0 1
      %3361 = vperm.xlu0 %3360, %v3223
      %v3362 = vpop.permute.xlu0 %3361
      %3364 = vset.pattern.permute.xlu0 1
      %3365 = vperm.xlu0 %3364, %v3224
      %v3366 = vpop.permute.xlu0 %3365
      %3368 = vset.pattern.permute.xlu0 1
      %3369 = vperm.xlu0 %3368, %v3225
      %v3370 = vpop.permute.xlu0 %3369
      %3372 = vset.pattern.permute.xlu0 1
      %3373 = vperm.xlu0 %3372, %v3226
      %v3374 = vpop.permute.xlu0 %3373
      %3376 = vset.pattern.permute.xlu0 1
      %3377 = vperm.xlu0 %3376, %v3227
      %v3378 = vpop.permute.xlu0 %3377
      %3380 = vset.pattern.permute.xlu0 1
      %3381 = vperm.xlu0 %3380, %v3228
      %v3382 = vpop.permute.xlu0 %3381
      %3384 = vset.pattern.permute.xlu0 1
      %3385 = vperm.xlu0 %3384, %v3229
      %v3386 = vpop.permute.xlu0 %3385
      %3388 = vset.pattern.permute.xlu0 1
      %3389 = vperm.xlu0 %3388, %v3230
      %v3390 = vpop.permute.xlu0 %3389
      %3392 = vset.pattern.permute.xlu0 1
      %3393 = vperm.xlu0 %3392, %v3231
      %v3394 = vpop.permute.xlu0 %3393
      %3396 = vset.pattern.permute.xlu0 1
      %3397 = vperm.xlu0 %3396, %v3232
      %v3398 = vpop.permute.xlu0 %3397
      %3400 = vset.pattern.permute.xlu0 1
      %3401 = vperm.xlu0 %3400, %v3233
      %v3402 = vpop.permute.xlu0 %3401
      %3404 = vset.pattern.permute.xlu0 1
      %3405 = vperm.xlu0 %3404, %v3234
      %v3406 = vpop.permute.xlu0 %3405
      %3408 = vset.pattern.permute.xlu0 1
      %3409 = vperm.xlu0 %3408, %v3235
      %v3410 = vpop.permute.xlu0 %3409
      %3412 = vset.pattern.permute.xlu0 1
      %3413 = vperm.xlu0 %3412, %v3236
      %v3414 = vpop.permute.xlu0 %3413
      %3416 = vset.pattern.permute.xlu0 1
      %3417 = vperm.xlu0 %3416, %v3237
      %v3418 = vpop.permute.xlu0 %3417
      %v3420 = vlaneseq
      %v3421 = vshrl.u32 %v3420, 7
      %v3422 = vsub.s32 1, %v3421
      %v3423 = vrot.slane %v3238, %v3422
      %v3424 = vmul.f32 %v3358, %v3423
      %v3425 = vmul.f32 %v3362, %v3423
      %v3426 = vmul.f32 %v3366, %v3423
      %v3427 = vmul.f32 %v3370, %v3423
      %v3428 = vmul.f32 %v3374, %v3423
      %v3429 = vmul.f32 %v3378, %v3423
      %v3430 = vmul.f32 %v3382, %v3423
      %v3431 = vmul.f32 %v3386, %v3423
      %v3432 = vmul.f32 %v3390, %v3423
      %v3433 = vmul.f32 %v3394, %v3423
      %v3434 = vmul.f32 %v3398, %v3423
      %v3435 = vmul.f32 %v3402, %v3423
      %v3436 = vmul.f32 %v3406, %v3423
      %v3437 = vmul.f32 %v3410, %v3423
      %v3438 = vmul.f32 %v3414, %v3423
      %v3439 = vmul.f32 %v3418, %v3423
      %v3440 = vadd.f32 %v3340, %v3424
      %v3441 = vadd.f32 %v3341, %v3425
      %v3442 = vadd.f32 %v3342, %v3426
      %v3443 = vadd.f32 %v3343, %v3427
      %v3444 = vadd.f32 %v3344, %v3428
      %v3445 = vadd.f32 %v3345, %v3429
      %v3446 = vadd.f32 %v3346, %v3430
      %v3447 = vadd.f32 %v3347, %v3431
      %v3448 = vadd.f32 %v3348, %v3432
      %v3449 = vadd.f32 %v3349, %v3433
      %v3450 = vadd.f32 %v3350, %v3434
      %v3451 = vadd.f32 %v3351, %v3435
      %v3452 = vadd.f32 %v3352, %v3436
      %v3453 = vadd.f32 %v3353, %v3437
      %v3454 = vadd.f32 %v3354, %v3438
      %v3455 = vadd.f32 %v3355, %v3439
      %3456 = vset.pattern.permute.xlu0 2
      %3457 = vperm.xlu0 %3456, %v3222
      %v3458 = vpop.permute.xlu0 %3457
      %3460 = vset.pattern.permute.xlu0 2
      %3461 = vperm.xlu0 %3460, %v3223
      %v3462 = vpop.permute.xlu0 %3461
      %3464 = vset.pattern.permute.xlu0 2
      %3465 = vperm.xlu0 %3464, %v3224
      %v3466 = vpop.permute.xlu0 %3465
      %3468 = vset.pattern.permute.xlu0 2
      %3469 = vperm.xlu0 %3468, %v3225
      %v3470 = vpop.permute.xlu0 %3469
      %3472 = vset.pattern.permute.xlu0 2
      %3473 = vperm.xlu0 %3472, %v3226
      %v3474 = vpop.permute.xlu0 %3473
      %3476 = vset.pattern.permute.xlu0 2
      %3477 = vperm.xlu0 %3476, %v3227
      %v3478 = vpop.permute.xlu0 %3477
      %3480 = vset.pattern.permute.xlu0 2
      %3481 = vperm.xlu0 %3480, %v3228
      %v3482 = vpop.permute.xlu0 %3481
      %3484 = vset.pattern.permute.xlu0 2
      %3485 = vperm.xlu0 %3484, %v3229
      %v3486 = vpop.permute.xlu0 %3485
      %3488 = vset.pattern.permute.xlu0 2
      %3489 = vperm.xlu0 %3488, %v3230
      %v3490 = vpop.permute.xlu0 %3489
      %3492 = vset.pattern.permute.xlu0 2
      %3493 = vperm.xlu0 %3492, %v3231
      %v3494 = vpop.permute.xlu0 %3493
      %3496 = vset.pattern.permute.xlu0 2
      %3497 = vperm.xlu0 %3496, %v3232
      %v3498 = vpop.permute.xlu0 %3497
      %3500 = vset.pattern.permute.xlu0 2
      %3501 = vperm.xlu0 %3500, %v3233
      %v3502 = vpop.permute.xlu0 %3501
      %3504 = vset.pattern.permute.xlu0 2
      %3505 = vperm.xlu0 %3504, %v3234
      %v3506 = vpop.permute.xlu0 %3505
      %3508 = vset.pattern.permute.xlu0 2
      %3509 = vperm.xlu0 %3508, %v3235
      %v3510 = vpop.permute.xlu0 %3509
      %3512 = vset.pattern.permute.xlu0 2
      %3513 = vperm.xlu0 %3512, %v3236
      %v3514 = vpop.permute.xlu0 %3513
      %3516 = vset.pattern.permute.xlu0 2
      %3517 = vperm.xlu0 %3516, %v3237
      %v3518 = vpop.permute.xlu0 %3517
      %v3520 = vlaneseq
      %v3521 = vshrl.u32 %v3520, 7
      %v3522 = vsub.s32 2, %v3521
      %v3523 = vrot.slane %v3238, %v3522
      %v3524 = vmul.f32 %v3458, %v3523
      %v3525 = vmul.f32 %v3462, %v3523
      %v3526 = vmul.f32 %v3466, %v3523
      %v3527 = vmul.f32 %v3470, %v3523
      %v3528 = vmul.f32 %v3474, %v3523
      %v3529 = vmul.f32 %v3478, %v3523
      %v3530 = vmul.f32 %v3482, %v3523
      %v3531 = vmul.f32 %v3486, %v3523
      %v3532 = vmul.f32 %v3490, %v3523
      %v3533 = vmul.f32 %v3494, %v3523
      %v3534 = vmul.f32 %v3498, %v3523
      %v3535 = vmul.f32 %v3502, %v3523
      %v3536 = vmul.f32 %v3506, %v3523
      %v3537 = vmul.f32 %v3510, %v3523
      %v3538 = vmul.f32 %v3514, %v3523
      %v3539 = vmul.f32 %v3518, %v3523
      %v3540 = vadd.f32 %v3440, %v3524
      %v3541 = vadd.f32 %v3441, %v3525
      %v3542 = vadd.f32 %v3442, %v3526
      %v3543 = vadd.f32 %v3443, %v3527
      %v3544 = vadd.f32 %v3444, %v3528
      %v3545 = vadd.f32 %v3445, %v3529
      %v3546 = vadd.f32 %v3446, %v3530
      %v3547 = vadd.f32 %v3447, %v3531
      %v3548 = vadd.f32 %v3448, %v3532
      %v3549 = vadd.f32 %v3449, %v3533
      %v3550 = vadd.f32 %v3450, %v3534
      %v3551 = vadd.f32 %v3451, %v3535
      %v3552 = vadd.f32 %v3452, %v3536
      %v3553 = vadd.f32 %v3453, %v3537
      %v3554 = vadd.f32 %v3454, %v3538
      %v3555 = vadd.f32 %v3455, %v3539
      %3556 = vset.pattern.permute.xlu0 3
      %3557 = vperm.xlu0 %3556, %v3222
      %v3558 = vpop.permute.xlu0 %3557
      %3560 = vset.pattern.permute.xlu0 3
      %3561 = vperm.xlu0 %3560, %v3223
      %v3562 = vpop.permute.xlu0 %3561
      %3564 = vset.pattern.permute.xlu0 3
      %3565 = vperm.xlu0 %3564, %v3224
      %v3566 = vpop.permute.xlu0 %3565
      %3568 = vset.pattern.permute.xlu0 3
      %3569 = vperm.xlu0 %3568, %v3225
      %v3570 = vpop.permute.xlu0 %3569
      %3572 = vset.pattern.permute.xlu0 3
      %3573 = vperm.xlu0 %3572, %v3226
      %v3574 = vpop.permute.xlu0 %3573
      %3576 = vset.pattern.permute.xlu0 3
      %3577 = vperm.xlu0 %3576, %v3227
      %v3578 = vpop.permute.xlu0 %3577
      %3580 = vset.pattern.permute.xlu0 3
      %3581 = vperm.xlu0 %3580, %v3228
      %v3582 = vpop.permute.xlu0 %3581
      %3584 = vset.pattern.permute.xlu0 3
      %3585 = vperm.xlu0 %3584, %v3229
      %v3586 = vpop.permute.xlu0 %3585
      %3588 = vset.pattern.permute.xlu0 3
      %3589 = vperm.xlu0 %3588, %v3230
      %v3590 = vpop.permute.xlu0 %3589
      %3592 = vset.pattern.permute.xlu0 3
      %3593 = vperm.xlu0 %3592, %v3231
      %v3594 = vpop.permute.xlu0 %3593
      %3596 = vset.pattern.permute.xlu0 3
      %3597 = vperm.xlu0 %3596, %v3232
      %v3598 = vpop.permute.xlu0 %3597
      %3600 = vset.pattern.permute.xlu0 3
      %3601 = vperm.xlu0 %3600, %v3233
      %v3602 = vpop.permute.xlu0 %3601
      %3604 = vset.pattern.permute.xlu0 3
      %3605 = vperm.xlu0 %3604, %v3234
      %v3606 = vpop.permute.xlu0 %3605
      %3608 = vset.pattern.permute.xlu0 3
      %3609 = vperm.xlu0 %3608, %v3235
      %v3610 = vpop.permute.xlu0 %3609
      %3612 = vset.pattern.permute.xlu0 3
      %3613 = vperm.xlu0 %3612, %v3236
      %v3614 = vpop.permute.xlu0 %3613
      %3616 = vset.pattern.permute.xlu0 3
      %3617 = vperm.xlu0 %3616, %v3237
      %v3618 = vpop.permute.xlu0 %3617
      %v3620 = vlaneseq
      %v3621 = vshrl.u32 %v3620, 7
      %v3622 = vsub.s32 3, %v3621
      %v3623 = vrot.slane %v3238, %v3622
      %v3624 = vmul.f32 %v3558, %v3623
      %v3625 = vmul.f32 %v3562, %v3623
      %v3626 = vmul.f32 %v3566, %v3623
      %v3627 = vmul.f32 %v3570, %v3623
      %v3628 = vmul.f32 %v3574, %v3623
      %v3629 = vmul.f32 %v3578, %v3623
      %v3630 = vmul.f32 %v3582, %v3623
      %v3631 = vmul.f32 %v3586, %v3623
      %v3632 = vmul.f32 %v3590, %v3623
      %v3633 = vmul.f32 %v3594, %v3623
      %v3634 = vmul.f32 %v3598, %v3623
      %v3635 = vmul.f32 %v3602, %v3623
      %v3636 = vmul.f32 %v3606, %v3623
      %v3637 = vmul.f32 %v3610, %v3623
      %v3638 = vmul.f32 %v3614, %v3623
      %v3639 = vmul.f32 %v3618, %v3623
      %v3640 = vadd.f32 %v3540, %v3624
      %v3641 = vadd.f32 %v3541, %v3625
      %v3642 = vadd.f32 %v3542, %v3626
      %v3643 = vadd.f32 %v3543, %v3627
      %v3644 = vadd.f32 %v3544, %v3628
      %v3645 = vadd.f32 %v3545, %v3629
      %v3646 = vadd.f32 %v3546, %v3630
      %v3647 = vadd.f32 %v3547, %v3631
      %v3648 = vadd.f32 %v3548, %v3632
      %v3649 = vadd.f32 %v3549, %v3633
      %v3650 = vadd.f32 %v3550, %v3634
      %v3651 = vadd.f32 %v3551, %v3635
      %v3652 = vadd.f32 %v3552, %v3636
      %v3653 = vadd.f32 %v3553, %v3637
      %v3654 = vadd.f32 %v3554, %v3638
      %v3655 = vadd.f32 %v3555, %v3639
      %3656 = vset.pattern.permute.xlu0 4
      %3657 = vperm.xlu0 %3656, %v3222
      %v3658 = vpop.permute.xlu0 %3657
      %3660 = vset.pattern.permute.xlu0 4
      %3661 = vperm.xlu0 %3660, %v3223
      %v3662 = vpop.permute.xlu0 %3661
      %3664 = vset.pattern.permute.xlu0 4
      %3665 = vperm.xlu0 %3664, %v3224
      %v3666 = vpop.permute.xlu0 %3665
      %3668 = vset.pattern.permute.xlu0 4
      %3669 = vperm.xlu0 %3668, %v3225
      %v3670 = vpop.permute.xlu0 %3669
      %3672 = vset.pattern.permute.xlu0 4
      %3673 = vperm.xlu0 %3672, %v3226
      %v3674 = vpop.permute.xlu0 %3673
      %3676 = vset.pattern.permute.xlu0 4
      %3677 = vperm.xlu0 %3676, %v3227
      %v3678 = vpop.permute.xlu0 %3677
      %3680 = vset.pattern.permute.xlu0 4
      %3681 = vperm.xlu0 %3680, %v3228
      %v3682 = vpop.permute.xlu0 %3681
      %3684 = vset.pattern.permute.xlu0 4
      %3685 = vperm.xlu0 %3684, %v3229
      %v3686 = vpop.permute.xlu0 %3685
      %3688 = vset.pattern.permute.xlu0 4
      %3689 = vperm.xlu0 %3688, %v3230
      %v3690 = vpop.permute.xlu0 %3689
      %3692 = vset.pattern.permute.xlu0 4
      %3693 = vperm.xlu0 %3692, %v3231
      %v3694 = vpop.permute.xlu0 %3693
      %3696 = vset.pattern.permute.xlu0 4
      %3697 = vperm.xlu0 %3696, %v3232
      %v3698 = vpop.permute.xlu0 %3697
      %3700 = vset.pattern.permute.xlu0 4
      %3701 = vperm.xlu0 %3700, %v3233
      %v3702 = vpop.permute.xlu0 %3701
      %3704 = vset.pattern.permute.xlu0 4
      %3705 = vperm.xlu0 %3704, %v3234
      %v3706 = vpop.permute.xlu0 %3705
      %3708 = vset.pattern.permute.xlu0 4
      %3709 = vperm.xlu0 %3708, %v3235
      %v3710 = vpop.permute.xlu0 %3709
      %3712 = vset.pattern.permute.xlu0 4
      %3713 = vperm.xlu0 %3712, %v3236
      %v3714 = vpop.permute.xlu0 %3713
      %3716 = vset.pattern.permute.xlu0 4
      %3717 = vperm.xlu0 %3716, %v3237
      %v3718 = vpop.permute.xlu0 %3717
      %v3720 = vlaneseq
      %v3721 = vshrl.u32 %v3720, 7
      %v3722 = vsub.s32 4, %v3721
      %v3723 = vrot.slane %v3238, %v3722
      %v3724 = vmul.f32 %v3658, %v3723
      %v3725 = vmul.f32 %v3662, %v3723
      %v3726 = vmul.f32 %v3666, %v3723
      %v3727 = vmul.f32 %v3670, %v3723
      %v3728 = vmul.f32 %v3674, %v3723
      %v3729 = vmul.f32 %v3678, %v3723
      %v3730 = vmul.f32 %v3682, %v3723
      %v3731 = vmul.f32 %v3686, %v3723
      %v3732 = vmul.f32 %v3690, %v3723
      %v3733 = vmul.f32 %v3694, %v3723
      %v3734 = vmul.f32 %v3698, %v3723
      %v3735 = vmul.f32 %v3702, %v3723
      %v3736 = vmul.f32 %v3706, %v3723
      %v3737 = vmul.f32 %v3710, %v3723
      %v3738 = vmul.f32 %v3714, %v3723
      %v3739 = vmul.f32 %v3718, %v3723
      %v3740 = vadd.f32 %v3640, %v3724
      %v3741 = vadd.f32 %v3641, %v3725
      %v3742 = vadd.f32 %v3642, %v3726
      %v3743 = vadd.f32 %v3643, %v3727
      %v3744 = vadd.f32 %v3644, %v3728
      %v3745 = vadd.f32 %v3645, %v3729
      %v3746 = vadd.f32 %v3646, %v3730
      %v3747 = vadd.f32 %v3647, %v3731
      %v3748 = vadd.f32 %v3648, %v3732
      %v3749 = vadd.f32 %v3649, %v3733
      %v3750 = vadd.f32 %v3650, %v3734
      %v3751 = vadd.f32 %v3651, %v3735
      %v3752 = vadd.f32 %v3652, %v3736
      %v3753 = vadd.f32 %v3653, %v3737
      %v3754 = vadd.f32 %v3654, %v3738
      %v3755 = vadd.f32 %v3655, %v3739
      %3756 = vset.pattern.permute.xlu0 5
      %3757 = vperm.xlu0 %3756, %v3222
      %v3758 = vpop.permute.xlu0 %3757
      %3760 = vset.pattern.permute.xlu0 5
      %3761 = vperm.xlu0 %3760, %v3223
      %v3762 = vpop.permute.xlu0 %3761
      %3764 = vset.pattern.permute.xlu0 5
      %3765 = vperm.xlu0 %3764, %v3224
      %v3766 = vpop.permute.xlu0 %3765
      %3768 = vset.pattern.permute.xlu0 5
      %3769 = vperm.xlu0 %3768, %v3225
      %v3770 = vpop.permute.xlu0 %3769
      %3772 = vset.pattern.permute.xlu0 5
      %3773 = vperm.xlu0 %3772, %v3226
      %v3774 = vpop.permute.xlu0 %3773
      %3776 = vset.pattern.permute.xlu0 5
      %3777 = vperm.xlu0 %3776, %v3227
      %v3778 = vpop.permute.xlu0 %3777
      %3780 = vset.pattern.permute.xlu0 5
      %3781 = vperm.xlu0 %3780, %v3228
      %v3782 = vpop.permute.xlu0 %3781
      %3784 = vset.pattern.permute.xlu0 5
      %3785 = vperm.xlu0 %3784, %v3229
      %v3786 = vpop.permute.xlu0 %3785
      %3788 = vset.pattern.permute.xlu0 5
      %3789 = vperm.xlu0 %3788, %v3230
      %v3790 = vpop.permute.xlu0 %3789
      %3792 = vset.pattern.permute.xlu0 5
      %3793 = vperm.xlu0 %3792, %v3231
      %v3794 = vpop.permute.xlu0 %3793
      %3796 = vset.pattern.permute.xlu0 5
      %3797 = vperm.xlu0 %3796, %v3232
      %v3798 = vpop.permute.xlu0 %3797
      %3800 = vset.pattern.permute.xlu0 5
      %3801 = vperm.xlu0 %3800, %v3233
      %v3802 = vpop.permute.xlu0 %3801
      %3804 = vset.pattern.permute.xlu0 5
      %3805 = vperm.xlu0 %3804, %v3234
      %v3806 = vpop.permute.xlu0 %3805
      %3808 = vset.pattern.permute.xlu0 5
      %3809 = vperm.xlu0 %3808, %v3235
      %v3810 = vpop.permute.xlu0 %3809
      %3812 = vset.pattern.permute.xlu0 5
      %3813 = vperm.xlu0 %3812, %v3236
      %v3814 = vpop.permute.xlu0 %3813
      %3816 = vset.pattern.permute.xlu0 5
      %3817 = vperm.xlu0 %3816, %v3237
      %v3818 = vpop.permute.xlu0 %3817
      %v3820 = vlaneseq
      %v3821 = vshrl.u32 %v3820, 7
      %v3822 = vsub.s32 5, %v3821
      %v3823 = vrot.slane %v3238, %v3822
      %v3824 = vmul.f32 %v3758, %v3823
      %v3825 = vmul.f32 %v3762, %v3823
      %v3826 = vmul.f32 %v3766, %v3823
      %v3827 = vmul.f32 %v3770, %v3823
      %v3828 = vmul.f32 %v3774, %v3823
      %v3829 = vmul.f32 %v3778, %v3823
      %v3830 = vmul.f32 %v3782, %v3823
      %v3831 = vmul.f32 %v3786, %v3823
      %v3832 = vmul.f32 %v3790, %v3823
      %v3833 = vmul.f32 %v3794, %v3823
      %v3834 = vmul.f32 %v3798, %v3823
      %v3835 = vmul.f32 %v3802, %v3823
      %v3836 = vmul.f32 %v3806, %v3823
      %v3837 = vmul.f32 %v3810, %v3823
      %v3838 = vmul.f32 %v3814, %v3823
      %v3839 = vmul.f32 %v3818, %v3823
      %v3840 = vadd.f32 %v3740, %v3824
      %v3841 = vadd.f32 %v3741, %v3825
      %v3842 = vadd.f32 %v3742, %v3826
      %v3843 = vadd.f32 %v3743, %v3827
      %v3844 = vadd.f32 %v3744, %v3828
      %v3845 = vadd.f32 %v3745, %v3829
      %v3846 = vadd.f32 %v3746, %v3830
      %v3847 = vadd.f32 %v3747, %v3831
      %v3848 = vadd.f32 %v3748, %v3832
      %v3849 = vadd.f32 %v3749, %v3833
      %v3850 = vadd.f32 %v3750, %v3834
      %v3851 = vadd.f32 %v3751, %v3835
      %v3852 = vadd.f32 %v3752, %v3836
      %v3853 = vadd.f32 %v3753, %v3837
      %v3854 = vadd.f32 %v3754, %v3838
      %v3855 = vadd.f32 %v3755, %v3839
      %3856 = vset.pattern.permute.xlu0 6
      %3857 = vperm.xlu0 %3856, %v3222
      %v3858 = vpop.permute.xlu0 %3857
      %3860 = vset.pattern.permute.xlu0 6
      %3861 = vperm.xlu0 %3860, %v3223
      %v3862 = vpop.permute.xlu0 %3861
      %3864 = vset.pattern.permute.xlu0 6
      %3865 = vperm.xlu0 %3864, %v3224
      %v3866 = vpop.permute.xlu0 %3865
      %3868 = vset.pattern.permute.xlu0 6
      %3869 = vperm.xlu0 %3868, %v3225
      %v3870 = vpop.permute.xlu0 %3869
      %3872 = vset.pattern.permute.xlu0 6
      %3873 = vperm.xlu0 %3872, %v3226
      %v3874 = vpop.permute.xlu0 %3873
      %3876 = vset.pattern.permute.xlu0 6
      %3877 = vperm.xlu0 %3876, %v3227
      %v3878 = vpop.permute.xlu0 %3877
      %3880 = vset.pattern.permute.xlu0 6
      %3881 = vperm.xlu0 %3880, %v3228
      %v3882 = vpop.permute.xlu0 %3881
      %3884 = vset.pattern.permute.xlu0 6
      %3885 = vperm.xlu0 %3884, %v3229
      %v3886 = vpop.permute.xlu0 %3885
      %3888 = vset.pattern.permute.xlu0 6
      %3889 = vperm.xlu0 %3888, %v3230
      %v3890 = vpop.permute.xlu0 %3889
      %3892 = vset.pattern.permute.xlu0 6
      %3893 = vperm.xlu0 %3892, %v3231
      %v3894 = vpop.permute.xlu0 %3893
      %3896 = vset.pattern.permute.xlu0 6
      %3897 = vperm.xlu0 %3896, %v3232
      %v3898 = vpop.permute.xlu0 %3897
      %3900 = vset.pattern.permute.xlu0 6
      %3901 = vperm.xlu0 %3900, %v3233
      %v3902 = vpop.permute.xlu0 %3901
      %3904 = vset.pattern.permute.xlu0 6
      %3905 = vperm.xlu0 %3904, %v3234
      %v3906 = vpop.permute.xlu0 %3905
      %3908 = vset.pattern.permute.xlu0 6
      %3909 = vperm.xlu0 %3908, %v3235
      %v3910 = vpop.permute.xlu0 %3909
      %3912 = vset.pattern.permute.xlu0 6
      %3913 = vperm.xlu0 %3912, %v3236
      %v3914 = vpop.permute.xlu0 %3913
      %3916 = vset.pattern.permute.xlu0 6
      %3917 = vperm.xlu0 %3916, %v3237
      %v3918 = vpop.permute.xlu0 %3917
      %v3920 = vlaneseq
      %v3921 = vshrl.u32 %v3920, 7
      %v3922 = vsub.s32 6, %v3921
      %v3923 = vrot.slane %v3238, %v3922
      %v3924 = vmul.f32 %v3858, %v3923
      %v3925 = vmul.f32 %v3862, %v3923
      %v3926 = vmul.f32 %v3866, %v3923
      %v3927 = vmul.f32 %v3870, %v3923
      %v3928 = vmul.f32 %v3874, %v3923
      %v3929 = vmul.f32 %v3878, %v3923
      %v3930 = vmul.f32 %v3882, %v3923
      %v3931 = vmul.f32 %v3886, %v3923
      %v3932 = vmul.f32 %v3890, %v3923
      %v3933 = vmul.f32 %v3894, %v3923
      %v3934 = vmul.f32 %v3898, %v3923
      %v3935 = vmul.f32 %v3902, %v3923
      %v3936 = vmul.f32 %v3906, %v3923
      %v3937 = vmul.f32 %v3910, %v3923
      %v3938 = vmul.f32 %v3914, %v3923
      %v3939 = vmul.f32 %v3918, %v3923
      %v3940 = vadd.f32 %v3840, %v3924
      %v3941 = vadd.f32 %v3841, %v3925
      %v3942 = vadd.f32 %v3842, %v3926
      %v3943 = vadd.f32 %v3843, %v3927
      %v3944 = vadd.f32 %v3844, %v3928
      %v3945 = vadd.f32 %v3845, %v3929
      %v3946 = vadd.f32 %v3846, %v3930
      %v3947 = vadd.f32 %v3847, %v3931
      %v3948 = vadd.f32 %v3848, %v3932
      %v3949 = vadd.f32 %v3849, %v3933
      %v3950 = vadd.f32 %v3850, %v3934
      %v3951 = vadd.f32 %v3851, %v3935
      %v3952 = vadd.f32 %v3852, %v3936
      %v3953 = vadd.f32 %v3853, %v3937
      %v3954 = vadd.f32 %v3854, %v3938
      %v3955 = vadd.f32 %v3855, %v3939
      %3956 = vset.pattern.permute.xlu0 7
      %3957 = vperm.xlu0 %3956, %v3222
      %v3958 = vpop.permute.xlu0 %3957
      %3960 = vset.pattern.permute.xlu0 7
      %3961 = vperm.xlu0 %3960, %v3223
      %v3962 = vpop.permute.xlu0 %3961
      %3964 = vset.pattern.permute.xlu0 7
      %3965 = vperm.xlu0 %3964, %v3224
      %v3966 = vpop.permute.xlu0 %3965
      %3968 = vset.pattern.permute.xlu0 7
      %3969 = vperm.xlu0 %3968, %v3225
      %v3970 = vpop.permute.xlu0 %3969
      %3972 = vset.pattern.permute.xlu0 7
      %3973 = vperm.xlu0 %3972, %v3226
      %v3974 = vpop.permute.xlu0 %3973
      %3976 = vset.pattern.permute.xlu0 7
      %3977 = vperm.xlu0 %3976, %v3227
      %v3978 = vpop.permute.xlu0 %3977
      %3980 = vset.pattern.permute.xlu0 7
      %3981 = vperm.xlu0 %3980, %v3228
      %v3982 = vpop.permute.xlu0 %3981
      %3984 = vset.pattern.permute.xlu0 7
      %3985 = vperm.xlu0 %3984, %v3229
      %v3986 = vpop.permute.xlu0 %3985
      %3988 = vset.pattern.permute.xlu0 7
      %3989 = vperm.xlu0 %3988, %v3230
      %v3990 = vpop.permute.xlu0 %3989
      %3992 = vset.pattern.permute.xlu0 7
      %3993 = vperm.xlu0 %3992, %v3231
      %v3994 = vpop.permute.xlu0 %3993
      %3996 = vset.pattern.permute.xlu0 7
      %3997 = vperm.xlu0 %3996, %v3232
      %v3998 = vpop.permute.xlu0 %3997
      %4000 = vset.pattern.permute.xlu0 7
      %4001 = vperm.xlu0 %4000, %v3233
      %v4002 = vpop.permute.xlu0 %4001
      %4004 = vset.pattern.permute.xlu0 7
      %4005 = vperm.xlu0 %4004, %v3234
      %v4006 = vpop.permute.xlu0 %4005
      %4008 = vset.pattern.permute.xlu0 7
      %4009 = vperm.xlu0 %4008, %v3235
      %v4010 = vpop.permute.xlu0 %4009
      %4012 = vset.pattern.permute.xlu0 7
      %4013 = vperm.xlu0 %4012, %v3236
      %v4014 = vpop.permute.xlu0 %4013
      %4016 = vset.pattern.permute.xlu0 7
      %4017 = vperm.xlu0 %4016, %v3237
      %v4018 = vpop.permute.xlu0 %4017
      %v4020 = vlaneseq
      %v4021 = vshrl.u32 %v4020, 7
      %v4022 = vsub.s32 7, %v4021
      %v4023 = vrot.slane %v3238, %v4022
      %v4024 = vmul.f32 %v3958, %v4023
      %v4025 = vmul.f32 %v3962, %v4023
      %v4026 = vmul.f32 %v3966, %v4023
      %v4027 = vmul.f32 %v3970, %v4023
      %v4028 = vmul.f32 %v3974, %v4023
      %v4029 = vmul.f32 %v3978, %v4023
      %v4030 = vmul.f32 %v3982, %v4023
      %v4031 = vmul.f32 %v3986, %v4023
      %v4032 = vmul.f32 %v3990, %v4023
      %v4033 = vmul.f32 %v3994, %v4023
      %v4034 = vmul.f32 %v3998, %v4023
      %v4035 = vmul.f32 %v4002, %v4023
      %v4036 = vmul.f32 %v4006, %v4023
      %v4037 = vmul.f32 %v4010, %v4023
      %v4038 = vmul.f32 %v4014, %v4023
      %v4039 = vmul.f32 %v4018, %v4023
      %v4040 = vadd.f32 %v3940, %v4024
      %v4041 = vadd.f32 %v3941, %v4025
      %v4042 = vadd.f32 %v3942, %v4026
      %v4043 = vadd.f32 %v3943, %v4027
      %v4044 = vadd.f32 %v3944, %v4028
      %v4045 = vadd.f32 %v3945, %v4029
      %v4046 = vadd.f32 %v3946, %v4030
      %v4047 = vadd.f32 %v3947, %v4031
      %v4048 = vadd.f32 %v3948, %v4032
      %v4049 = vadd.f32 %v3949, %v4033
      %v4050 = vadd.f32 %v3950, %v4034
      %v4051 = vadd.f32 %v3951, %v4035
      %v4052 = vadd.f32 %v3952, %v4036
      %v4053 = vadd.f32 %v3953, %v4037
      %v4054 = vadd.f32 %v3954, %v4038
      %v4055 = vadd.f32 %v3955, %v4039
      %v4057 = vlaneseq
      %v4058 = vshrl.u32 %v4057, 7
      %v4059 = vsub.s32 0, %v4058
      %v4060 = vrot.slane %v3239, %v4059
      %v4062 = vadd.f32 %v4040, %v4060
      %v4063 = vadd.f32 %v4041, %v4060
      %v4064 = vadd.f32 %v4042, %v4060
      %v4065 = vadd.f32 %v4043, %v4060
      %v4066 = vadd.f32 %v4044, %v4060
      %v4067 = vadd.f32 %v4045, %v4060
      %v4068 = vadd.f32 %v4046, %v4060
      %v4069 = vadd.f32 %v4047, %v4060
      %v4070 = vadd.f32 %v4048, %v4060
      %v4071 = vadd.f32 %v4049, %v4060
      %v4072 = vadd.f32 %v4050, %v4060
      %v4073 = vadd.f32 %v4051, %v4060
      %v4074 = vadd.f32 %v4052, %v4060
      %v4075 = vadd.f32 %v4053, %v4060
      %v4076 = vadd.f32 %v4054, %v4060
      %v4077 = vadd.f32 %v4055, %v4060
      %v4078 = vld [vmem:[%s8] sm:$0xff]
      %v4079 = vld [vmem:[%s8 + $0x8] sm:$0xff]
      %v4080 = vld [vmem:[%s8 + $0x10] sm:$0xff]
      %v4081 = vld [vmem:[%s8 + $0x18] sm:$0xff]
      %v4082 = vld [vmem:[%s8 + $0x20] sm:$0xff]
      %v4083 = vld [vmem:[%s8 + $0x28] sm:$0xff]
      %v4084 = vld [vmem:[%s8 + $0x30] sm:$0xff]
      %v4085 = vld [vmem:[%s8 + $0x38] sm:$0xff]
      %s4086 = scalar_lea.vmem %s8, 64
      %v4087 = vld [vmem:[%s4086] sm:$0xff]
      %v4088 = vld [vmem:[%s4086 + $0x8] sm:$0xff]
      %v4089 = vld [vmem:[%s4086 + $0x10] sm:$0xff]
      %v4090 = vld [vmem:[%s4086 + $0x18] sm:$0xff]
      %v4091 = vld [vmem:[%s4086 + $0x20] sm:$0xff]
      %v4092 = vld [vmem:[%s4086 + $0x28] sm:$0xff]
      %v4093 = vld [vmem:[%s4086 + $0x30] sm:$0xff]
      %v4094 = vld [vmem:[%s4086 + $0x38] sm:$0xff]
      %vm4095 = vcmask 31744
      %v4096 = vsel %vm4095, %v4062, 0.0
      %4097 = vadd.xlane.f32.xlu0 %v4096
      %v4098 = vpop.xlane.xlu0 %4097
      %v4099 = vsel %vm4095, %v4063, 0.0
      %4100 = vadd.xlane.f32.xlu0 %v4099
      %v4101 = vpop.xlane.xlu0 %4100
      %v4102 = vsel %vm4095, %v4064, 0.0
      %4103 = vadd.xlane.f32.xlu0 %v4102
      %v4104 = vpop.xlane.xlu0 %4103
      %v4105 = vsel %vm4095, %v4065, 0.0
      %4106 = vadd.xlane.f32.xlu0 %v4105
      %v4107 = vpop.xlane.xlu0 %4106
      %v4108 = vsel %vm4095, %v4066, 0.0
      %4109 = vadd.xlane.f32.xlu0 %v4108
      %v4110 = vpop.xlane.xlu0 %4109
      %v4111 = vsel %vm4095, %v4067, 0.0
      %4112 = vadd.xlane.f32.xlu0 %v4111
      %v4113 = vpop.xlane.xlu0 %4112
      %v4114 = vsel %vm4095, %v4068, 0.0
      %4115 = vadd.xlane.f32.xlu0 %v4114
      %v4116 = vpop.xlane.xlu0 %4115
      %v4117 = vsel %vm4095, %v4069, 0.0
      %4118 = vadd.xlane.f32.xlu0 %v4117
      %v4119 = vpop.xlane.xlu0 %4118
      %v4120 = vsel %vm4095, %v4070, 0.0
      %4121 = vadd.xlane.f32.xlu0 %v4120
      %v4122 = vpop.xlane.xlu0 %4121
      %v4123 = vsel %vm4095, %v4071, 0.0
      %4124 = vadd.xlane.f32.xlu0 %v4123
      %v4125 = vpop.xlane.xlu0 %4124
      %v4126 = vsel %vm4095, %v4072, 0.0
      %4127 = vadd.xlane.f32.xlu0 %v4126
      %v4128 = vpop.xlane.xlu0 %4127
      %v4129 = vsel %vm4095, %v4073, 0.0
      %4130 = vadd.xlane.f32.xlu0 %v4129
      %v4131 = vpop.xlane.xlu0 %4130
      %v4132 = vsel %vm4095, %v4074, 0.0
      %4133 = vadd.xlane.f32.xlu0 %v4132
      %v4134 = vpop.xlane.xlu0 %4133
      %v4135 = vsel %vm4095, %v4075, 0.0
      %4136 = vadd.xlane.f32.xlu0 %v4135
      %v4137 = vpop.xlane.xlu0 %4136
      %v4138 = vsel %vm4095, %v4076, 0.0
      %4139 = vadd.xlane.f32.xlu0 %v4138
      %v4140 = vpop.xlane.xlu0 %4139
      %v4141 = vsel %vm4095, %v4077, 0.0
      %4142 = vadd.xlane.f32.xlu0 %v4141
      %v4143 = vpop.xlane.xlu0 %4142
      %v4144 = vrcp.pop 4.0
      %v4145 = vmul.f32 %v4098, %v4144
      %v4146 = vmul.f32 %v4101, %v4144
      %v4147 = vmul.f32 %v4104, %v4144
      %v4148 = vmul.f32 %v4107, %v4144
      %v4149 = vmul.f32 %v4110, %v4144
      %v4150 = vmul.f32 %v4113, %v4144
      %v4151 = vmul.f32 %v4116, %v4144
      %v4152 = vmul.f32 %v4119, %v4144
      %v4153 = vmul.f32 %v4122, %v4144
      %v4154 = vmul.f32 %v4125, %v4144
      %v4155 = vmul.f32 %v4128, %v4144
      %v4156 = vmul.f32 %v4131, %v4144
      %v4157 = vmul.f32 %v4134, %v4144
      %v4158 = vmul.f32 %v4137, %v4144
      %v4159 = vmul.f32 %v4140, %v4144
      %v4160 = vmul.f32 %v4143, %v4144
      %v4161 = vadd.f32 %v4145, %v4146
      %v4162 = vadd.f32 %v4161, %v4147
      %v4163 = vadd.f32 %v4162, %v4148
      %v4164 = vadd.f32 %v4163, %v4149
      %v4165 = vadd.f32 %v4164, %v4150
      %v4166 = vadd.f32 %v4165, %v4151
      %v4167 = vadd.f32 %v4166, %v4152
      %v4168 = vrot.slane %v4167, 4
      %v4169 = vadd.f32 %v4167, %v4168
      %v4170 = vrot.slane %v4169, 2
      %v4171 = vadd.f32 %v4169, %v4170
      %v4172 = vrot.slane %v4171, 1
      %v4173 = vadd.f32 %v4171, %v4172
      %v4174 = vadd.f32 %v4153, %v4154
      %v4175 = vadd.f32 %v4174, %v4155
      %v4176 = vadd.f32 %v4175, %v4156
      %v4177 = vadd.f32 %v4176, %v4157
      %v4178 = vadd.f32 %v4177, %v4158
      %v4179 = vadd.f32 %v4178, %v4159
      %v4180 = vadd.f32 %v4179, %v4160
      %v4181 = vrot.slane %v4180, 4
      %v4182 = vadd.f32 %v4180, %v4181
      %v4183 = vrot.slane %v4182, 2
      %v4184 = vadd.f32 %v4182, %v4183
      %v4185 = vrot.slane %v4184, 1
      %v4186 = vadd.f32 %v4184, %v4185
      %v4187 = vmul.f32 %v4173, %v906
      %v4188 = vmul.f32 %v4186, %v906
      %v4189 = vsub.f32 %v4062, %v4187
      %v4190 = vsub.f32 %v4063, %v4187
      %v4191 = vsub.f32 %v4064, %v4187
      %v4192 = vsub.f32 %v4065, %v4187
      %v4193 = vsub.f32 %v4066, %v4187
      %v4194 = vsub.f32 %v4067, %v4187
      %v4195 = vsub.f32 %v4068, %v4187
      %v4196 = vsub.f32 %v4069, %v4187
      %v4197 = vsub.f32 %v4070, %v4188
      %v4198 = vsub.f32 %v4071, %v4188
      %v4199 = vsub.f32 %v4072, %v4188
      %v4200 = vsub.f32 %v4073, %v4188
      %v4201 = vsub.f32 %v4074, %v4188
      %v4202 = vsub.f32 %v4075, %v4188
      %v4203 = vsub.f32 %v4076, %v4188
      %v4204 = vsub.f32 %v4077, %v4188
      %v4205 = vmul.f32 %v4189, %v4189
      %v4206 = vmul.f32 %v4190, %v4190
      %v4207 = vmul.f32 %v4191, %v4191
      %v4208 = vmul.f32 %v4192, %v4192
      %v4209 = vmul.f32 %v4193, %v4193
      %v4210 = vmul.f32 %v4194, %v4194
      %v4211 = vmul.f32 %v4195, %v4195
      %v4212 = vmul.f32 %v4196, %v4196
      %v4213 = vmul.f32 %v4197, %v4197
      %v4214 = vmul.f32 %v4198, %v4198
      %v4215 = vmul.f32 %v4199, %v4199
      %v4216 = vmul.f32 %v4200, %v4200
      %v4217 = vmul.f32 %v4201, %v4201
      %v4218 = vmul.f32 %v4202, %v4202
      %v4219 = vmul.f32 %v4203, %v4203
      %v4220 = vmul.f32 %v4204, %v4204
      %v4221 = vsel %vm4095, %v4205, 0.0
      %4222 = vadd.xlane.f32.xlu0 %v4221
      %v4223 = vpop.xlane.xlu0 %4222
      %v4224 = vsel %vm4095, %v4206, 0.0
      %4225 = vadd.xlane.f32.xlu0 %v4224
      %v4226 = vpop.xlane.xlu0 %4225
      %v4227 = vsel %vm4095, %v4207, 0.0
      %4228 = vadd.xlane.f32.xlu0 %v4227
      %v4229 = vpop.xlane.xlu0 %4228
      %v4230 = vsel %vm4095, %v4208, 0.0
      %4231 = vadd.xlane.f32.xlu0 %v4230
      %v4232 = vpop.xlane.xlu0 %4231
      %v4233 = vsel %vm4095, %v4209, 0.0
      %4234 = vadd.xlane.f32.xlu0 %v4233
      %v4235 = vpop.xlane.xlu0 %4234
      %v4236 = vsel %vm4095, %v4210, 0.0
      %4237 = vadd.xlane.f32.xlu0 %v4236
      %v4238 = vpop.xlane.xlu0 %4237
      %v4239 = vsel %vm4095, %v4211, 0.0
      %4240 = vadd.xlane.f32.xlu0 %v4239
      %v4241 = vpop.xlane.xlu0 %4240
      %v4242 = vsel %vm4095, %v4212, 0.0
      %4243 = vadd.xlane.f32.xlu0 %v4242
      %v4244 = vpop.xlane.xlu0 %4243
      %v4245 = vsel %vm4095, %v4213, 0.0
      %4246 = vadd.xlane.f32.xlu0 %v4245
      %v4247 = vpop.xlane.xlu0 %4246
      %v4248 = vsel %vm4095, %v4214, 0.0
      %4249 = vadd.xlane.f32.xlu0 %v4248
      %v4250 = vpop.xlane.xlu0 %4249
      %v4251 = vsel %vm4095, %v4215, 0.0
      %4252 = vadd.xlane.f32.xlu0 %v4251
      %v4253 = vpop.xlane.xlu0 %4252
      %v4254 = vsel %vm4095, %v4216, 0.0
      %4255 = vadd.xlane.f32.xlu0 %v4254
      %v4256 = vpop.xlane.xlu0 %4255
      %v4257 = vsel %vm4095, %v4217, 0.0
      %4258 = vadd.xlane.f32.xlu0 %v4257
      %v4259 = vpop.xlane.xlu0 %4258
      %v4260 = vsel %vm4095, %v4218, 0.0
      %4261 = vadd.xlane.f32.xlu0 %v4260
      %v4262 = vpop.xlane.xlu0 %4261
      %v4263 = vsel %vm4095, %v4219, 0.0
      %4264 = vadd.xlane.f32.xlu0 %v4263
      %v4265 = vpop.xlane.xlu0 %4264
      %v4266 = vsel %vm4095, %v4220, 0.0
      %4267 = vadd.xlane.f32.xlu0 %v4266
      %v4268 = vpop.xlane.xlu0 %4267
      %v4269 = vmul.f32 %v4223, %v4144
      %v4270 = vmul.f32 %v4226, %v4144
      %v4271 = vmul.f32 %v4229, %v4144
      %v4272 = vmul.f32 %v4232, %v4144
      %v4273 = vmul.f32 %v4235, %v4144
      %v4274 = vmul.f32 %v4238, %v4144
      %v4275 = vmul.f32 %v4241, %v4144
      %v4276 = vmul.f32 %v4244, %v4144
      %v4277 = vmul.f32 %v4247, %v4144
      %v4278 = vmul.f32 %v4250, %v4144
      %v4279 = vmul.f32 %v4253, %v4144
      %v4280 = vmul.f32 %v4256, %v4144
      %v4281 = vmul.f32 %v4259, %v4144
      %v4282 = vmul.f32 %v4262, %v4144
      %v4283 = vmul.f32 %v4265, %v4144
      %v4284 = vmul.f32 %v4268, %v4144
      %v4285 = vadd.f32 %v4269, %v4270
      %v4286 = vadd.f32 %v4285, %v4271
      %v4287 = vadd.f32 %v4286, %v4272
      %v4288 = vadd.f32 %v4287, %v4273
      %v4289 = vadd.f32 %v4288, %v4274
      %v4290 = vadd.f32 %v4289, %v4275
      %v4291 = vadd.f32 %v4290, %v4276
      %v4292 = vrot.slane %v4291, 4
      %v4293 = vadd.f32 %v4291, %v4292
      %v4294 = vrot.slane %v4293, 2
      %v4295 = vadd.f32 %v4293, %v4294
      %v4296 = vrot.slane %v4295, 1
      %v4297 = vadd.f32 %v4295, %v4296
      %v4298 = vadd.f32 %v4277, %v4278
      %v4299 = vadd.f32 %v4298, %v4279
      %v4300 = vadd.f32 %v4299, %v4280
      %v4301 = vadd.f32 %v4300, %v4281
      %v4302 = vadd.f32 %v4301, %v4282
      %v4303 = vadd.f32 %v4302, %v4283
      %v4304 = vadd.f32 %v4303, %v4284
      %v4305 = vrot.slane %v4304, 4
      %v4306 = vadd.f32 %v4304, %v4305
      %v4307 = vrot.slane %v4306, 2
      %v4308 = vadd.f32 %v4306, %v4307
      %v4309 = vrot.slane %v4308, 1
      %v4310 = vadd.f32 %v4308, %v4309
      %v4311 = vmul.f32 %v4297, %v906
      %v4312 = vmul.f32 %v4310, %v906
      %v4313 = vadd.f32 %v4311, 1e-05
      %v4314 = vadd.f32 %v4312, 1e-05
      %v4315 = vrsqrt.pop %v4313
      %v4316 = vrsqrt.pop %v4314
      %v4317 = vmul.f32 %v4189, %v4315
      %v4318 = vmul.f32 %v4190, %v4315
      %v4319 = vmul.f32 %v4191, %v4315
      %v4320 = vmul.f32 %v4192, %v4315
      %v4321 = vmul.f32 %v4193, %v4315
      %v4322 = vmul.f32 %v4194, %v4315
      %v4323 = vmul.f32 %v4195, %v4315
      %v4324 = vmul.f32 %v4196, %v4315
      %v4325 = vmul.f32 %v4197, %v4316
      %v4326 = vmul.f32 %v4198, %v4316
      %v4327 = vmul.f32 %v4199, %v4316
      %v4328 = vmul.f32 %v4200, %v4316
      %v4329 = vmul.f32 %v4201, %v4316
      %v4330 = vmul.f32 %v4202, %v4316
      %v4331 = vmul.f32 %v4203, %v4316
      %v4332 = vmul.f32 %v4204, %v4316
      %v4333 = vmul.f32 %v4317, %v4078
      %v4334 = vmul.f32 %v4318, %v4079
      %v4335 = vmul.f32 %v4319, %v4080
      %v4336 = vmul.f32 %v4320, %v4081
      %v4337 = vmul.f32 %v4321, %v4082
      %v4338 = vmul.f32 %v4322, %v4083
      %v4339 = vmul.f32 %v4323, %v4084
      %v4340 = vmul.f32 %v4324, %v4085
      %v4341 = vmul.f32 %v4325, %v4078
      %v4342 = vmul.f32 %v4326, %v4079
      %v4343 = vmul.f32 %v4327, %v4080
      %v4344 = vmul.f32 %v4328, %v4081
      %v4345 = vmul.f32 %v4329, %v4082
      %v4346 = vmul.f32 %v4330, %v4083
      %v4347 = vmul.f32 %v4331, %v4084
      %v4348 = vmul.f32 %v4332, %v4085
      %v4349 = vadd.f32 %v4333, %v4087
      %v4350 = vadd.f32 %v4334, %v4088
      %v4351 = vadd.f32 %v4335, %v4089
      %v4352 = vadd.f32 %v4336, %v4090
      %v4353 = vadd.f32 %v4337, %v4091
      %v4354 = vadd.f32 %v4338, %v4092
      %v4355 = vadd.f32 %v4339, %v4093
      %v4356 = vadd.f32 %v4340, %v4094
      %v4357 = vadd.f32 %v4341, %v4087
      %v4358 = vadd.f32 %v4342, %v4088
      %v4359 = vadd.f32 %v4343, %v4089
      %v4360 = vadd.f32 %v4344, %v4090
      %v4361 = vadd.f32 %v4345, %v4091
      %v4362 = vadd.f32 %v4346, %v4092
      %v4363 = vadd.f32 %v4347, %v4093
      %v4364 = vadd.f32 %v4348, %v4094
      %v4365 = vmul.f32 %v4349, 0.5
      %v4366 = vmul.f32 %v4350, 0.5
      %v4367 = vmul.f32 %v4351, 0.5
      %v4368 = vmul.f32 %v4352, 0.5
      %v4369 = vmul.f32 %v4353, 0.5
      %v4370 = vmul.f32 %v4354, 0.5
      %v4371 = vmul.f32 %v4355, 0.5
      %v4372 = vmul.f32 %v4356, 0.5
      %v4373 = vmul.f32 %v4357, 0.5
      %v4374 = vmul.f32 %v4358, 0.5
      %v4375 = vmul.f32 %v4359, 0.5
      %v4376 = vmul.f32 %v4360, 0.5
      %v4377 = vmul.f32 %v4361, 0.5
      %v4378 = vmul.f32 %v4362, 0.5
      %v4379 = vmul.f32 %v4363, 0.5
      %v4380 = vmul.f32 %v4364, 0.5
      %v4381 = vmul.f32 %v4349, 0.70710677
      %v4382 = vmul.f32 %v4350, 0.70710677
      %v4383 = vmul.f32 %v4351, 0.70710677
      %v4384 = vmul.f32 %v4352, 0.70710677
      %v4385 = vmul.f32 %v4353, 0.70710677
      %v4386 = vmul.f32 %v4354, 0.70710677
      %v4387 = vmul.f32 %v4355, 0.70710677
      %v4388 = vmul.f32 %v4356, 0.70710677
      %v4389 = vmul.f32 %v4357, 0.70710677
      %v4390 = vmul.f32 %v4358, 0.70710677
      %v4391 = vmul.f32 %v4359, 0.70710677
      %v4392 = vmul.f32 %v4360, 0.70710677
      %v4393 = vmul.f32 %v4361, 0.70710677
      %v4394 = vmul.f32 %v4362, 0.70710677
      %v4395 = vmul.f32 %v4363, 0.70710677
      %v4396 = vmul.f32 %v4364, 0.70710677
      %vm4397 = vcmp.ge.f32.partialorder %v4381, 0.0
      %vm4398 = vcmp.ge.f32.partialorder %v4382, 0.0
      %vm4399 = vcmp.ge.f32.partialorder %v4383, 0.0
      %vm4400 = vcmp.ge.f32.partialorder %v4384, 0.0
      %vm4401 = vcmp.ge.f32.partialorder %v4385, 0.0
      %vm4402 = vcmp.ge.f32.partialorder %v4386, 0.0
      %vm4403 = vcmp.ge.f32.partialorder %v4387, 0.0
      %vm4404 = vcmp.ge.f32.partialorder %v4388, 0.0
      %vm4405 = vcmp.ge.f32.partialorder %v4389, 0.0
      %vm4406 = vcmp.ge.f32.partialorder %v4390, 0.0
      %vm4407 = vcmp.ge.f32.partialorder %v4391, 0.0
      %vm4408 = vcmp.ge.f32.partialorder %v4392, 0.0
      %vm4409 = vcmp.ge.f32.partialorder %v4393, 0.0
      %vm4410 = vcmp.ge.f32.partialorder %v4394, 0.0
      %vm4411 = vcmp.ge.f32.partialorder %v4395, 0.0
      %vm4412 = vcmp.ge.f32.partialorder %v4396, 0.0
      %v4413 = vsel %vm4397, 1.0, -1.0
      %v4414 = vsel %vm4398, 1.0, -1.0
      %v4415 = vsel %vm4399, 1.0, -1.0
      %v4416 = vsel %vm4400, 1.0, -1.0
      %v4417 = vsel %vm4401, 1.0, -1.0
      %v4418 = vsel %vm4402, 1.0, -1.0
      %v4419 = vsel %vm4403, 1.0, -1.0
      %v4420 = vsel %vm4404, 1.0, -1.0
      %v4421 = vsel %vm4405, 1.0, -1.0
      %v4422 = vsel %vm4406, 1.0, -1.0
      %v4423 = vsel %vm4407, 1.0, -1.0
      %v4424 = vsel %vm4408, 1.0, -1.0
      %v4425 = vsel %vm4409, 1.0, -1.0
      %v4426 = vsel %vm4410, 1.0, -1.0
      %v4427 = vsel %vm4411, 1.0, -1.0
      %v4428 = vsel %vm4412, 1.0, -1.0
      %v4429 = vand.u32 2147483647, %v4381
      %v4430 = vand.u32 2147483647, %v4382
      %v4431 = vand.u32 2147483647, %v4383
      %v4432 = vand.u32 2147483647, %v4384
      %v4433 = vand.u32 2147483647, %v4385
      %v4434 = vand.u32 2147483647, %v4386
      %v4435 = vand.u32 2147483647, %v4387
      %v4436 = vand.u32 2147483647, %v4388
      %v4437 = vand.u32 2147483647, %v4389
      %v4438 = vand.u32 2147483647, %v4390
      %v4439 = vand.u32 2147483647, %v4391
      %v4440 = vand.u32 2147483647, %v4392
      %v4441 = vand.u32 2147483647, %v4393
      %v4442 = vand.u32 2147483647, %v4394
      %v4443 = vand.u32 2147483647, %v4395
      %v4444 = vand.u32 2147483647, %v4396
      %v4445 = vmul.f32 %v4429, 0.3275911
      %v4446 = vmul.f32 %v4430, 0.3275911
      %v4447 = vmul.f32 %v4431, 0.3275911
      %v4448 = vmul.f32 %v4432, 0.3275911
      %v4449 = vmul.f32 %v4433, 0.3275911
      %v4450 = vmul.f32 %v4434, 0.3275911
      %v4451 = vmul.f32 %v4435, 0.3275911
      %v4452 = vmul.f32 %v4436, 0.3275911
      %v4453 = vmul.f32 %v4437, 0.3275911
      %v4454 = vmul.f32 %v4438, 0.3275911
      %v4455 = vmul.f32 %v4439, 0.3275911
      %v4456 = vmul.f32 %v4440, 0.3275911
      %v4457 = vmul.f32 %v4441, 0.3275911
      %v4458 = vmul.f32 %v4442, 0.3275911
      %v4459 = vmul.f32 %v4443, 0.3275911
      %v4460 = vmul.f32 %v4444, 0.3275911
      %v4461 = vadd.f32 %v4445, 1.0
      %v4462 = vadd.f32 %v4446, 1.0
      %v4463 = vadd.f32 %v4447, 1.0
      %v4464 = vadd.f32 %v4448, 1.0
      %v4465 = vadd.f32 %v4449, 1.0
      %v4466 = vadd.f32 %v4450, 1.0
      %v4467 = vadd.f32 %v4451, 1.0
      %v4468 = vadd.f32 %v4452, 1.0
      %v4469 = vadd.f32 %v4453, 1.0
      %v4470 = vadd.f32 %v4454, 1.0
      %v4471 = vadd.f32 %v4455, 1.0
      %v4472 = vadd.f32 %v4456, 1.0
      %v4473 = vadd.f32 %v4457, 1.0
      %v4474 = vadd.f32 %v4458, 1.0
      %v4475 = vadd.f32 %v4459, 1.0
      %v4476 = vadd.f32 %v4460, 1.0
      %v4477 = vrcp.pop %v4461
      %v4478 = vrcp.pop %v4462
      %v4479 = vrcp.pop %v4463
      %v4480 = vrcp.pop %v4464
      %v4481 = vrcp.pop %v4465
      %v4482 = vrcp.pop %v4466
      %v4483 = vrcp.pop %v4467
      %v4484 = vrcp.pop %v4468
      %v4485 = vrcp.pop %v4469
      %v4486 = vrcp.pop %v4470
      %v4487 = vrcp.pop %v4471
      %v4488 = vrcp.pop %v4472
      %v4489 = vrcp.pop %v4473
      %v4490 = vrcp.pop %v4474
      %v4491 = vrcp.pop %v4475
      %v4492 = vrcp.pop %v4476
      %v4493 = vmul.f32 %v4477, 1.0614054
      %v4494 = vmul.f32 %v4478, 1.0614054
      %v4495 = vmul.f32 %v4479, 1.0614054
      %v4496 = vmul.f32 %v4480, 1.0614054
      %v4497 = vmul.f32 %v4481, 1.0614054
      %v4498 = vmul.f32 %v4482, 1.0614054
      %v4499 = vmul.f32 %v4483, 1.0614054
      %v4500 = vmul.f32 %v4484, 1.0614054
      %v4501 = vmul.f32 %v4485, 1.0614054
      %v4502 = vmul.f32 %v4486, 1.0614054
      %v4503 = vmul.f32 %v4487, 1.0614054
      %v4504 = vmul.f32 %v4488, 1.0614054
      %v4505 = vmul.f32 %v4489, 1.0614054
      %v4506 = vmul.f32 %v4490, 1.0614054
      %v4507 = vmul.f32 %v4491, 1.0614054
      %v4508 = vmul.f32 %v4492, 1.0614054
      %v4509 = vadd.f32 %v4493, -1.4531521
      %v4510 = vadd.f32 %v4494, -1.4531521
      %v4511 = vadd.f32 %v4495, -1.4531521
      %v4512 = vadd.f32 %v4496, -1.4531521
      %v4513 = vadd.f32 %v4497, -1.4531521
      %v4514 = vadd.f32 %v4498, -1.4531521
      %v4515 = vadd.f32 %v4499, -1.4531521
      %v4516 = vadd.f32 %v4500, -1.4531521
      %v4517 = vadd.f32 %v4501, -1.4531521
      %v4518 = vadd.f32 %v4502, -1.4531521
      %v4519 = vadd.f32 %v4503, -1.4531521
      %v4520 = vadd.f32 %v4504, -1.4531521
      %v4521 = vadd.f32 %v4505, -1.4531521
      %v4522 = vadd.f32 %v4506, -1.4531521
      %v4523 = vadd.f32 %v4507, -1.4531521
      %v4524 = vadd.f32 %v4508, -1.4531521
      %v4525 = vmul.f32 %v4509, %v4477
      %v4526 = vmul.f32 %v4510, %v4478
      %v4527 = vmul.f32 %v4511, %v4479
      %v4528 = vmul.f32 %v4512, %v4480
      %v4529 = vmul.f32 %v4513, %v4481
      %v4530 = vmul.f32 %v4514, %v4482
      %v4531 = vmul.f32 %v4515, %v4483
      %v4532 = vmul.f32 %v4516, %v4484
      %v4533 = vmul.f32 %v4517, %v4485
      %v4534 = vmul.f32 %v4518, %v4486
      %v4535 = vmul.f32 %v4519, %v4487
      %v4536 = vmul.f32 %v4520, %v4488
      %v4537 = vmul.f32 %v4521, %v4489
      %v4538 = vmul.f32 %v4522, %v4490
      %v4539 = vmul.f32 %v4523, %v4491
      %v4540 = vmul.f32 %v4524, %v4492
      %v4541 = vadd.f32 %v4525, 1.4214138
      %v4542 = vadd.f32 %v4526, 1.4214138
      %v4543 = vadd.f32 %v4527, 1.4214138
      %v4544 = vadd.f32 %v4528, 1.4214138
      %v4545 = vadd.f32 %v4529, 1.4214138
      %v4546 = vadd.f32 %v4530, 1.4214138
      %v4547 = vadd.f32 %v4531, 1.4214138
      %v4548 = vadd.f32 %v4532, 1.4214138
      %v4549 = vadd.f32 %v4533, 1.4214138
      %v4550 = vadd.f32 %v4534, 1.4214138
      %v4551 = vadd.f32 %v4535, 1.4214138
      %v4552 = vadd.f32 %v4536, 1.4214138
      %v4553 = vadd.f32 %v4537, 1.4214138
      %v4554 = vadd.f32 %v4538, 1.4214138
      %v4555 = vadd.f32 %v4539, 1.4214138
      %v4556 = vadd.f32 %v4540, 1.4214138
      %v4557 = vmul.f32 %v4541, %v4477
      %v4558 = vmul.f32 %v4542, %v4478
      %v4559 = vmul.f32 %v4543, %v4479
      %v4560 = vmul.f32 %v4544, %v4480
      %v4561 = vmul.f32 %v4545, %v4481
      %v4562 = vmul.f32 %v4546, %v4482
      %v4563 = vmul.f32 %v4547, %v4483
      %v4564 = vmul.f32 %v4548, %v4484
      %v4565 = vmul.f32 %v4549, %v4485
      %v4566 = vmul.f32 %v4550, %v4486
      %v4567 = vmul.f32 %v4551, %v4487
      %v4568 = vmul.f32 %v4552, %v4488
      %v4569 = vmul.f32 %v4553, %v4489
      %v4570 = vmul.f32 %v4554, %v4490
      %v4571 = vmul.f32 %v4555, %v4491
      %v4572 = vmul.f32 %v4556, %v4492
      %v4573 = vadd.f32 %v4557, -0.28449672
      %v4574 = vadd.f32 %v4558, -0.28449672
      %v4575 = vadd.f32 %v4559, -0.28449672
      %v4576 = vadd.f32 %v4560, -0.28449672
      %v4577 = vadd.f32 %v4561, -0.28449672
      %v4578 = vadd.f32 %v4562, -0.28449672
      %v4579 = vadd.f32 %v4563, -0.28449672
      %v4580 = vadd.f32 %v4564, -0.28449672
      %v4581 = vadd.f32 %v4565, -0.28449672
      %v4582 = vadd.f32 %v4566, -0.28449672
      %v4583 = vadd.f32 %v4567, -0.28449672
      %v4584 = vadd.f32 %v4568, -0.28449672
      %v4585 = vadd.f32 %v4569, -0.28449672
      %v4586 = vadd.f32 %v4570, -0.28449672
      %v4587 = vadd.f32 %v4571, -0.28449672
      %v4588 = vadd.f32 %v4572, -0.28449672
      %v4589 = vmul.f32 %v4573, %v4477
      %v4590 = vmul.f32 %v4574, %v4478
      %v4591 = vmul.f32 %v4575, %v4479
      %v4592 = vmul.f32 %v4576, %v4480
      %v4593 = vmul.f32 %v4577, %v4481
      %v4594 = vmul.f32 %v4578, %v4482
      %v4595 = vmul.f32 %v4579, %v4483
      %v4596 = vmul.f32 %v4580, %v4484
      %v4597 = vmul.f32 %v4581, %v4485
      %v4598 = vmul.f32 %v4582, %v4486
      %v4599 = vmul.f32 %v4583, %v4487
      %v4600 = vmul.f32 %v4584, %v4488
      %v4601 = vmul.f32 %v4585, %v4489
      %v4602 = vmul.f32 %v4586, %v4490
      %v4603 = vmul.f32 %v4587, %v4491
      %v4604 = vmul.f32 %v4588, %v4492
      %v4605 = vadd.f32 %v4589, 0.2548296
      %v4606 = vadd.f32 %v4590, 0.2548296
      %v4607 = vadd.f32 %v4591, 0.2548296
      %v4608 = vadd.f32 %v4592, 0.2548296
      %v4609 = vadd.f32 %v4593, 0.2548296
      %v4610 = vadd.f32 %v4594, 0.2548296
      %v4611 = vadd.f32 %v4595, 0.2548296
      %v4612 = vadd.f32 %v4596, 0.2548296
      %v4613 = vadd.f32 %v4597, 0.2548296
      %v4614 = vadd.f32 %v4598, 0.2548296
      %v4615 = vadd.f32 %v4599, 0.2548296
      %v4616 = vadd.f32 %v4600, 0.2548296
      %v4617 = vadd.f32 %v4601, 0.2548296
      %v4618 = vadd.f32 %v4602, 0.2548296
      %v4619 = vadd.f32 %v4603, 0.2548296
      %v4620 = vadd.f32 %v4604, 0.2548296
      %v4621 = vmul.f32 %v4605, %v4477
      %v4622 = vmul.f32 %v4606, %v4478
      %v4623 = vmul.f32 %v4607, %v4479
      %v4624 = vmul.f32 %v4608, %v4480
      %v4625 = vmul.f32 %v4609, %v4481
      %v4626 = vmul.f32 %v4610, %v4482
      %v4627 = vmul.f32 %v4611, %v4483
      %v4628 = vmul.f32 %v4612, %v4484
      %v4629 = vmul.f32 %v4613, %v4485
      %v4630 = vmul.f32 %v4614, %v4486
      %v4631 = vmul.f32 %v4615, %v4487
      %v4632 = vmul.f32 %v4616, %v4488
      %v4633 = vmul.f32 %v4617, %v4489
      %v4634 = vmul.f32 %v4618, %v4490
      %v4635 = vmul.f32 %v4619, %v4491
      %v4636 = vmul.f32 %v4620, %v4492
      %v4637 = vsub.f32 0.0, %v4429
      %v4638 = vsub.f32 0.0, %v4430
      %v4639 = vsub.f32 0.0, %v4431
      %v4640 = vsub.f32 0.0, %v4432
      %v4641 = vsub.f32 0.0, %v4433
      %v4642 = vsub.f32 0.0, %v4434
      %v4643 = vsub.f32 0.0, %v4435
      %v4644 = vsub.f32 0.0, %v4436
      %v4645 = vsub.f32 0.0, %v4437
      %v4646 = vsub.f32 0.0, %v4438
      %v4647 = vsub.f32 0.0, %v4439
      %v4648 = vsub.f32 0.0, %v4440
      %v4649 = vsub.f32 0.0, %v4441
      %v4650 = vsub.f32 0.0, %v4442
      %v4651 = vsub.f32 0.0, %v4443
      %v4652 = vsub.f32 0.0, %v4444
      %v4653 = vmul.f32 %v4637, %v4429
      %v4654 = vmul.f32 %v4638, %v4430
      %v4655 = vmul.f32 %v4639, %v4431
      %v4656 = vmul.f32 %v4640, %v4432
      %v4657 = vmul.f32 %v4641, %v4433
      %v4658 = vmul.f32 %v4642, %v4434
      %v4659 = vmul.f32 %v4643, %v4435
      %v4660 = vmul.f32 %v4644, %v4436
      %v4661 = vmul.f32 %v4645, %v4437
      %v4662 = vmul.f32 %v4646, %v4438
      %v4663 = vmul.f32 %v4647, %v4439
      %v4664 = vmul.f32 %v4648, %v4440
      %v4665 = vmul.f32 %v4649, %v4441
      %v4666 = vmul.f32 %v4650, %v4442
      %v4667 = vmul.f32 %v4651, %v4443
      %v4668 = vmul.f32 %v4652, %v4444
      %v4669 = vmul.f32 %v4653, 1.442695
      %v4670 = vpow.pop %v4669
      %v4671 = vmul.f32 %v4654, 1.442695
      %v4672 = vpow.pop %v4671
      %v4673 = vmul.f32 %v4655, 1.442695
      %v4674 = vpow.pop %v4673
      %v4675 = vmul.f32 %v4656, 1.442695
      %v4676 = vpow.pop %v4675
      %v4677 = vmul.f32 %v4657, 1.442695
      %v4678 = vpow.pop %v4677
      %v4679 = vmul.f32 %v4658, 1.442695
      %v4680 = vpow.pop %v4679
      %v4681 = vmul.f32 %v4659, 1.442695
      %v4682 = vpow.pop %v4681
      %v4683 = vmul.f32 %v4660, 1.442695
      %v4684 = vpow.pop %v4683
      %v4685 = vmul.f32 %v4661, 1.442695
      %v4686 = vpow.pop %v4685
      %v4687 = vmul.f32 %v4662, 1.442695
      %v4688 = vpow.pop %v4687
      %v4689 = vmul.f32 %v4663, 1.442695
      %v4690 = vpow.pop %v4689
      %v4691 = vmul.f32 %v4664, 1.442695
      %v4692 = vpow.pop %v4691
      %v4693 = vmul.f32 %v4665, 1.442695
      %v4694 = vpow.pop %v4693
      %v4695 = vmul.f32 %v4666, 1.442695
      %v4696 = vpow.pop %v4695
      %v4697 = vmul.f32 %v4667, 1.442695
      %v4698 = vpow.pop %v4697
      %v4699 = vmul.f32 %v4668, 1.442695
      %v4700 = vpow.pop %v4699
      %v4701 = vmul.f32 %v4621, %v4670
      %v4702 = vmul.f32 %v4622, %v4672
      %v4703 = vmul.f32 %v4623, %v4674
      %v4704 = vmul.f32 %v4624, %v4676
      %v4705 = vmul.f32 %v4625, %v4678
      %v4706 = vmul.f32 %v4626, %v4680
      %v4707 = vmul.f32 %v4627, %v4682
      %v4708 = vmul.f32 %v4628, %v4684
      %v4709 = vmul.f32 %v4629, %v4686
      %v4710 = vmul.f32 %v4630, %v4688
      %v4711 = vmul.f32 %v4631, %v4690
      %v4712 = vmul.f32 %v4632, %v4692
      %v4713 = vmul.f32 %v4633, %v4694
      %v4714 = vmul.f32 %v4634, %v4696
      %v4715 = vmul.f32 %v4635, %v4698
      %v4716 = vmul.f32 %v4636, %v4700
      %v4717 = vsub.f32 1.0, %v4701
      %v4718 = vsub.f32 1.0, %v4702
      %v4719 = vsub.f32 1.0, %v4703
      %v4720 = vsub.f32 1.0, %v4704
      %v4721 = vsub.f32 1.0, %v4705
      %v4722 = vsub.f32 1.0, %v4706
      %v4723 = vsub.f32 1.0, %v4707
      %v4724 = vsub.f32 1.0, %v4708
      %v4725 = vsub.f32 1.0, %v4709
      %v4726 = vsub.f32 1.0, %v4710
      %v4727 = vsub.f32 1.0, %v4711
      %v4728 = vsub.f32 1.0, %v4712
      %v4729 = vsub.f32 1.0, %v4713
      %v4730 = vsub.f32 1.0, %v4714
      %v4731 = vsub.f32 1.0, %v4715
      %v4732 = vsub.f32 1.0, %v4716
      %v4733 = vmul.f32 %v4413, %v4717
      %v4734 = vmul.f32 %v4414, %v4718
      %v4735 = vmul.f32 %v4415, %v4719
      %v4736 = vmul.f32 %v4416, %v4720
      %v4737 = vmul.f32 %v4417, %v4721
      %v4738 = vmul.f32 %v4418, %v4722
      %v4739 = vmul.f32 %v4419, %v4723
      %v4740 = vmul.f32 %v4420, %v4724
      %v4741 = vmul.f32 %v4421, %v4725
      %v4742 = vmul.f32 %v4422, %v4726
      %v4743 = vmul.f32 %v4423, %v4727
      %v4744 = vmul.f32 %v4424, %v4728
      %v4745 = vmul.f32 %v4425, %v4729
      %v4746 = vmul.f32 %v4426, %v4730
      %v4747 = vmul.f32 %v4427, %v4731
      %v4748 = vmul.f32 %v4428, %v4732
      %v4749 = vadd.f32 %v4733, 1.0
      %v4750 = vadd.f32 %v4734, 1.0
      %v4751 = vadd.f32 %v4735, 1.0
      %v4752 = vadd.f32 %v4736, 1.0
      %v4753 = vadd.f32 %v4737, 1.0
      %v4754 = vadd.f32 %v4738, 1.0
      %v4755 = vadd.f32 %v4739, 1.0
      %v4756 = vadd.f32 %v4740, 1.0
      %v4757 = vadd.f32 %v4741, 1.0
      %v4758 = vadd.f32 %v4742, 1.0
      %v4759 = vadd.f32 %v4743, 1.0
      %v4760 = vadd.f32 %v4744, 1.0
      %v4761 = vadd.f32 %v4745, 1.0
      %v4762 = vadd.f32 %v4746, 1.0
      %v4763 = vadd.f32 %v4747, 1.0
      %v4764 = vadd.f32 %v4748, 1.0
      %v4765 = vmul.f32 %v4365, %v4749
      %v4766 = vmul.f32 %v4366, %v4750
      %v4767 = vmul.f32 %v4367, %v4751
      %v4768 = vmul.f32 %v4368, %v4752
      %v4769 = vmul.f32 %v4369, %v4753
      %v4770 = vmul.f32 %v4370, %v4754
      %v4771 = vmul.f32 %v4371, %v4755
      %v4772 = vmul.f32 %v4372, %v4756
      %v4773 = vmul.f32 %v4373, %v4757
      %v4774 = vmul.f32 %v4374, %v4758
      %v4775 = vmul.f32 %v4375, %v4759
      %v4776 = vmul.f32 %v4376, %v4760
      %v4777 = vmul.f32 %v4377, %v4761
      %v4778 = vmul.f32 %v4378, %v4762
      %v4779 = vmul.f32 %v4379, %v4763
      %v4780 = vmul.f32 %v4380, %v4764
      %4781 = vst.msk [vmem:[%s339] sm:$0xff] %vm4095, %v4765
      %4782 = vst.msk [vmem:[%s339 + $0x8] sm:$0xff] %vm4095, %v4766
      %4783 = vst.msk [vmem:[%s339 + $0x10] sm:$0xff] %vm4095, %v4767
      %4784 = vst.msk [vmem:[%s339 + $0x18] sm:$0xff] %vm4095, %v4768
      %4785 = vst.msk [vmem:[%s339 + $0x20] sm:$0xff] %vm4095, %v4769
      %4786 = vst.msk [vmem:[%s339 + $0x28] sm:$0xff] %vm4095, %v4770
      %4787 = vst.msk [vmem:[%s339 + $0x30] sm:$0xff] %vm4095, %v4771
      %4788 = vst.msk [vmem:[%s339 + $0x38] sm:$0xff] %vm4095, %v4772
      %4789 = vst.msk [vmem:[%s339 + $0x40] sm:$0xff] %vm4095, %v4773
      %4790 = vst.msk [vmem:[%s339 + $0x48] sm:$0xff] %vm4095, %v4774
      %4791 = vst.msk [vmem:[%s339 + $0x50] sm:$0xff] %vm4095, %v4775
      %4792 = vst.msk [vmem:[%s339 + $0x58] sm:$0xff] %vm4095, %v4776
      %4793 = vst.msk [vmem:[%s339 + $0x60] sm:$0xff] %vm4095, %v4777
      %4794 = vst.msk [vmem:[%s339 + $0x68] sm:$0xff] %vm4095, %v4778
      %4795 = vst.msk [vmem:[%s339 + $0x70] sm:$0xff] %vm4095, %v4779
      %4796 = vst.msk [vmem:[%s339 + $0x78] sm:$0xff] %vm4095, %v4780
      %s4797 = smul.u32 2, %s20
      %p4798 = scmp.lt.s32.totalorder %s4797, 3
      %s4799 = scalar_select %p4798, %s4797, 3
      %s4800 = smul.addr %s4799, 8
      %s4801 = smul.addr %s4800, 8
      %s4802 = scalar_lea.vmem %s9, %s4801
      // Predicated region
      $region57: #{tpu_custom_call.1} parent=55 // pred_check
        %p4803 = pneg %p232
      $region58: #{tpu_custom_call.1} parent=55 // pred_check_branch
        %4805 = sbr.rel (%p4803) target = $region60
      $region59: #{tpu_custom_call.1} parent=55 // pred_region
        %s4806 = smul.u32 2, %s20
      $region60: #{tpu_custom_call.1} parent=55 // pred_fallthru
        _
    $region56: #{tpu_custom_call.1} parent=5 // pred_fallthru
      _
    %p4807 = scmp.le.s32.totalorder 2, %s15
    // Predicated region
    $region61: #{tpu_custom_call.1} parent=5 // pred_check
      %p4808 = pneg %p4807
    $region62: #{tpu_custom_call.1} parent=5 // pred_check_branch
      %4810 = sbr.rel (%p4808) target = $region64
    $region63: #{tpu_custom_call.1} parent=5 // pred_region
      %s4811 = ssub.s32 %s15, 2
      // Predicated region
      $region65: #{tpu_custom_call.1} parent=63 // pred_check
        %p4812 = pneg %p238
      $region66: #{tpu_custom_call.1} parent=63 // pred_check_branch
        %4814 = sbr.rel (%p4812) target = $region68
      $region67: #{tpu_custom_call.1} parent=63 // pred_region
        %s4815 = smul.u32 2, %s21
        %p4816 = scmp.lt.s32.totalorder %s4815, 3
        %s4817 = scalar_select %p4816, %s4815, 3
        %s4818 = smul.addr %s4817, 8
        %s4819 = smul.addr %s4818, 8
        %s4820 = scalar_lea.vmem %s9, %s4819
      $region68: #{tpu_custom_call.1} parent=63 // pred_fallthru
        _
    $region64: #{tpu_custom_call.1} parent=5 // pred_fallthru
      _
  $region6: #{tpu_custom_call.1} parent=0 // loop_footer
    %s19 = sadd.s32 1, %s15
  $region7: #{tpu_custom_call.1} parent=0 // loop_footer_branch
    %14 = sbr.rel target = $region3
  $region8: #{tpu_custom_call.1} parent=0 // loop_exit
    _

</llo_original>
